<compile_context>
chip_gen: v7x
topology: tpu7x:2x2x1
jax: 0.10.0
libtpu: 0.0.40
codegen_flags: <defaults>
</compile_context>

<pallas_src>
import functools

import jax
import jax.numpy as jnp
from jax.experimental import pallas as pl
from jax.experimental.pallas import tpu as pltpu


# ----------------------------------------------------------------------------
# In-kernel GAT layer body (shared by both fused kernels)
# ----------------------------------------------------------------------------
def _gat_layer_body(h, w, al, ar, bias, nhead, d_head, negative_slope):
    """One dense GATConv layer computed on values already resident in VMEM.

    h     : (N, F_in)          input node features
    w     : (F_in, nhead*d_head)
    al/ar : (nhead, d_head)    attention vectors (src / dst)
    bias  : (N, N)             additive attention bias: 0.0 on edges j -> i,
                               -1e30 on non-edges.  Every row must contain at
                               least one 0 (self-loop invariant) so the row
                               max is finite and exp(e - m) underflows to 0 on
                               masked entries without any boolean select.
    returns : (N, nhead*d_head) concatenated heads
    """
    z = jnp.dot(h, w, preferred_element_type=jnp.float32)             # (N, H*D)
    outs = []
    for hd in range(nhead):                                           # static unroll
        zh = z[:, hd * d_head:(hd + 1) * d_head]                      # (N, D) lane slice
        al_h = al[hd:hd + 1, :]                                       # (1, D)
        ar_h = ar[hd:hd + 1, :]                                       # (1, D)
        # el (source side) directly as a lane-dense (1, N) row (MXU).
        el_row = jax.lax.dot_general(al_h, zh, (((1,), (1,)), ((), ())),
                                     preferred_element_type=jnp.float32)  # (1, N)
        # er (dest side) as an (N, 1) column via VPU multiply + lane reduce.
        er_col = jnp.sum(zh * ar_h, axis=-1, keepdims=True)               # (N, 1)
        e = er_col + el_row                                               # (N, N)
        e = jnp.where(e > 0, e, negative_slope * e)                       # LeakyReLU
        e = e + bias                                                      # additive mask
        m = jnp.max(e, axis=-1, keepdims=True)                            # finite (self-loop)
        p = jnp.exp(e - m)                                                # ==0 on non-edges
        denom = jnp.sum(p, axis=-1, keepdims=True)
        alpha = p * pl.reciprocal(denom, approx=True)                     # softmax (EUP recip)
        outs.append(jnp.dot(alpha, zh, preferred_element_type=jnp.float32))
    # TODO(synk): for larger nhead*d_head, replace the concat with one
    # block-diagonal alpha @ z matmul to keep the result lane-dense via MXU.
    return outs[0] if nhead == 1 else jnp.concatenate(outs, axis=-1)      # (N, H*D)


# ----------------------------------------------------------------------------
# Fused dual (online + target) GAT encoder: ONE pallas_call, grid=(2,)
# ----------------------------------------------------------------------------
def _dual_encoder_kernel(feats_ref, bias_ref, *refs, head_dims, negative_slope):
    o_ref = refs[-1]
    prefs = refs[:-1]                       # (W, attn_l, attn_r) per layer (squeezed)

    bias = bias_ref[...]
    h = feats_ref[...]
    for li, (nhead, d_head) in enumerate(head_dims):
        w = prefs[3 * li][...]
        al = prefs[3 * li + 1][...]
        ar = prefs[3 * li + 2][...]
        h = _gat_layer_body(h, w, al, ar, bias, nhead, d_head, negative_slope)
        h = jnp.maximum(h, 0.0)             # activation='relu', encoding mode: every layer
    o_ref[...] = h


def dual_gat_encoder(bias, feats2, stacked_layers, negative_slope=0.2):
    """Run online (slot 0) and target (slot 1) encoders in one fused call.

    feats2         : (2, N, F)    stacked input features (out_x, x_t)
    stacked_layers : list of dicts with 'W' (2,Fin,HD), 'attn_l'/'attn_r' (2,H,D)
    returns        : (2, N, num_hidden)
    """
    _, n, in_dim = feats2.shape
    head_dims = []
    flat_params = []
    in_specs = [
        pl.BlockSpec((None, n, in_dim), lambda i: (i, 0, 0)),   # per-encoder features
        pl.BlockSpec((n, n), lambda i: (0, 0)),                 # shared attention bias
    ]
    for layer in stacked_layers:
        _, nhead, d_head = layer['attn_l'].shape
        _, f_in, f_out = layer['W'].shape
        head_dims.append((nhead, d_head))
        flat_params.extend([layer['W'], layer['attn_l'], layer['attn_r']])
        in_specs.extend([
            pl.BlockSpec((None, f_in, f_out), lambda i: (i, 0, 0)),
            pl.BlockSpec((None, nhead, d_head), lambda i: (i, 0, 0)),
            pl.BlockSpec((None, nhead, d_head), lambda i: (i, 0, 0)),
        ])
    out_dim = head_dims[-1][0] * head_dims[-1][1]
    kernel = functools.partial(_dual_encoder_kernel,
                               head_dims=tuple(head_dims),
                               negative_slope=float(negative_slope))
    return pl.pallas_call(
        kernel,
        out_shape=jax.ShapeDtypeStruct((2, n, out_dim), jnp.float32),
        grid=(2,),
        in_specs=in_specs,
        out_specs=pl.BlockSpec((None, n, out_dim), lambda i: (i, 0, 0)),
        compiler_params=pltpu.CompilerParams(
            dimension_semantics=("parallel",)),      # online/target on separate TCs on v7x
    )(feats2.astype(jnp.float32), bias.astype(jnp.float32),
      *[p.astype(jnp.float32) for p in flat_params])


# ----------------------------------------------------------------------------
# Fused reconstruction + loss kernel (ONE pallas_call, no gathers):
#   rep  = enc_rep @ W_e2d ; rep[mask] = rep_mask
#   rep  = relu(GAT_recon(adj, rep)) @ W_recon_decoder
#   loss_align = sum(keep * (rep - rep_t)^2) / (num_keep * H)
#   x_rec = rep @ W_decoder ; rec_loss = sum(is_mask * cos_loss(x_rec, x)) / num_mask
# ----------------------------------------------------------------------------
def _recon_loss_kernel(reps_ref, x_ref, ismask_ref, we2d_ref, repmask_ref,
                       bias_ref, wr_ref, alr_ref, arr_ref, wrd_ref, wdec_ref,
                       o_ref, *, negative_slope, t, loss_r, loss_a,
                       num_mask, num_keep):
    enc_rep = reps_ref[0]                        # (N, H) online encoder output
    rep_t = reps_ref[1]                          # (N, H) target (no_grad branch; fwd only)
    bias = bias_ref[...]
    is_m = ismask_ref[...]                       # (N, 1): 1.0 on masked rows
    keep = 1.0 - is_m                            # keep_nodes is the exact complement

    # encoder_to_decoder + mask-token scatter (mask column, no row gather)
    rep = jnp.dot(enc_rep, we2d_ref[...], preferred_element_type=jnp.float32)   # (N, H)
    rep = jnp.where(is_m > 0.0,
                    jnp.broadcast_to(repmask_ref[...], rep.shape), rep)

    # recon_encoder (single-head GAT layer, encoding mode -> relu)
    d_head = wr_ref.shape[1]
    h1 = _gat_layer_body(rep, wr_ref[...], alr_ref[...], arr_ref[...],
                         bias, 1, d_head, negative_slope)
    h1 = jnp.maximum(h1, 0.0)
    rep2 = jnp.dot(h1, wrd_ref[...], preferred_element_type=jnp.float32)        # (N, H)

    # --- loss_align = MSE-mean over keep rows (mask-weighted, no gather) ---
    hid = rep2.shape[1]
    diff = rep2 - rep_t
    sa = jnp.sum(keep * diff * diff, axis=-1, keepdims=True)                    # (N, 1)
    loss_align = jnp.sum(sa, axis=0, keepdims=True) / float(num_keep * hid)     # (1, 1)

    # --- rec_loss = cosine loss on decoder(rep2) vs x over masked rows only ---
    # (decoder on all N rows; rep[keep]=0 in the reference only affects rows we
    #  discard anyway, so mask-weighting the reduction is exact.)
    x_rec = jnp.dot(rep2, wdec_ref[...], preferred_element_type=jnp.float32)    # (N, F)
    x_init = x_ref[...]
    eps = jnp.float32(1e-12)
    xn = x_rec * jax.lax.rsqrt(
        jnp.maximum(jnp.sum(x_rec * x_rec, axis=-1, keepdims=True), eps))
    yn = x_init * jax.lax.rsqrt(
        jnp.maximum(jnp.sum(x_init * x_init, axis=-1, keepdims=True), eps))
    cos_m = (1.0 + jnp.sum(xn * yn, axis=-1, keepdims=True)) * 0.5              # (N, 1)
    cos_m = jnp.maximum(cos_m, eps)          # clamp: avoid -inf/NaN when cos_m -> 0
    rec_i = -t * jnp.log(cos_m)              # == -log(cos_m**t)
    rec_loss = jnp.sum(is_m * rec_i, axis=0, keepdims=True) / float(num_mask)   # (1, 1)

    loss = loss_r * rec_loss + loss_a * loss_align
    o_ref[...] = jnp.concatenate(
        [loss, loss_align, rec_loss, jnp.zeros_like(loss)], axis=-1)            # (1, 4)


def pallas_recon_loss(reps, x, is_mask, w_e2d, rep_mask, bias,
                      w_r, al_r, ar_r, w_rd, w_dec, *,
                      t, loss_r, loss_a, num_mask, num_keep, negative_slope=0.2):
    kernel = functools.partial(_recon_loss_kernel,
                               negative_slope=float(negative_slope),
                               t=float(t), loss_r=float(loss_r), loss_a=float(loss_a),
                               num_mask=int(num_mask), num_keep=int(num_keep))
    args = [reps, x, is_mask, w_e2d, rep_mask, bias, w_r, al_r, ar_r, w_rd, w_dec]
    return pl.pallas_call(
        kernel,
        out_shape=jax.ShapeDtypeStruct((1, 4), jnp.float32),
    )(*[a.astype(jnp.float32) for a in args])


# ----------------------------------------------------------------------------
# Parameter construction (deterministic, synthetic)
# ----------------------------------------------------------------------------
def _glorot(key, shape):
    scale = jnp.sqrt(6.0 / (shape[0] + shape[1]))
    return jax.random.uniform(key, shape, jnp.float32, -scale, scale)


def init_gat_params(key, in_dim, d_head, nhead, num_layers):
    layers = []
    dim_in = in_dim
    for _ in range(num_layers):
        key, kw, kl, kr = jax.random.split(key, 4)
        layers.append({
            'W': _glorot(kw, (dim_in, nhead * d_head)),
            'attn_l': 0.1 * jax.random.normal(kl, (nhead, d_head), jnp.float32),
            'attn_r': 0.1 * jax.random.normal(kr, (nhead, d_head), jnp.float32),
        })
        dim_in = nhead * d_head
    return layers


def init_premodel_params(key, in_dim, num_hidden, nhead, num_layers,
                         edcoder_rate=0.75):
    assert num_hidden % nhead == 0
    enc_d_head = num_hidden // nhead
    recon_hidden = round(num_hidden * edcoder_rate)
    keys = jax.random.split(key, 8)
    online = init_gat_params(keys[0], in_dim, enc_d_head, nhead, num_layers)
    # _init_target(): target is an exact copy of the online encoder parameters.
    # Stack [online, target] on a leading axis of size 2 so both encoders run
    # in one pallas_call (grid=(2,), parallel); slot 0 = online, slot 1 = target.
    encoders = [
        {k: jnp.stack([layer[k], layer[k]], axis=0)
         for k in ('W', 'attn_l', 'attn_r')}
        for layer in online
    ]
    recon_encoder = init_gat_params(keys[1], num_hidden, recon_hidden, 1, 1)
    # nn.Linear(in, out, bias=False) stored as (in, out) so that y = x @ W.
    return {
        'encoders': encoders,
        'recon_encoder': recon_encoder,
        'recon_decoder': _glorot(keys[2], (recon_hidden, num_hidden)),
        'encoder_to_decoder': _glorot(keys[3], (num_hidden, num_hidden)),
        'decoder': _glorot(keys[4], (num_hidden, in_dim)),
        'decoder_deg': _glorot(keys[5], (num_hidden, 1)),   # unused in forward (dead work)
        'enc_mask_token': jnp.zeros((1, in_dim), jnp.float32),
        'rep_mask': jnp.zeros((1, num_hidden), jnp.float32),
    }


# ----------------------------------------------------------------------------
# PreModel.forward == mask_attr_prediction (jitted; host conversion done outside)
# ----------------------------------------------------------------------------
@functools.partial(jax.jit, static_argnames=("mask_rate", "replace_rate",
                                             "t", "loss_r", "loss_a"))
def premodel_forward(params, adj, x, key, *, mask_rate=0.3, replace_rate=0.1,
                     t=1.0, loss_r=1.0, loss_a=1.0):
    n_nodes, in_dim = x.shape
    k1, k2, k3, k4 = jax.random.split(key, 4)

    # ---- encoding_mask_noise (tiny XLA scatters, stays outside Pallas) ------
    perm = jax.random.permutation(k1, n_nodes)
    num_mask = int(mask_rate * n_nodes)
    num_keep = n_nodes - num_mask
    mask_nodes = perm[:num_mask]

    mask_token_rate = 1.0 - replace_rate
    num_noise = int(replace_rate * num_mask)          # chosen >= 1 in __main__
    perm_mask = jax.random.permutation(k2, num_mask)
    token_nodes = mask_nodes[perm_mask[:int(mask_token_rate * num_mask)]]
    noise_nodes = mask_nodes[perm_mask[num_mask - num_noise:]]
    noise_to_be_chosen = jax.random.permutation(k3, n_nodes)[:num_noise]

    out_x = x.at[token_nodes].set(0.0)
    out_x = out_x.at[noise_nodes].set(x[noise_to_be_chosen])
    out_x = out_x.at[token_nodes].add(
        jnp.broadcast_to(params['enc_mask_token'], (token_nodes.shape[0], in_dim)))

    # ---- target-branch input (torch.no_grad branch; forward-only here) ------
    perm_t = jax.random.permutation(k4, num_mask)
    new_mask_nodes = mask_nodes[perm_t[:int(0.8 * num_mask)]]
    x_t = x.at[new_mask_nodes].set(0.0)
    x_t = x_t.at[new_mask_nodes].add(
        jnp.broadcast_to(params['enc_mask_token'],
                         (new_mask_nodes.shape[0], in_dim)))
    # TODO(synk): momentum_update() is an in-place parameter-state mutation of
    # self.target (target = target*m + online*(1-m)); stateless here, it does
    # not affect this forward pass's outputs.

    # ---- shared additive attention bias (built ONCE per forward) ------------
    # 0.0 on edges (incl. self-loops), -1e30 on non-edges.
    bias = (adj.astype(jnp.float32) - 1.0) * jnp.float32(1e30)

    # ---- online + target encoders: ONE fused pallas_call, grid=(2,) ---------
    feats = jnp.stack([out_x, x_t], axis=0).astype(jnp.float32)      # (2, N, F)
    reps = dual_gat_encoder(bias, feats, params['encoders'])         # (2, N, H)

    # ---- reconstruction path + both losses: ONE fused pallas_call -----------
    # keep_nodes is the exact complement of mask_nodes, so a single mask column
    # drives the rep_mask scatter AND both mask-weighted loss reductions
    # (no rep[keep_nodes] / rep[mask_nodes] / x[mask_nodes] gathers).
    is_mask = jnp.zeros((n_nodes, 1), jnp.float32).at[mask_nodes].set(1.0)
    rl = params['recon_encoder'][0]
    # NOTE: preds = decoder_deg(rep) and mse_none(online, target) are computed
    # and immediately discarded in the reference forward; elided here.
    out = pallas_recon_loss(
        reps, x, is_mask, params['encoder_to_decoder'], params['rep_mask'],
        bias, rl['W'], rl['attn_l'], rl['attn_r'],
        params['recon_decoder'], params['decoder'],
        t=t, loss_r=loss_r, loss_a=loss_a,
        num_mask=num_mask, num_keep=num_keep)

    loss, loss_align, rec_loss = out[0, 0], out[0, 1], out[0, 2]
    return loss, loss_align, rec_loss


# ----------------------------------------------------------------------------
if __name__ == "__main__":
    # Small shapes consistent with PreModel(in_dim=16, num_hidden=32,
    # num_layers=2, nhead=4, nhead_out=4, activation='relu', ...).
    N, IN_DIM, NUM_HIDDEN, NHEAD, NUM_LAYERS = 40, 16, 32, 4, 2

    key = jax.random.PRNGKey(0)
    kx, kg, kp, kf = jax.random.split(key, 4)

    x = jax.random.normal(kx, (N, IN_DIM), jnp.float32)
    # Random dense graph (~15% density) with self-loops; adj[i, j]=1 iff edge j->i.
    # Self-loops are REQUIRED: the attention softmax relies on every row having
    # at least one unmasked entry (additive-bias + exp-underflow trick).
    adj = (jax.random.uniform(kg, (N, N)) < 0.15).astype(jnp.float32)
    adj = jnp.maximum(adj, jnp.eye(N, dtype=jnp.float32))

    params = init_premodel_params(kp, IN_DIM, NUM_HIDDEN, NHEAD, NUM_LAYERS,
                                  edcoder_rate=0.75)

    loss, loss_align, rec_loss = premodel_forward(
        params, adj, x, kf,
        mask_rate=0.3, replace_rate=0.1, t=1.0, loss_r=1.0, loss_a=1.0)

    jax.block_until_ready((loss, loss_align, rec_loss))
    # Host conversion happens outside the jitted forward (no mid-forward sync).
    loss_item = {'loss': float(loss)}
    print("KERNEL_OK")
</pallas_src>

<mosaic_0001>
module attributes {stable_mosaic.version = 11 : i64} {
  func.func @_dual_encoder_kernel(%arg0: i32, %arg1: memref<1x40x16xf32, #tpu.memory_space<vmem>>, %arg2: memref<40x40xf32, #tpu.memory_space<vmem>>, %arg3: memref<1x16x32xf32, #tpu.memory_space<vmem>>, %arg4: memref<1x4x8xf32, #tpu.memory_space<vmem>>, %arg5: memref<1x4x8xf32, #tpu.memory_space<vmem>>, %arg6: memref<1x32x32xf32, #tpu.memory_space<vmem>>, %arg7: memref<1x4x8xf32, #tpu.memory_space<vmem>>, %arg8: memref<1x4x8xf32, #tpu.memory_space<vmem>>, %arg9: memref<1x40x32xf32, #tpu.memory_space<vmem>>) attributes {dimension_semantics = [#tpu.dimension_semantics<parallel>], iteration_bounds = array<i64: 2>, scalar_prefetch = 0 : i64, scratch_operands = 0 : i64, tpu.core_type = #tpu.core_type<tc>, window_params = [{transform_indices = @transform_0, window_bounds = array<i64: 1, 40, 16>}, {pipeline_mode = #tpu.pipeline_mode<synchronous>, transform_indices = @transform_1, window_bounds = array<i64: 40, 40>}, {transform_indices = @transform_2, window_bounds = array<i64: 1, 16, 32>}, {transform_indices = @transform_3, window_bounds = array<i64: 1, 4, 8>}, {transform_indices = @transform_4, window_bounds = array<i64: 1, 4, 8>}, {transform_indices = @transform_5, window_bounds = array<i64: 1, 32, 32>}, {transform_indices = @transform_6, window_bounds = array<i64: 1, 4, 8>}, {transform_indices = @transform_7, window_bounds = array<i64: 1, 4, 8>}, {transform_indices = @transform_8, window_bounds = array<i64: 1, 40, 32>}]} {
    %c0 = arith.constant 0 : index
    %c0_0 = arith.constant 0 : index
    %0 = vector.load %arg2[%c0, %c0_0] : memref<40x40xf32, #tpu.memory_space<vmem>>, vector<40x40xf32>
    %c0_1 = arith.constant 0 : index
    %c0_2 = arith.constant 0 : index
    %c0_3 = arith.constant 0 : index
    %1 = vector.load %arg1[%c0_1, %c0_2, %c0_3] : memref<1x40x16xf32, #tpu.memory_space<vmem>>, vector<1x40x16xf32>
    %2 = vector.shape_cast %1 : vector<1x40x16xf32> to vector<40x16xf32>
    %c0_4 = arith.constant 0 : index
    %c0_5 = arith.constant 0 : index
    %c0_6 = arith.constant 0 : index
    %3 = vector.load %arg3[%c0_4, %c0_5, %c0_6] : memref<1x16x32xf32, #tpu.memory_space<vmem>>, vector<1x16x32xf32>
    %4 = vector.shape_cast %3 : vector<1x16x32xf32> to vector<16x32xf32>
    %c0_7 = arith.constant 0 : index
    %c0_8 = arith.constant 0 : index
    %c0_9 = arith.constant 0 : index
    %5 = vector.load %arg4[%c0_7, %c0_8, %c0_9] : memref<1x4x8xf32, #tpu.memory_space<vmem>>, vector<1x4x8xf32>
    %6 = vector.shape_cast %5 : vector<1x4x8xf32> to vector<4x8xf32>
    %c0_10 = arith.constant 0 : index
    %c0_11 = arith.constant 0 : index
    %c0_12 = arith.constant 0 : index
    %7 = vector.load %arg5[%c0_10, %c0_11, %c0_12] : memref<1x4x8xf32, #tpu.memory_space<vmem>>, vector<1x4x8xf32>
    %8 = vector.shape_cast %7 : vector<1x4x8xf32> to vector<4x8xf32>
    %cst = arith.constant dense<0.000000e+00> : vector<40x32xf32>
    %9 = tpu.matmul %2, %4, %cst {dimension_numbers = #tpu.dot_dimension_numbers<[1], [0], [0], [1], [0, 0, 1, 1], [], []>} : vector<40x16xf32>, vector<16x32xf32>, vector<40x32xf32> -> vector<40x32xf32>
    %10 = vector.extract_strided_slice %9 {offsets = [0, 0], sizes = [40, 8], strides = [1, 1]} : vector<40x32xf32> to vector<40x8xf32>
    %11 = vector.extract_strided_slice %6 {offsets = [0, 0], sizes = [1, 8], strides = [1, 1]} : vector<4x8xf32> to vector<1x8xf32>
    %12 = vector.extract_strided_slice %8 {offsets = [0, 0], sizes = [1, 8], strides = [1, 1]} : vector<4x8xf32> to vector<1x8xf32>
    %cst_13 = arith.constant dense<0.000000e+00> : vector<1x40xf32>
    %13 = tpu.matmul %11, %10, %cst_13 {dimension_numbers = #tpu.dot_dimension_numbers<[1], [1], [0], [0], [0, 0, 1, 0], [], []>} : vector<1x8xf32>, vector<40x8xf32>, vector<1x40xf32> -> vector<1x40xf32>
    %14 = vector.broadcast %12 : vector<1x8xf32> to vector<40x8xf32>
    %15 = arith.mulf %10, %14 : vector<40x8xf32>
    %cst_14 = arith.constant dense<0.000000e+00> : vector<40xf32>
    %16 = vector.multi_reduction <add>, %15, %cst_14 [1] : vector<40x8xf32> to vector<40xf32>
    %17 = vector.shape_cast %16 : vector<40xf32> to vector<40x1xf32>
    %18 = vector.broadcast %17 : vector<40x1xf32> to vector<40x40xf32>
    %19 = vector.broadcast %13 : vector<1x40xf32> to vector<40x40xf32>
    %20 = arith.addf %18, %19 : vector<40x40xf32>
    %cst_15 = arith.constant 0.000000e+00 : f32
    %21 = vector.broadcast %cst_15 : f32 to vector<40x40xf32>
    %22 = arith.cmpf ogt, %20, %21 : vector<40x40xf32>
    %cst_16 = arith.constant 2.000000e-01 : f32
    %23 = vector.broadcast %cst_16 : f32 to vector<40x40xf32>
    %24 = arith.mulf %23, %20 : vector<40x40xf32>
    %25 = arith.select %22, %20, %24 : vector<40x40xi1>, vector<40x40xf32>
    %26 = arith.addf %25, %0 : vector<40x40xf32>
    %cst_17 = arith.constant dense<0xFF800000> : vector<40xf32>
    %27 = vector.multi_reduction <maximumf>, %26, %cst_17 [1] : vector<40x40xf32> to vector<40xf32>
    %28 = vector.shape_cast %27 : vector<40xf32> to vector<40x1xf32>
    %29 = vector.broadcast %28 : vector<40x1xf32> to vector<40x40xf32>
    %30 = arith.subf %26, %29 : vector<40x40xf32>
    %31 = math.exp %30 : vector<40x40xf32>
    %cst_18 = arith.constant dense<0.000000e+00> : vector<40xf32>
    %32 = vector.multi_reduction <add>, %31, %cst_18 [1] : vector<40x40xf32> to vector<40xf32>
    %33 = vector.shape_cast %32 : vector<40xf32> to vector<40x1xf32>
    %34 = tpu.reciprocal %33 {approx = true} : vector<40x1xf32> -> vector<40x1xf32>
    %35 = vector.broadcast %34 : vector<40x1xf32> to vector<40x40xf32>
    %36 = arith.mulf %31, %35 : vector<40x40xf32>
    %cst_19 = arith.constant dense<0.000000e+00> : vector<40x8xf32>
    %37 = tpu.matmul %36, %10, %cst_19 {dimension_numbers = #tpu.dot_dimension_numbers<[1], [0], [0], [1], [0, 0, 1, 1], [], []>} : vector<40x40xf32>, vector<40x8xf32>, vector<40x8xf32> -> vector<40x8xf32>
    %38 = vector.extract_strided_slice %9 {offsets = [0, 8], sizes = [40, 8], strides = [1, 1]} : vector<40x32xf32> to vector<40x8xf32>
    %39 = vector.extract_strided_slice %6 {offsets = [1, 0], sizes = [1, 8], strides = [1, 1]} : vector<4x8xf32> to vector<1x8xf32>
    %40 = vector.extract_strided_slice %8 {offsets = [1, 0], sizes = [1, 8], strides = [1, 1]} : vector<4x8xf32> to vector<1x8xf32>
    %cst_20 = arith.constant dense<0.000000e+00> : vector<1x40xf32>
    %41 = tpu.matmul %39, %38, %cst_20 {dimension_numbers = #tpu.dot_dimension_numbers<[1], [1], [0], [0], [0, 0, 1, 0], [], []>} : vector<1x8xf32>, vector<40x8xf32>, vector<1x40xf32> -> vector<1x40xf32>
    %42 = vector.broadcast %40 : vector<1x8xf32> to vector<40x8xf32>
    %43 = arith.mulf %38, %42 : vector<40x8xf32>
    %cst_21 = arith.constant dense<0.000000e+00> : vector<40xf32>
    %44 = vector.multi_reduction <add>, %43, %cst_21 [1] : vector<40x8xf32> to vector<40xf32>
    %45 = vector.shape_cast %44 : vector<40xf32> to vector<40x1xf32>
    %46 = vector.broadcast %45 : vector<40x1xf32> to vector<40x40xf32>
    %47 = vector.broadcast %41 : vector<1x40xf32> to vector<40x40xf32>
    %48 = arith.addf %46, %47 : vector<40x40xf32>
    %cst_22 = arith.constant 0.000000e+00 : f32
    %49 = vector.broadcast %cst_22 : f32 to vector<40x40xf32>
    %50 = arith.cmpf ogt, %48, %49 : vector<40x40xf32>
    %cst_23 = arith.constant 2.000000e-01 : f32
    %51 = vector.broadcast %cst_23 : f32 to vector<40x40xf32>
    %52 = arith.mulf %51, %48 : vector<40x40xf32>
    %53 = arith.select %50, %48, %52 : vector<40x40xi1>, vector<40x40xf32>
    %54 = arith.addf %53, %0 : vector<40x40xf32>
    %cst_24 = arith.constant dense<0xFF800000> : vector<40xf32>
    %55 = vector.multi_reduction <maximumf>, %54, %cst_24 [1] : vector<40x40xf32> to vector<40xf32>
    %56 = vector.shape_cast %55 : vector<40xf32> to vector<40x1xf32>
    %57 = vector.broadcast %56 : vector<40x1xf32> to vector<40x40xf32>
    %58 = arith.subf %54, %57 : vector<40x40xf32>
    %59 = math.exp %58 : vector<40x40xf32>
    %cst_25 = arith.constant dense<0.000000e+00> : vector<40xf32>
    %60 = vector.multi_reduction <add>, %59, %cst_25 [1] : vector<40x40xf32> to vector<40xf32>
    %61 = vector.shape_cast %60 : vector<40xf32> to vector<40x1xf32>
    %62 = tpu.reciprocal %61 {approx = true} : vector<40x1xf32> -> vector<40x1xf32>
    %63 = vector.broadcast %62 : vector<40x1xf32> to vector<40x40xf32>
    %64 = arith.mulf %59, %63 : vector<40x40xf32>
    %cst_26 = arith.constant dense<0.000000e+00> : vector<40x8xf32>
    %65 = tpu.matmul %64, %38, %cst_26 {dimension_numbers = #tpu.dot_dimension_numbers<[1], [0], [0], [1], [0, 0, 1, 1], [], []>} : vector<40x40xf32>, vector<40x8xf32>, vector<40x8xf32> -> vector<40x8xf32>
    %66 = vector.extract_strided_slice %9 {offsets = [0, 16], sizes = [40, 8], strides = [1, 1]} : vector<40x32xf32> to vector<40x8xf32>
    %67 = vector.extract_strided_slice %6 {offsets = [2, 0], sizes = [1, 8], strides = [1, 1]} : vector<4x8xf32> to vector<1x8xf32>
    %68 = vector.extract_strided_slice %8 {offsets = [2, 0], sizes = [1, 8], strides = [1, 1]} : vector<4x8xf32> to vector<1x8xf32>
    %cst_27 = arith.constant dense<0.000000e+00> : vector<1x40xf32>
    %69 = tpu.matmul %67, %66, %cst_27 {dimension_numbers = #tpu.dot_dimension_numbers<[1], [1], [0], [0], [0, 0, 1, 0], [], []>} : vector<1x8xf32>, vector<40x8xf32>, vector<1x40xf32> -> vector<1x40xf32>
    %70 = vector.broadcast %68 : vector<1x8xf32> to vector<40x8xf32>
    %71 = arith.mulf %66, %70 : vector<40x8xf32>
    %cst_28 = arith.constant dense<0.000000e+00> : vector<40xf32>
    %72 = vector.multi_reduction <add>, %71, %cst_28 [1] : vector<40x8xf32> to vector<40xf32>
    %73 = vector.shape_cast %72 : vector<40xf32> to vector<40x1xf32>
    %74 = vector.broadcast %73 : vector<40x1xf32> to vector<40x40xf32>
    %75 = vector.broadcast %69 : vector<1x40xf32> to vector<40x40xf32>
    %76 = arith.addf %74, %75 : vector<40x40xf32>
    %cst_29 = arith.constant 0.000000e+00 : f32
    %77 = vector.broadcast %cst_29 : f32 to vector<40x40xf32>
    %78 = arith.cmpf ogt, %76, %77 : vector<40x40xf32>
    %cst_30 = arith.constant 2.000000e-01 : f32
    %79 = vector.broadcast %cst_30 : f32 to vector<40x40xf32>
    %80 = arith.mulf %79, %76 : vector<40x40xf32>
    %81 = arith.select %78, %76, %80 : vector<40x40xi1>, vector<40x40xf32>
    %82 = arith.addf %81, %0 : vector<40x40xf32>
    %cst_31 = arith.constant dense<0xFF800000> : vector<40xf32>
    %83 = vector.multi_reduction <maximumf>, %82, %cst_31 [1] : vector<40x40xf32> to vector<40xf32>
    %84 = vector.shape_cast %83 : vector<40xf32> to vector<40x1xf32>
    %85 = vector.broadcast %84 : vector<40x1xf32> to vector<40x40xf32>
    %86 = arith.subf %82, %85 : vector<40x40xf32>
    %87 = math.exp %86 : vector<40x40xf32>
    %cst_32 = arith.constant dense<0.000000e+00> : vector<40xf32>
    %88 = vector.multi_reduction <add>, %87, %cst_32 [1] : vector<40x40xf32> to vector<40xf32>
    %89 = vector.shape_cast %88 : vector<40xf32> to vector<40x1xf32>
    %90 = tpu.reciprocal %89 {approx = true} : vector<40x1xf32> -> vector<40x1xf32>
    %91 = vector.broadcast %90 : vector<40x1xf32> to vector<40x40xf32>
    %92 = arith.mulf %87, %91 : vector<40x40xf32>
    %cst_33 = arith.constant dense<0.000000e+00> : vector<40x8xf32>
    %93 = tpu.matmul %92, %66, %cst_33 {dimension_numbers = #tpu.dot_dimension_numbers<[1], [0], [0], [1], [0, 0, 1, 1], [], []>} : vector<40x40xf32>, vector<40x8xf32>, vector<40x8xf32> -> vector<40x8xf32>
    %94 = vector.extract_strided_slice %9 {offsets = [0, 24], sizes = [40, 8], strides = [1, 1]} : vector<40x32xf32> to vector<40x8xf32>
    %95 = vector.extract_strided_slice %6 {offsets = [3, 0], sizes = [1, 8], strides = [1, 1]} : vector<4x8xf32> to vector<1x8xf32>
    %96 = vector.extract_strided_slice %8 {offsets = [3, 0], sizes = [1, 8], strides = [1, 1]} : vector<4x8xf32> to vector<1x8xf32>
    %cst_34 = arith.constant dense<0.000000e+00> : vector<1x40xf32>
    %97 = tpu.matmul %95, %94, %cst_34 {dimension_numbers = #tpu.dot_dimension_numbers<[1], [1], [0], [0], [0, 0, 1, 0], [], []>} : vector<1x8xf32>, vector<40x8xf32>, vector<1x40xf32> -> vector<1x40xf32>
    %98 = vector.broadcast %96 : vector<1x8xf32> to vector<40x8xf32>
    %99 = arith.mulf %94, %98 : vector<40x8xf32>
    %cst_35 = arith.constant dense<0.000000e+00> : vector<40xf32>
    %100 = vector.multi_reduction <add>, %99, %cst_35 [1] : vector<40x8xf32> to vector<40xf32>
    %101 = vector.shape_cast %100 : vector<40xf32> to vector<40x1xf32>
    %102 = vector.broadcast %101 : vector<40x1xf32> to vector<40x40xf32>
    %103 = vector.broadcast %97 : vector<1x40xf32> to vector<40x40xf32>
    %104 = arith.addf %102, %103 : vector<40x40xf32>
    %cst_36 = arith.constant 0.000000e+00 : f32
    %105 = vector.broadcast %cst_36 : f32 to vector<40x40xf32>
    %106 = arith.cmpf ogt, %104, %105 : vector<40x40xf32>
    %cst_37 = arith.constant 2.000000e-01 : f32
    %107 = vector.broadcast %cst_37 : f32 to vector<40x40xf32>
    %108 = arith.mulf %107, %104 : vector<40x40xf32>
    %109 = arith.select %106, %104, %108 : vector<40x40xi1>, vector<40x40xf32>
    %110 = arith.addf %109, %0 : vector<40x40xf32>
    %cst_38 = arith.constant dense<0xFF800000> : vector<40xf32>
    %111 = vector.multi_reduction <maximumf>, %110, %cst_38 [1] : vector<40x40xf32> to vector<40xf32>
    %112 = vector.shape_cast %111 : vector<40xf32> to vector<40x1xf32>
    %113 = vector.broadcast %112 : vector<40x1xf32> to vector<40x40xf32>
    %114 = arith.subf %110, %113 : vector<40x40xf32>
    %115 = math.exp %114 : vector<40x40xf32>
    %cst_39 = arith.constant dense<0.000000e+00> : vector<40xf32>
    %116 = vector.multi_reduction <add>, %115, %cst_39 [1] : vector<40x40xf32> to vector<40xf32>
    %117 = vector.shape_cast %116 : vector<40xf32> to vector<40x1xf32>
    %118 = tpu.reciprocal %117 {approx = true} : vector<40x1xf32> -> vector<40x1xf32>
    %119 = vector.broadcast %118 : vector<40x1xf32> to vector<40x40xf32>
    %120 = arith.mulf %115, %119 : vector<40x40xf32>
    %cst_40 = arith.constant dense<0.000000e+00> : vector<40x8xf32>
    %121 = tpu.matmul %120, %94, %cst_40 {dimension_numbers = #tpu.dot_dimension_numbers<[1], [0], [0], [1], [0, 0, 1, 1], [], []>} : vector<40x40xf32>, vector<40x8xf32>, vector<40x8xf32> -> vector<40x8xf32>
    %122 = tpu.concatenate %37, %65, %93, %121 in 1 : vector<40x8xf32>, vector<40x8xf32>, vector<40x8xf32>, vector<40x8xf32> -> vector<40x32xf32>
    %cst_41 = arith.constant 0.000000e+00 : f32
    %123 = vector.broadcast %cst_41 : f32 to vector<40x32xf32>
    %124 = arith.maximumf %122, %123 : vector<40x32xf32>
    %c0_42 = arith.constant 0 : index
    %c0_43 = arith.constant 0 : index
    %c0_44 = arith.constant 0 : index
    %125 = vector.load %arg6[%c0_42, %c0_43, %c0_44] : memref<1x32x32xf32, #tpu.memory_space<vmem>>, vector<1x32x32xf32>
    %126 = vector.shape_cast %125 : vector<1x32x32xf32> to vector<32x32xf32>
    %c0_45 = arith.constant 0 : index
    %c0_46 = arith.constant 0 : index
    %c0_47 = arith.constant 0 : index
    %127 = vector.load %arg7[%c0_45, %c0_46, %c0_47] : memref<1x4x8xf32, #tpu.memory_space<vmem>>, vector<1x4x8xf32>
    %128 = vector.shape_cast %127 : vector<1x4x8xf32> to vector<4x8xf32>
    %c0_48 = arith.constant 0 : index
    %c0_49 = arith.constant 0 : index
    %c0_50 = arith.constant 0 : index
    %129 = vector.load %arg8[%c0_48, %c0_49, %c0_50] : memref<1x4x8xf32, #tpu.memory_space<vmem>>, vector<1x4x8xf32>
    %130 = vector.shape_cast %129 : vector<1x4x8xf32> to vector<4x8xf32>
    %cst_51 = arith.constant dense<0.000000e+00> : vector<40x32xf32>
    %131 = tpu.matmul %124, %126, %cst_51 {dimension_numbers = #tpu.dot_dimension_numbers<[1], [0], [0], [1], [0, 0, 1, 1], [], []>} : vector<40x32xf32>, vector<32x32xf32>, vector<40x32xf32> -> vector<40x32xf32>
    %132 = vector.extract_strided_slice %131 {offsets = [0, 0], sizes = [40, 8], strides = [1, 1]} : vector<40x32xf32> to vector<40x8xf32>
    %133 = vector.extract_strided_slice %128 {offsets = [0, 0], sizes = [1, 8], strides = [1, 1]} : vector<4x8xf32> to vector<1x8xf32>
    %134 = vector.extract_strided_slice %130 {offsets = [0, 0], sizes = [1, 8], strides = [1, 1]} : vector<4x8xf32> to vector<1x8xf32>
    %cst_52 = arith.constant dense<0.000000e+00> : vector<1x40xf32>
    %135 = tpu.matmul %133, %132, %cst_52 {dimension_numbers = #tpu.dot_dimension_numbers<[1], [1], [0], [0], [0, 0, 1, 0], [], []>} : vector<1x8xf32>, vector<40x8xf32>, vector<1x40xf32> -> vector<1x40xf32>
    %136 = vector.broadcast %134 : vector<1x8xf32> to vector<40x8xf32>
    %137 = arith.mulf %132, %136 : vector<40x8xf32>
    %cst_53 = arith.constant dense<0.000000e+00> : vector<40xf32>
    %138 = vector.multi_reduction <add>, %137, %cst_53 [1] : vector<40x8xf32> to vector<40xf32>
    %139 = vector.shape_cast %138 : vector<40xf32> to vector<40x1xf32>
    %140 = vector.broadcast %139 : vector<40x1xf32> to vector<40x40xf32>
    %141 = vector.broadcast %135 : vector<1x40xf32> to vector<40x40xf32>
    %142 = arith.addf %140, %141 : vector<40x40xf32>
    %cst_54 = arith.constant 0.000000e+00 : f32
    %143 = vector.broadcast %cst_54 : f32 to vector<40x40xf32>
    %144 = arith.cmpf ogt, %142, %143 : vector<40x40xf32>
    %cst_55 = arith.constant 2.000000e-01 : f32
    %145 = vector.broadcast %cst_55 : f32 to vector<40x40xf32>
    %146 = arith.mulf %145, %142 : vector<40x40xf32>
    %147 = arith.select %144, %142, %146 : vector<40x40xi1>, vector<40x40xf32>
    %148 = arith.addf %147, %0 : vector<40x40xf32>
    %cst_56 = arith.constant dense<0xFF800000> : vector<40xf32>
    %149 = vector.multi_reduction <maximumf>, %148, %cst_56 [1] : vector<40x40xf32> to vector<40xf32>
    %150 = vector.shape_cast %149 : vector<40xf32> to vector<40x1xf32>
    %151 = vector.broadcast %150 : vector<40x1xf32> to vector<40x40xf32>
    %152 = arith.subf %148, %151 : vector<40x40xf32>
    %153 = math.exp %152 : vector<40x40xf32>
    %cst_57 = arith.constant dense<0.000000e+00> : vector<40xf32>
    %154 = vector.multi_reduction <add>, %153, %cst_57 [1] : vector<40x40xf32> to vector<40xf32>
    %155 = vector.shape_cast %154 : vector<40xf32> to vector<40x1xf32>
    %156 = tpu.reciprocal %155 {approx = true} : vector<40x1xf32> -> vector<40x1xf32>
    %157 = vector.broadcast %156 : vector<40x1xf32> to vector<40x40xf32>
    %158 = arith.mulf %153, %157 : vector<40x40xf32>
    %cst_58 = arith.constant dense<0.000000e+00> : vector<40x8xf32>
    %159 = tpu.matmul %158, %132, %cst_58 {dimension_numbers = #tpu.dot_dimension_numbers<[1], [0], [0], [1], [0, 0, 1, 1], [], []>} : vector<40x40xf32>, vector<40x8xf32>, vector<40x8xf32> -> vector<40x8xf32>
    %160 = vector.extract_strided_slice %131 {offsets = [0, 8], sizes = [40, 8], strides = [1, 1]} : vector<40x32xf32> to vector<40x8xf32>
    %161 = vector.extract_strided_slice %128 {offsets = [1, 0], sizes = [1, 8], strides = [1, 1]} : vector<4x8xf32> to vector<1x8xf32>
    %162 = vector.extract_strided_slice %130 {offsets = [1, 0], sizes = [1, 8], strides = [1, 1]} : vector<4x8xf32> to vector<1x8xf32>
    %cst_59 = arith.constant dense<0.000000e+00> : vector<1x40xf32>
    %163 = tpu.matmul %161, %160, %cst_59 {dimension_numbers = #tpu.dot_dimension_numbers<[1], [1], [0], [0], [0, 0, 1, 0], [], []>} : vector<1x8xf32>, vector<40x8xf32>, vector<1x40xf32> -> vector<1x40xf32>
    %164 = vector.broadcast %162 : vector<1x8xf32> to vector<40x8xf32>
    %165 = arith.mulf %160, %164 : vector<40x8xf32>
    %cst_60 = arith.constant dense<0.000000e+00> : vector<40xf32>
    %166 = vector.multi_reduction <add>, %165, %cst_60 [1] : vector<40x8xf32> to vector<40xf32>
    %167 = vector.shape_cast %166 : vector<40xf32> to vector<40x1xf32>
    %168 = vector.broadcast %167 : vector<40x1xf32> to vector<40x40xf32>
    %169 = vector.broadcast %163 : vector<1x40xf32> to vector<40x40xf32>
    %170 = arith.addf %168, %169 : vector<40x40xf32>
    %cst_61 = arith.constant 0.000000e+00 : f32
    %171 = vector.broadcast %cst_61 : f32 to vector<40x40xf32>
    %172 = arith.cmpf ogt, %170, %171 : vector<40x40xf32>
    %cst_62 = arith.constant 2.000000e-01 : f32
    %173 = vector.broadcast %cst_62 : f32 to vector<40x40xf32>
    %174 = arith.mulf %173, %170 : vector<40x40xf32>
    %175 = arith.select %172, %170, %174 : vector<40x40xi1>, vector<40x40xf32>
    %176 = arith.addf %175, %0 : vector<40x40xf32>
    %cst_63 = arith.constant dense<0xFF800000> : vector<40xf32>
    %177 = vector.multi_reduction <maximumf>, %176, %cst_63 [1] : vector<40x40xf32> to vector<40xf32>
    %178 = vector.shape_cast %177 : vector<40xf32> to vector<40x1xf32>
    %179 = vector.broadcast %178 : vector<40x1xf32> to vector<40x40xf32>
    %180 = arith.subf %176, %179 : vector<40x40xf32>
    %181 = math.exp %180 : vector<40x40xf32>
    %cst_64 = arith.constant dense<0.000000e+00> : vector<40xf32>
    %182 = vector.multi_reduction <add>, %181, %cst_64 [1] : vector<40x40xf32> to vector<40xf32>
    %183 = vector.shape_cast %182 : vector<40xf32> to vector<40x1xf32>
    %184 = tpu.reciprocal %183 {approx = true} : vector<40x1xf32> -> vector<40x1xf32>
    %185 = vector.broadcast %184 : vector<40x1xf32> to vector<40x40xf32>
    %186 = arith.mulf %181, %185 : vector<40x40xf32>
    %cst_65 = arith.constant dense<0.000000e+00> : vector<40x8xf32>
    %187 = tpu.matmul %186, %160, %cst_65 {dimension_numbers = #tpu.dot_dimension_numbers<[1], [0], [0], [1], [0, 0, 1, 1], [], []>} : vector<40x40xf32>, vector<40x8xf32>, vector<40x8xf32> -> vector<40x8xf32>
    %188 = vector.extract_strided_slice %131 {offsets = [0, 16], sizes = [40, 8], strides = [1, 1]} : vector<40x32xf32> to vector<40x8xf32>
    %189 = vector.extract_strided_slice %128 {offsets = [2, 0], sizes = [1, 8], strides = [1, 1]} : vector<4x8xf32> to vector<1x8xf32>
    %190 = vector.extract_strided_slice %130 {offsets = [2, 0], sizes = [1, 8], strides = [1, 1]} : vector<4x8xf32> to vector<1x8xf32>
    %cst_66 = arith.constant dense<0.000000e+00> : vector<1x40xf32>
    %191 = tpu.matmul %189, %188, %cst_66 {dimension_numbers = #tpu.dot_dimension_numbers<[1], [1], [0], [0], [0, 0, 1, 0], [], []>} : vector<1x8xf32>, vector<40x8xf32>, vector<1x40xf32> -> vector<1x40xf32>
    %192 = vector.broadcast %190 : vector<1x8xf32> to vector<40x8xf32>
    %193 = arith.mulf %188, %192 : vector<40x8xf32>
    %cst_67 = arith.constant dense<0.000000e+00> : vector<40xf32>
    %194 = vector.multi_reduction <add>, %193, %cst_67 [1] : vector<40x8xf32> to vector<40xf32>
    %195 = vector.shape_cast %194 : vector<40xf32> to vector<40x1xf32>
    %196 = vector.broadcast %195 : vector<40x1xf32> to vector<40x40xf32>
    %197 = vector.broadcast %191 : vector<1x40xf32> to vector<40x40xf32>
    %198 = arith.addf %196, %197 : vector<40x40xf32>
    %cst_68 = arith.constant 0.000000e+00 : f32
    %199 = vector.broadcast %cst_68 : f32 to vector<40x40xf32>
    %200 = arith.cmpf ogt, %198, %199 : vector<40x40xf32>
    %cst_69 = arith.constant 2.000000e-01 : f32
    %201 = vector.broadcast %cst_69 : f32 to vector<40x40xf32>
    %202 = arith.mulf %201, %198 : vector<40x40xf32>
    %203 = arith.select %200, %198, %202 : vector<40x40xi1>, vector<40x40xf32>
    %204 = arith.addf %203, %0 : vector<40x40xf32>
    %cst_70 = arith.constant dense<0xFF800000> : vector<40xf32>
    %205 = vector.multi_reduction <maximumf>, %204, %cst_70 [1] : vector<40x40xf32> to vector<40xf32>
    %206 = vector.shape_cast %205 : vector<40xf32> to vector<40x1xf32>
    %207 = vector.broadcast %206 : vector<40x1xf32> to vector<40x40xf32>
    %208 = arith.subf %204, %207 : vector<40x40xf32>
    %209 = math.exp %208 : vector<40x40xf32>
    %cst_71 = arith.constant dense<0.000000e+00> : vector<40xf32>
    %210 = vector.multi_reduction <add>, %209, %cst_71 [1] : vector<40x40xf32> to vector<40xf32>
    %211 = vector.shape_cast %210 : vector<40xf32> to vector<40x1xf32>
    %212 = tpu.reciprocal %211 {approx = true} : vector<40x1xf32> -> vector<40x1xf32>
    %213 = vector.broadcast %212 : vector<40x1xf32> to vector<40x40xf32>
    %214 = arith.mulf %209, %213 : vector<40x40xf32>
    %cst_72 = arith.constant dense<0.000000e+00> : vector<40x8xf32>
    %215 = tpu.matmul %214, %188, %cst_72 {dimension_numbers = #tpu.dot_dimension_numbers<[1], [0], [0], [1], [0, 0, 1, 1], [], []>} : vector<40x40xf32>, vector<40x8xf32>, vector<40x8xf32> -> vector<40x8xf32>
    %216 = vector.extract_strided_slice %131 {offsets = [0, 24], sizes = [40, 8], strides = [1, 1]} : vector<40x32xf32> to vector<40x8xf32>
    %217 = vector.extract_strided_slice %128 {offsets = [3, 0], sizes = [1, 8], strides = [1, 1]} : vector<4x8xf32> to vector<1x8xf32>
    %218 = vector.extract_strided_slice %130 {offsets = [3, 0], sizes = [1, 8], strides = [1, 1]} : vector<4x8xf32> to vector<1x8xf32>
    %cst_73 = arith.constant dense<0.000000e+00> : vector<1x40xf32>
    %219 = tpu.matmul %217, %216, %cst_73 {dimension_numbers = #tpu.dot_dimension_numbers<[1], [1], [0], [0], [0, 0, 1, 0], [], []>} : vector<1x8xf32>, vector<40x8xf32>, vector<1x40xf32> -> vector<1x40xf32>
    %220 = vector.broadcast %218 : vector<1x8xf32> to vector<40x8xf32>
    %221 = arith.mulf %216, %220 : vector<40x8xf32>
    %cst_74 = arith.constant dense<0.000000e+00> : vector<40xf32>
    %222 = vector.multi_reduction <add>, %221, %cst_74 [1] : vector<40x8xf32> to vector<40xf32>
    %223 = vector.shape_cast %222 : vector<40xf32> to vector<40x1xf32>
    %224 = vector.broadcast %223 : vector<40x1xf32> to vector<40x40xf32>
    %225 = vector.broadcast %219 : vector<1x40xf32> to vector<40x40xf32>
    %226 = arith.addf %224, %225 : vector<40x40xf32>
    %cst_75 = arith.constant 0.000000e+00 : f32
    %227 = vector.broadcast %cst_75 : f32 to vector<40x40xf32>
    %228 = arith.cmpf ogt, %226, %227 : vector<40x40xf32>
    %cst_76 = arith.constant 2.000000e-01 : f32
    %229 = vector.broadcast %cst_76 : f32 to vector<40x40xf32>
    %230 = arith.mulf %229, %226 : vector<40x40xf32>
    %231 = arith.select %228, %226, %230 : vector<40x40xi1>, vector<40x40xf32>
    %232 = arith.addf %231, %0 : vector<40x40xf32>
    %cst_77 = arith.constant dense<0xFF800000> : vector<40xf32>
    %233 = vector.multi_reduction <maximumf>, %232, %cst_77 [1] : vector<40x40xf32> to vector<40xf32>
    %234 = vector.shape_cast %233 : vector<40xf32> to vector<40x1xf32>
    %235 = vector.broadcast %234 : vector<40x1xf32> to vector<40x40xf32>
    %236 = arith.subf %232, %235 : vector<40x40xf32>
    %237 = math.exp %236 : vector<40x40xf32>
    %cst_78 = arith.constant dense<0.000000e+00> : vector<40xf32>
    %238 = vector.multi_reduction <add>, %237, %cst_78 [1] : vector<40x40xf32> to vector<40xf32>
    %239 = vector.shape_cast %238 : vector<40xf32> to vector<40x1xf32>
    %240 = tpu.reciprocal %239 {approx = true} : vector<40x1xf32> -> vector<40x1xf32>
    %241 = vector.broadcast %240 : vector<40x1xf32> to vector<40x40xf32>
    %242 = arith.mulf %237, %241 : vector<40x40xf32>
    %cst_79 = arith.constant dense<0.000000e+00> : vector<40x8xf32>
    %243 = tpu.matmul %242, %216, %cst_79 {dimension_numbers = #tpu.dot_dimension_numbers<[1], [0], [0], [1], [0, 0, 1, 1], [], []>} : vector<40x40xf32>, vector<40x8xf32>, vector<40x8xf32> -> vector<40x8xf32>
    %244 = tpu.concatenate %159, %187, %215, %243 in 1 : vector<40x8xf32>, vector<40x8xf32>, vector<40x8xf32>, vector<40x8xf32> -> vector<40x32xf32>
    %cst_80 = arith.constant 0.000000e+00 : f32
    %245 = vector.broadcast %cst_80 : f32 to vector<40x32xf32>
    %246 = arith.maximumf %244, %245 : vector<40x32xf32>
    %c0_81 = arith.constant 0 : index
    %c0_82 = arith.constant 0 : index
    %c0_83 = arith.constant 0 : index
    %247 = vector.load %arg9[%c0_81, %c0_82, %c0_83] : memref<1x40x32xf32, #tpu.memory_space<vmem>>, vector<1x40x32xf32>
    %248 = vector.shape_cast %247 : vector<1x40x32xf32> to vector<40x32xf32>
    %249 = vector.shape_cast %246 : vector<40x32xf32> to vector<1x40x32xf32>
    tpu.vector_store %arg9[%c0_81, %c0_82, %c0_83], %249 {strides = array<i32>} : memref<1x40x32xf32, #tpu.memory_space<vmem>>, vector<1x40x32xf32>,
    return
  }
  func.func @transform_0(%arg0: i32) -> (i32, i32, i32) {
    %c0_i32 = arith.constant 0 : i32
    %c0_i32_0 = arith.constant 0 : i32
    %c0_i32_1 = arith.constant 0 : i32
    return %arg0, %c0_i32, %c0_i32_0 : i32, i32, i32
  }
  func.func @transform_1(%arg0: i32) -> (i32, i32) {
    %c0_i32 = arith.constant 0 : i32
    %c0_i32_0 = arith.constant 0 : i32
    %c0_i32_1 = arith.constant 0 : i32
    return %c0_i32, %c0_i32_0 : i32, i32
  }
  func.func @transform_2(%arg0: i32) -> (i32, i32, i32) {
    %c0_i32 = arith.constant 0 : i32
    %c0_i32_0 = arith.constant 0 : i32
    %c0_i32_1 = arith.constant 0 : i32
    return %arg0, %c0_i32, %c0_i32_0 : i32, i32, i32
  }
  func.func @transform_3(%arg0: i32) -> (i32, i32, i32) {
    %c0_i32 = arith.constant 0 : i32
    %c0_i32_0 = arith.constant 0 : i32
    %c0_i32_1 = arith.constant 0 : i32
    return %arg0, %c0_i32, %c0_i32_0 : i32, i32, i32
  }
  func.func @transform_4(%arg0: i32) -> (i32, i32, i32) {
    %c0_i32 = arith.constant 0 : i32
    %c0_i32_0 = arith.constant 0 : i32
    %c0_i32_1 = arith.constant 0 : i32
    return %arg0, %c0_i32, %c0_i32_0 : i32, i32, i32
  }
  func.func @transform_5(%arg0: i32) -> (i32, i32, i32) {
    %c0_i32 = arith.constant 0 : i32
    %c0_i32_0 = arith.constant 0 : i32
    %c0_i32_1 = arith.constant 0 : i32
    return %arg0, %c0_i32, %c0_i32_0 : i32, i32, i32
  }
  func.func @transform_6(%arg0: i32) -> (i32, i32, i32) {
    %c0_i32 = arith.constant 0 : i32
    %c0_i32_0 = arith.constant 0 : i32
    %c0_i32_1 = arith.constant 0 : i32
    return %arg0, %c0_i32, %c0_i32_0 : i32, i32, i32
  }
  func.func @transform_7(%arg0: i32) -> (i32, i32, i32) {
    %c0_i32 = arith.constant 0 : i32
    %c0_i32_0 = arith.constant 0 : i32
    %c0_i32_1 = arith.constant 0 : i32
    return %arg0, %c0_i32, %c0_i32_0 : i32, i32, i32
  }
  func.func @transform_8(%arg0: i32) -> (i32, i32, i32) {
    %c0_i32 = arith.constant 0 : i32
    %c0_i32_0 = arith.constant 0 : i32
    %c0_i32_1 = arith.constant 0 : i32
    return %arg0, %c0_i32, %c0_i32_0 : i32, i32, i32
  }
}

module attributes {stable_mosaic.version = 11 : i64} {
  func.func @_recon_loss_kernel(%arg0: memref<2x40x32xf32, #tpu.memory_space<vmem>>, %arg1: memref<40x16xf32, #tpu.memory_space<vmem>>, %arg2: memref<40x1xf32, #tpu.memory_space<vmem>>, %arg3: memref<32x32xf32, #tpu.memory_space<vmem>>, %arg4: memref<1x32xf32, #tpu.memory_space<vmem>>, %arg5: memref<40x40xf32, #tpu.memory_space<vmem>>, %arg6: memref<32x24xf32, #tpu.memory_space<vmem>>, %arg7: memref<1x24xf32, #tpu.memory_space<vmem>>, %arg8: memref<1x24xf32, #tpu.memory_space<vmem>>, %arg9: memref<24x32xf32, #tpu.memory_space<vmem>>, %arg10: memref<32x16xf32, #tpu.memory_space<vmem>>, %arg11: memref<1x4xf32, #tpu.memory_space<vmem>>) attributes {dimension_semantics = [], scalar_prefetch = 0 : i64, scratch_operands = 0 : i64, tpu.core_type = #tpu.core_type<tc>} {
    %c0 = arith.constant 0 : index
    %c0_0 = arith.constant 0 : index
    %c0_1 = arith.constant 0 : index
    %0 = vector.load %arg0[%c0, %c0_0, %c0_1] : memref<2x40x32xf32, #tpu.memory_space<vmem>>, vector<1x40x32xf32>
    %1 = vector.shape_cast %0 : vector<1x40x32xf32> to vector<40x32xf32>
    %c1 = arith.constant 1 : index
    %c0_2 = arith.constant 0 : index
    %c0_3 = arith.constant 0 : index
    %2 = vector.load %arg0[%c1, %c0_2, %c0_3] : memref<2x40x32xf32, #tpu.memory_space<vmem>>, vector<1x40x32xf32>
    %3 = vector.shape_cast %2 : vector<1x40x32xf32> to vector<40x32xf32>
    %c0_4 = arith.constant 0 : index
    %c0_5 = arith.constant 0 : index
    %4 = vector.load %arg5[%c0_4, %c0_5] : memref<40x40xf32, #tpu.memory_space<vmem>>, vector<40x40xf32>
    %c0_6 = arith.constant 0 : index
    %c0_7 = arith.constant 0 : index
    %5 = vector.load %arg2[%c0_6, %c0_7] : memref<40x1xf32, #tpu.memory_space<vmem>>, vector<40x1xf32>
    %cst = arith.constant 1.000000e+00 : f32
    %6 = vector.broadcast %cst : f32 to vector<40x1xf32>
    %7 = arith.subf %6, %5 : vector<40x1xf32>
    %c0_8 = arith.constant 0 : index
    %c0_9 = arith.constant 0 : index
    %8 = vector.load %arg3[%c0_8, %c0_9] : memref<32x32xf32, #tpu.memory_space<vmem>>, vector<32x32xf32>
    %cst_10 = arith.constant dense<0.000000e+00> : vector<40x32xf32>
    %9 = tpu.matmul %1, %8, %cst_10 {dimension_numbers = #tpu.dot_dimension_numbers<[1], [0], [0], [1], [0, 0, 1, 1], [], []>} : vector<40x32xf32>, vector<32x32xf32>, vector<40x32xf32> -> vector<40x32xf32>
    %cst_11 = arith.constant 0.000000e+00 : f32
    %10 = vector.broadcast %cst_11 : f32 to vector<40x1xf32>
    %11 = arith.cmpf ogt, %5, %10 : vector<40x1xf32>
    %c0_12 = arith.constant 0 : index
    %c0_13 = arith.constant 0 : index
    %12 = vector.load %arg4[%c0_12, %c0_13] : memref<1x32xf32, #tpu.memory_space<vmem>>, vector<1x32xf32>
    %13 = vector.shape_cast %12 : vector<1x32xf32> to vector<1x32xf32>
    %14 = vector.broadcast %13 : vector<1x32xf32> to vector<40x32xf32>
    %15 = vector.shape_cast %11 : vector<40x1xi1> to vector<40x1xi1>
    %16 = vector.broadcast %15 : vector<40x1xi1> to vector<40x32xi1>
    %17 = arith.select %16, %14, %9 : vector<40x32xi1>, vector<40x32xf32>
    %c0_14 = arith.constant 0 : index
    %c0_15 = arith.constant 0 : index
    %18 = vector.load %arg6[%c0_14, %c0_15] : memref<32x24xf32, #tpu.memory_space<vmem>>, vector<32x24xf32>
    %c0_16 = arith.constant 0 : index
    %c0_17 = arith.constant 0 : index
    %19 = vector.load %arg7[%c0_16, %c0_17] : memref<1x24xf32, #tpu.memory_space<vmem>>, vector<1x24xf32>
    %c0_18 = arith.constant 0 : index
    %c0_19 = arith.constant 0 : index
    %20 = vector.load %arg8[%c0_18, %c0_19] : memref<1x24xf32, #tpu.memory_space<vmem>>, vector<1x24xf32>
    %cst_20 = arith.constant dense<0.000000e+00> : vector<40x24xf32>
    %21 = tpu.matmul %17, %18, %cst_20 {dimension_numbers = #tpu.dot_dimension_numbers<[1], [0], [0], [1], [0, 0, 1, 1], [], []>} : vector<40x32xf32>, vector<32x24xf32>, vector<40x24xf32> -> vector<40x24xf32>
    %cst_21 = arith.constant dense<0.000000e+00> : vector<1x40xf32>
    %22 = tpu.matmul %19, %21, %cst_21 {dimension_numbers = #tpu.dot_dimension_numbers<[1], [1], [0], [0], [0, 0, 1, 0], [], []>} : vector<1x24xf32>, vector<40x24xf32>, vector<1x40xf32> -> vector<1x40xf32>
    %23 = vector.broadcast %20 : vector<1x24xf32> to vector<40x24xf32>
    %24 = arith.mulf %21, %23 : vector<40x24xf32>
    %cst_22 = arith.constant dense<0.000000e+00> : vector<40xf32>
    %25 = vector.multi_reduction <add>, %24, %cst_22 [1] : vector<40x24xf32> to vector<40xf32>
    %26 = vector.shape_cast %25 : vector<40xf32> to vector<40x1xf32>
    %27 = vector.broadcast %26 : vector<40x1xf32> to vector<40x40xf32>
    %28 = vector.broadcast %22 : vector<1x40xf32> to vector<40x40xf32>
    %29 = arith.addf %27, %28 : vector<40x40xf32>
    %cst_23 = arith.constant 0.000000e+00 : f32
    %30 = vector.broadcast %cst_23 : f32 to vector<40x40xf32>
    %31 = arith.cmpf ogt, %29, %30 : vector<40x40xf32>
    %cst_24 = arith.constant 2.000000e-01 : f32
    %32 = vector.broadcast %cst_24 : f32 to vector<40x40xf32>
    %33 = arith.mulf %32, %29 : vector<40x40xf32>
    %34 = arith.select %31, %29, %33 : vector<40x40xi1>, vector<40x40xf32>
    %35 = arith.addf %34, %4 : vector<40x40xf32>
    %cst_25 = arith.constant dense<0xFF800000> : vector<40xf32>
    %36 = vector.multi_reduction <maximumf>, %35, %cst_25 [1] : vector<40x40xf32> to vector<40xf32>
    %37 = vector.shape_cast %36 : vector<40xf32> to vector<40x1xf32>
    %38 = vector.broadcast %37 : vector<40x1xf32> to vector<40x40xf32>
    %39 = arith.subf %35, %38 : vector<40x40xf32>
    %40 = math.exp %39 : vector<40x40xf32>
    %cst_26 = arith.constant dense<0.000000e+00> : vector<40xf32>
    %41 = vector.multi_reduction <add>, %40, %cst_26 [1] : vector<40x40xf32> to vector<40xf32>
    %42 = vector.shape_cast %41 : vector<40xf32> to vector<40x1xf32>
    %43 = tpu.reciprocal %42 {approx = true} : vector<40x1xf32> -> vector<40x1xf32>
    %44 = vector.broadcast %43 : vector<40x1xf32> to vector<40x40xf32>
    %45 = arith.mulf %40, %44 : vector<40x40xf32>
    %cst_27 = arith.constant dense<0.000000e+00> : vector<40x24xf32>
    %46 = tpu.matmul %45, %21, %cst_27 {dimension_numbers = #tpu.dot_dimension_numbers<[1], [0], [0], [1], [0, 0, 1, 1], [], []>} : vector<40x40xf32>, vector<40x24xf32>, vector<40x24xf32> -> vector<40x24xf32>
    %cst_28 = arith.constant 0.000000e+00 : f32
    %47 = vector.broadcast %cst_28 : f32 to vector<40x24xf32>
    %48 = arith.maximumf %46, %47 : vector<40x24xf32>
    %c0_29 = arith.constant 0 : index
    %c0_30 = arith.constant 0 : index
    %49 = vector.load %arg9[%c0_29, %c0_30] : memref<24x32xf32, #tpu.memory_space<vmem>>, vector<24x32xf32>
    %cst_31 = arith.constant dense<0.000000e+00> : vector<40x32xf32>
    %50 = tpu.matmul %48, %49, %cst_31 {dimension_numbers = #tpu.dot_dimension_numbers<[1], [0], [0], [1], [0, 0, 1, 1], [], []>} : vector<40x24xf32>, vector<24x32xf32>, vector<40x32xf32> -> vector<40x32xf32>
    %51 = arith.subf %50, %3 : vector<40x32xf32>
    %52 = vector.broadcast %7 : vector<40x1xf32> to vector<40x32xf32>
    %53 = arith.mulf %52, %51 : vector<40x32xf32>
    %54 = arith.mulf %53, %51 : vector<40x32xf32>
    %cst_32 = arith.constant dense<0.000000e+00> : vector<40xf32>
    %55 = vector.multi_reduction <add>, %54, %cst_32 [1] : vector<40x32xf32> to vector<40xf32>
    %56 = vector.shape_cast %55 : vector<40xf32> to vector<40x1xf32>
    %cst_33 = arith.constant dense<0.000000e+00> : vector<1xf32>
    %57 = vector.multi_reduction <add>, %56, %cst_33 [0] : vector<40x1xf32> to vector<1xf32>
    %58 = vector.shape_cast %57 : vector<1xf32> to vector<1x1xf32>
    %cst_34 = arith.constant 8.960000e+02 : f32
    %59 = vector.broadcast %cst_34 : f32 to vector<1x1xf32>
    %60 = arith.divf %58, %59 : vector<1x1xf32>
    %c0_35 = arith.constant 0 : index
    %c0_36 = arith.constant 0 : index
    %61 = vector.load %arg10[%c0_35, %c0_36] : memref<32x16xf32, #tpu.memory_space<vmem>>, vector<32x16xf32>
    %cst_37 = arith.constant dense<0.000000e+00> : vector<40x16xf32>
    %62 = tpu.matmul %50, %61, %cst_37 {dimension_numbers = #tpu.dot_dimension_numbers<[1], [0], [0], [1], [0, 0, 1, 1], [], []>} : vector<40x32xf32>, vector<32x16xf32>, vector<40x16xf32> -> vector<40x16xf32>
    %c0_38 = arith.constant 0 : index
    %c0_39 = arith.constant 0 : index
    %63 = vector.load %arg1[%c0_38, %c0_39] : memref<40x16xf32, #tpu.memory_space<vmem>>, vector<40x16xf32>
    %64 = arith.mulf %62, %62 : vector<40x16xf32>
    %cst_40 = arith.constant dense<0.000000e+00> : vector<40xf32>
    %65 = vector.multi_reduction <add>, %64, %cst_40 [1] : vector<40x16xf32> to vector<40xf32>
    %66 = vector.shape_cast %65 : vector<40xf32> to vector<40x1xf32>
    %cst_41 = arith.constant 9.99999996E-13 : f32
    %67 = vector.broadcast %cst_41 : f32 to vector<40x1xf32>
    %68 = arith.maximumf %66, %67 : vector<40x1xf32>
    %69 = math.rsqrt %68 : vector<40x1xf32>
    %70 = vector.broadcast %69 : vector<40x1xf32> to vector<40x16xf32>
    %71 = arith.mulf %62, %70 : vector<40x16xf32>
    %72 = arith.mulf %63, %63 : vector<40x16xf32>
    %cst_42 = arith.constant dense<0.000000e+00> : vector<40xf32>
    %73 = vector.multi_reduction <add>, %72, %cst_42 [1] : vector<40x16xf32> to vector<40xf32>
    %74 = vector.shape_cast %73 : vector<40xf32> to vector<40x1xf32>
    %cst_43 = arith.constant 9.99999996E-13 : f32
    %75 = vector.broadcast %cst_43 : f32 to vector<40x1xf32>
    %76 = arith.maximumf %74, %75 : vector<40x1xf32>
    %77 = math.rsqrt %76 : vector<40x1xf32>
    %78 = vector.broadcast %77 : vector<40x1xf32> to vector<40x16xf32>
    %79 = arith.mulf %63, %78 : vector<40x16xf32>
    %80 = arith.mulf %71, %79 : vector<40x16xf32>
    %cst_44 = arith.constant dense<0.000000e+00> : vector<40xf32>
    %81 = vector.multi_reduction <add>, %80, %cst_44 [1] : vector<40x16xf32> to vector<40xf32>
    %82 = vector.shape_cast %81 : vector<40xf32> to vector<40x1xf32>
    %cst_45 = arith.constant 1.000000e+00 : f32
    %83 = vector.broadcast %cst_45 : f32 to vector<40x1xf32>
    %84 = arith.addf %83, %82 : vector<40x1xf32>
    %cst_46 = arith.constant 5.000000e-01 : f32
    %85 = vector.broadcast %cst_46 : f32 to vector<40x1xf32>
    %86 = arith.mulf %84, %85 : vector<40x1xf32>
    %cst_47 = arith.constant 9.99999996E-13 : f32
    %87 = vector.broadcast %cst_47 : f32 to vector<40x1xf32>
    %88 = arith.maximumf %86, %87 : vector<40x1xf32>
    %89 = math.log %88 : vector<40x1xf32>
    %cst_48 = arith.constant -1.000000e+00 : f32
    %90 = vector.broadcast %cst_48 : f32 to vector<40x1xf32>
    %91 = arith.mulf %90, %89 : vector<40x1xf32>
    %92 = arith.mulf %5, %91 : vector<40x1xf32>
    %cst_49 = arith.constant dense<0.000000e+00> : vector<1xf32>
    %93 = vector.multi_reduction <add>, %92, %cst_49 [0] : vector<40x1xf32> to vector<1xf32>
    %94 = vector.shape_cast %93 : vector<1xf32> to vector<1x1xf32>
    %cst_50 = arith.constant 1.200000e+01 : f32
    %95 = vector.broadcast %cst_50 : f32 to vector<1x1xf32>
    %96 = arith.divf %94, %95 : vector<1x1xf32>
    %cst_51 = arith.constant 1.000000e+00 : f32
    %97 = vector.broadcast %cst_51 : f32 to vector<1x1xf32>
    %98 = arith.mulf %97, %96 : vector<1x1xf32>
    %cst_52 = arith.constant 1.000000e+00 : f32
    %99 = vector.broadcast %cst_52 : f32 to vector<1x1xf32>
    %100 = arith.mulf %99, %60 : vector<1x1xf32>
    %101 = arith.addf %98, %100 : vector<1x1xf32>
    %cst_53 = arith.constant 0.000000e+00 : f32
    %102 = vector.broadcast %cst_53 : f32 to vector<1x1xf32>
    %103 = tpu.concatenate %101, %60, %96, %102 in 1 : vector<1x1xf32>, vector<1x1xf32>, vector<1x1xf32>, vector<1x1xf32> -> vector<1x4xf32>
    %c0_54 = arith.constant 0 : index
    %c0_55 = arith.constant 0 : index
    %104 = vector.load %arg11[%c0_54, %c0_55] : memref<1x4xf32, #tpu.memory_space<vmem>>, vector<1x4xf32>
    tpu.vector_store %arg11[%c0_54, %c0_55], %103 {strides = array<i32>} : memref<1x4xf32, #tpu.memory_space<vmem>>, vector<1x4xf32>,
    return
  }
}

</mosaic_0001>

<llo_original>
// kernel: premodel_forward.5
$region0: #{premodel_forward.5}
  #allocation0 [shape = 'u32[]', space=smem, size = 0x4, offset = 0x4, fixed_abs, tag = 'smem constant byte address 0x4 - core index']
  #allocation1 [shape = 'u32[144,128]{1,0:T(1,128)}', space=vmem, size = 0x12000, scoped, tag = 'internal scratch']
  %s0 = inlined_call_operand.vmem [shape: f32[2,40,32], index: 0, kind: input, shape index: {}]
  %s1 = inlined_call_operand.vmem [shape: f32[40,16], index: 1, kind: input, shape index: {}]
  %s2 = inlined_call_operand.vmem [shape: f32[40,1], index: 2, kind: input, shape index: {}]
  %s3 = inlined_call_operand.vmem [shape: f32[32,32], index: 3, kind: input, shape index: {}]
  %s4 = inlined_call_operand.vmem [shape: f32[1,32], index: 4, kind: input, shape index: {}]
  %s5 = inlined_call_operand.vmem [shape: f32[40,40], index: 5, kind: input, shape index: {}]
  %s6 = inlined_call_operand.vmem [shape: f32[32,24], index: 6, kind: input, shape index: {}]
  %s7 = inlined_call_operand.vmem [shape: f32[1,24], index: 7, kind: input, shape index: {}]
  %s8 = inlined_call_operand.vmem [shape: f32[1,24], index: 8, kind: input, shape index: {}]
  %s9 = inlined_call_operand.vmem [shape: f32[24,32], index: 9, kind: input, shape index: {}]
  %s10 = inlined_call_operand.vmem [shape: f32[32,16], index: 10, kind: input, shape index: {}]
  %s11 = inlined_call_operand.vmem [shape: f32[1,4], index: 11, kind: output, shape index: {}]
  %s12 = sld [smem:[#allocation0]]
  $region54: #{premodel_forward.5} parent=0
    _
  %s14 = ssub.s32 1, %s12
  %s15 = scalar_select 0, %s14, %s12
  // Predicated region
  $region2: #{premodel_forward.5} parent=0 // pred_check
    _
  $region3: #{premodel_forward.5} parent=0 // pred_check_branch
    %17 = sbr.rel (0) target = $region5
  $region4: #{premodel_forward.5} parent=0 // pred_region
    _
  $region5: #{premodel_forward.5} parent=0 // pred_fallthru
    _
  // Predicated region
  $region6: #{premodel_forward.5} parent=0 // pred_check
    _
  $region7: #{premodel_forward.5} parent=0 // pred_check_branch
    %19 = sbr.rel (0) target = $region9
  $region8: #{premodel_forward.5} parent=0 // pred_region
    _
  $region9: #{premodel_forward.5} parent=0 // pred_fallthru
    _
  // Predicated region
  $region10: #{premodel_forward.5} parent=0 // pred_check
    _
  $region11: #{premodel_forward.5} parent=0 // pred_check_branch
    %21 = sbr.rel (0) target = $region13
  $region12: #{premodel_forward.5} parent=0 // pred_region
    _
  $region13: #{premodel_forward.5} parent=0 // pred_fallthru
    _
  // Predicated region
  $region14: #{premodel_forward.5} parent=0 // pred_check
    _
  $region15: #{premodel_forward.5} parent=0 // pred_check_branch
    %23 = sbr.rel (0) target = $region17
  $region16: #{premodel_forward.5} parent=0 // pred_region
    _
  $region17: #{premodel_forward.5} parent=0 // pred_fallthru
    _
  // Predicated region
  $region18: #{premodel_forward.5} parent=0 // pred_check
    _
  $region19: #{premodel_forward.5} parent=0 // pred_check_branch
    %25 = sbr.rel (0) target = $region21
  $region20: #{premodel_forward.5} parent=0 // pred_region
    _
  $region21: #{premodel_forward.5} parent=0 // pred_fallthru
    _
  // Predicated region
  $region22: #{premodel_forward.5} parent=0 // pred_check
    _
  $region23: #{premodel_forward.5} parent=0 // pred_check_branch
    %27 = sbr.rel (0) target = $region25
  $region24: #{premodel_forward.5} parent=0 // pred_region
    _
  $region25: #{premodel_forward.5} parent=0 // pred_fallthru
    _
  // Predicated region
  $region26: #{premodel_forward.5} parent=0 // pred_check
    _
  $region27: #{premodel_forward.5} parent=0 // pred_check_branch
    %29 = sbr.rel (0) target = $region29
  $region28: #{premodel_forward.5} parent=0 // pred_region
    _
  $region29: #{premodel_forward.5} parent=0 // pred_fallthru
    _
  // Predicated region
  $region30: #{premodel_forward.5} parent=0 // pred_check
    _
  $region31: #{premodel_forward.5} parent=0 // pred_check_branch
    %31 = sbr.rel (0) target = $region33
  $region32: #{premodel_forward.5} parent=0 // pred_region
    _
  $region33: #{premodel_forward.5} parent=0 // pred_fallthru
    _
  // Predicated region
  $region34: #{premodel_forward.5} parent=0 // pred_check
    _
  $region35: #{premodel_forward.5} parent=0 // pred_check_branch
    %33 = sbr.rel (0) target = $region37
  $region36: #{premodel_forward.5} parent=0 // pred_region
    _
  $region37: #{premodel_forward.5} parent=0 // pred_fallthru
    _
  // Predicated region
  $region38: #{premodel_forward.5} parent=0 // pred_check
    _
  $region39: #{premodel_forward.5} parent=0 // pred_check_branch
    %35 = sbr.rel (0) target = $region41
  $region40: #{premodel_forward.5} parent=0 // pred_region
    _
  $region41: #{premodel_forward.5} parent=0 // pred_fallthru
    _
  // Predicated region
  $region42: #{premodel_forward.5} parent=0 // pred_check
    _
  $region43: #{premodel_forward.5} parent=0 // pred_check_branch
    %37 = sbr.rel (0) target = $region45
  $region44: #{premodel_forward.5} parent=0 // pred_region
    _
  $region45: #{premodel_forward.5} parent=0 // pred_fallthru
    _
  %v38 = vld [vmem:[%s0] sm:$0xff]
  %v39 = vld [vmem:[%s0 + $0x8] sm:$0xff]
  %v40 = vld [vmem:[%s0 + $0x10] sm:$0xff]
  %v41 = vld [vmem:[%s0 + $0x18] sm:$0xff]
  %v42 = vld [vmem:[%s0 + $0x20] sm:$0xff]
  %s43 = scalar_lea.vmem %s0, 40
  %v44 = vld [vmem:[%s43] sm:$0xff]
  %v45 = vld [vmem:[%s43 + $0x8] sm:$0xff]
  %v46 = vld [vmem:[%s43 + $0x10] sm:$0xff]
  %v47 = vld [vmem:[%s43 + $0x18] sm:$0xff]
  %v48 = vld [vmem:[%s43 + $0x20] sm:$0xff]
  %v49 = vld [vmem:[%s5] sm:$0xff]
  %v50 = vld [vmem:[%s5 + $0x8] sm:$0xff]
  %v51 = vld [vmem:[%s5 + $0x10] sm:$0xff]
  %v52 = vld [vmem:[%s5 + $0x18] sm:$0xff]
  %v53 = vld [vmem:[%s5 + $0x20] sm:$0xff]
  %v54 = vld [vmem:[%s2] sm:$0xff]
  %v55 = vld [vmem:[%s2 + $0x8] sm:$0xff]
  %v56 = vld [vmem:[%s2 + $0x10] sm:$0xff]
  %v57 = vld [vmem:[%s2 + $0x18] sm:$0xff]
  %v58 = vld [vmem:[%s2 + $0x20] sm:$0xff]
  %v59 = vsub.f32 1.0, %v54
  %v60 = vsub.f32 1.0, %v55
  %v61 = vsub.f32 1.0, %v56
  %v62 = vsub.f32 1.0, %v57
  %v63 = vsub.f32 1.0, %v58
  %v64 = vld [vmem:[%s3] sm:$0xff]
  %v65 = vld [vmem:[%s3 + $0x8] sm:$0xff]
  %v66 = vld [vmem:[%s3 + $0x10] sm:$0xff]
  %v67 = vld [vmem:[%s3 + $0x18] sm:$0xff]
  %vm68 = vcmask 261120
  %v70 = vsel %vm68, %v38, 0
  %v73 = vsel %vm68, %v39, 0
  %v76 = vsel %vm68, %v40, 0
  %v79 = vsel %vm68, %v41, 0
  %v82 = vsel %vm68, %v42, 0
  %84 = vmatprep.subr.mxu0 0.0
  %85 = vmatpush1.msra.mxu0 %v64
  %86 = vmatprep.subr.mxu0 0.0
  %87 = vmatpush1.msra.mxu0 %v65
  %88 = vmatprep.subr.mxu0 0.0
  %89 = vmatpush1.msra.mxu0 %v66
  %90 = vmatprep.subr.mxu0 0.0
  %91 = vmatpush1.msra.mxu0 %v67
  %92 = vmatprep.subr.mxu0 0.0
  %93 = vmatpush1.msra.mxu0 0.0
  %94 = vmatprep.subr.mxu0 0.0
  %95 = vmatpush1.msra.mxu0 0.0
  %96 = vmatprep.subr.mxu0 0.0
  %97 = vmatpush1.msra.mxu0 0.0
  %98 = vmatprep.subr.mxu0 0.0
  %99 = vmatpush1.msra.mxu0 0.0
  %100 = vmatprep.subr.mxu0 0.0
  %101 = vmatpush1.msra.mxu0 0.0
  %102 = vmatprep.subr.mxu0 0.0
  %103 = vmatpush1.msra.mxu0 0.0
  %104 = vmatprep.subr.mxu0 0.0
  %105 = vmatpush1.msra.mxu0 0.0
  %106 = vmatprep.subr.mxu0 0.0
  %107 = vmatpush1.msra.mxu0 0.0
  %108 = vmatprep.subr.mxu0 0.0
  %109 = vmatpush1.msra.mxu0 0.0
  %110 = vmatprep.subr.mxu0 0.0
  %111 = vmatpush1.msra.mxu0 0.0
  %112 = vmatprep.subr.mxu0 0.0
  %113 = vmatpush1.msra.mxu0 0.0
  %114 = vmatprep.subr.mxu0 0.0
  %115 = vmatpush1.msra.mxu0 0.0
  %116 = vmatprep.subr.mxu0 0.0
  %117 = vmatpush1.msra.mxu0 0.0
  %118 = vmatprep.subr.mxu0 0.0
  %119 = vmatpush1.msra.mxu0 0.0
  %120 = vmatprep.subr.mxu0 0.0
  %121 = vmatpush1.msra.mxu0 0.0
  %122 = vmatprep.subr.mxu0 0.0
  %123 = vmatpush1.msra.mxu0 0.0
  %124 = vmatprep.subr.mxu0 0.0
  %125 = vmatpush1.msra.mxu0 0.0
  %126 = vmatprep.subr.mxu0 0.0
  %127 = vmatpush1.msra.mxu0 0.0
  %128 = vmatprep.subr.mxu0 0.0
  %129 = vmatpush1.msra.mxu0 0.0
  %130 = vmatprep.subr.mxu0 0.0
  %131 = vmatpush1.msra.mxu0 0.0
  %132 = vmatprep.subr.mxu0 0.0
  %133 = vmatpush1.msra.mxu0 0.0
  %134 = vmatprep.subr.mxu0 0.0
  %135 = vmatpush1.msra.mxu0 0.0
  %136 = vmatprep.subr.mxu0 0.0
  %137 = vmatpush1.msra.mxu0 0.0
  %138 = vmatprep.subr.mxu0 0.0
  %139 = vmatpush1.msra.mxu0 0.0
  %140 = vmatprep.subr.mxu0 0.0
  %141 = vmatpush1.msra.mxu0 0.0
  %142 = vmatprep.subr.mxu0 0.0
  %143 = vmatpush1.msra.mxu0 0.0
  %144 = vmatprep.subr.mxu0 0.0
  %145 = vmatpush1.msra.mxu0 0.0
  %146 = vmatprep.subr.mxu0 0.0
  %147 = vmatpush1.msra.mxu0 0.0
  %148 = vmatprep.mubr.f32.mxu0 0.0
  %149 = vmatmul.mubr.f32.gmra.mrb[0].mxu0 %v70
  %v150 = vpop.f32.mrb[0].mxu0
  %v151 = vadd.f32 0.0, %v150
  %v152 = vpop.f32.mrb[0].mxu0
  %153 = vmatprep.mubr.f32.mxu0 0.0
  %154 = vmatmul.mubr.f32.gmra.mrb[0].mxu0 %v73
  %v155 = vpop.f32.mrb[0].mxu0
  %v156 = vadd.f32 0.0, %v155
  %v157 = vpop.f32.mrb[0].mxu0
  %158 = vmatprep.mubr.f32.mxu0 0.0
  %159 = vmatmul.mubr.f32.gmra.mrb[0].mxu0 %v76
  %v160 = vpop.f32.mrb[0].mxu0
  %v161 = vadd.f32 0.0, %v160
  %v162 = vpop.f32.mrb[0].mxu0
  %163 = vmatprep.mubr.f32.mxu0 0.0
  %164 = vmatmul.mubr.f32.gmra.mrb[0].mxu0 %v79
  %v165 = vpop.f32.mrb[0].mxu0
  %v166 = vadd.f32 0.0, %v165
  %v167 = vpop.f32.mrb[0].mxu0
  %168 = vmatprep.mubr.f32.mxu0 0.0
  %169 = vmatmul.mubr.f32.gmra.mrb[0].mxu0 %v82
  %v170 = vpop.f32.mrb[0].mxu0
  %v171 = vadd.f32 0.0, %v170
  %v172 = vpop.f32.mrb[0].mxu0
  %173 = vdwg.mxu0
  %vm174 = vcmp.gt.f32.partialorder %v54, 0.0
  %vm175 = vcmp.gt.f32.partialorder %v55, 0.0
  %vm176 = vcmp.gt.f32.partialorder %v56, 0.0
  %vm177 = vcmp.gt.f32.partialorder %v57, 0.0
  %vm178 = vcmp.gt.f32.partialorder %v58, 0.0
  %v179 = vld [vmem:[%s4] sm:$0x1]
  %v181 = vlaneseq
  %v182 = vshrl.u32 %v181, 7
  %v183 = vsub.s32 0, %v182
  %v184 = vrot.slane %v179, %v183
  %v186 = vsel %vm174, 1, 0
  %v187 = vsel %vm175, 1, 0
  %v188 = vsel %vm176, 1, 0
  %v189 = vsel %vm177, 1, 0
  %v190 = vsel %vm178, 1, 0
  %191 = vset.pattern.permute.xlu0 0
  %192 = vperm.xlu0 %191, %v186
  %v193 = vpop.permute.xlu0 %192
  %194 = vset.pattern.permute.xlu0 0
  %195 = vperm.xlu0 %194, %v187
  %v196 = vpop.permute.xlu0 %195
  %197 = vset.pattern.permute.xlu0 0
  %198 = vperm.xlu0 %197, %v188
  %v199 = vpop.permute.xlu0 %198
  %200 = vset.pattern.permute.xlu0 0
  %201 = vperm.xlu0 %200, %v189
  %v202 = vpop.permute.xlu0 %201
  %203 = vset.pattern.permute.xlu0 0
  %204 = vperm.xlu0 %203, %v190
  %v205 = vpop.permute.xlu0 %204
  %vm206 = vcmp.eq.s32.totalorder %v193, 1
  %vm207 = vcmp.eq.s32.totalorder %v196, 1
  %vm208 = vcmp.eq.s32.totalorder %v199, 1
  %vm209 = vcmp.eq.s32.totalorder %v202, 1
  %vm210 = vcmp.eq.s32.totalorder %v205, 1
  %v211 = vsel %vm206, %v184, %v151
  %v212 = vsel %vm207, %v184, %v156
  %v213 = vsel %vm208, %v184, %v161
  %v214 = vsel %vm209, %v184, %v166
  %v215 = vsel %vm210, %v184, %v171
  %v216 = vld [vmem:[%s6] sm:$0xff]
  %v217 = vld [vmem:[%s6 + $0x8] sm:$0xff]
  %v218 = vld [vmem:[%s6 + $0x10] sm:$0xff]
  %v219 = vld [vmem:[%s6 + $0x18] sm:$0xff]
  %v220 = vld [vmem:[%s7] sm:$0x1]
  %v221 = vld [vmem:[%s8] sm:$0x1]
  %v223 = vsel %vm68, %v211, 0
  %v226 = vsel %vm68, %v212, 0
  %v229 = vsel %vm68, %v213, 0
  %v232 = vsel %vm68, %v214, 0
  %v235 = vsel %vm68, %v215, 0
  %237 = vmatprep.subr.mxu0 0.0
  %238 = vmatpush1.msra.mxu0 %v216
  %239 = vmatprep.subr.mxu0 0.0
  %240 = vmatpush1.msra.mxu0 %v217
  %241 = vmatprep.subr.mxu0 0.0
  %242 = vmatpush1.msra.mxu0 %v218
  %243 = vmatprep.subr.mxu0 0.0
  %244 = vmatpush1.msra.mxu0 %v219
  %245 = vmatprep.subr.mxu0 0.0
  %246 = vmatpush1.msra.mxu0 0.0
  %247 = vmatprep.subr.mxu0 0.0
  %248 = vmatpush1.msra.mxu0 0.0
  %249 = vmatprep.subr.mxu0 0.0
  %250 = vmatpush1.msra.mxu0 0.0
  %251 = vmatprep.subr.mxu0 0.0
  %252 = vmatpush1.msra.mxu0 0.0
  %253 = vmatprep.subr.mxu0 0.0
  %254 = vmatpush1.msra.mxu0 0.0
  %255 = vmatprep.subr.mxu0 0.0
  %256 = vmatpush1.msra.mxu0 0.0
  %257 = vmatprep.subr.mxu0 0.0
  %258 = vmatpush1.msra.mxu0 0.0
  %259 = vmatprep.subr.mxu0 0.0
  %260 = vmatpush1.msra.mxu0 0.0
  %261 = vmatprep.subr.mxu0 0.0
  %262 = vmatpush1.msra.mxu0 0.0
  %263 = vmatprep.subr.mxu0 0.0
  %264 = vmatpush1.msra.mxu0 0.0
  %265 = vmatprep.subr.mxu0 0.0
  %266 = vmatpush1.msra.mxu0 0.0
  %267 = vmatprep.subr.mxu0 0.0
  %268 = vmatpush1.msra.mxu0 0.0
  %269 = vmatprep.subr.mxu0 0.0
  %270 = vmatpush1.msra.mxu0 0.0
  %271 = vmatprep.subr.mxu0 0.0
  %272 = vmatpush1.msra.mxu0 0.0
  %273 = vmatprep.subr.mxu0 0.0
  %274 = vmatpush1.msra.mxu0 0.0
  %275 = vmatprep.subr.mxu0 0.0
  %276 = vmatpush1.msra.mxu0 0.0
  %277 = vmatprep.subr.mxu0 0.0
  %278 = vmatpush1.msra.mxu0 0.0
  %279 = vmatprep.subr.mxu0 0.0
  %280 = vmatpush1.msra.mxu0 0.0
  %281 = vmatprep.subr.mxu0 0.0
  %282 = vmatpush1.msra.mxu0 0.0
  %283 = vmatprep.subr.mxu0 0.0
  %284 = vmatpush1.msra.mxu0 0.0
  %285 = vmatprep.subr.mxu0 0.0
  %286 = vmatpush1.msra.mxu0 0.0
  %287 = vmatprep.subr.mxu0 0.0
  %288 = vmatpush1.msra.mxu0 0.0
  %289 = vmatprep.subr.mxu0 0.0
  %290 = vmatpush1.msra.mxu0 0.0
  %291 = vmatprep.subr.mxu0 0.0
  %292 = vmatpush1.msra.mxu0 0.0
  %293 = vmatprep.subr.mxu0 0.0
  %294 = vmatpush1.msra.mxu0 0.0
  %295 = vmatprep.subr.mxu0 0.0
  %296 = vmatpush1.msra.mxu0 0.0
  %297 = vmatprep.subr.mxu0 0.0
  %298 = vmatpush1.msra.mxu0 0.0
  %299 = vmatprep.subr.mxu0 0.0
  %300 = vmatpush1.msra.mxu0 0.0
  %301 = vmatprep.mubr.f32.mxu0 0.0
  %302 = vmatmul.mubr.f32.gmra.mrb[0].mxu0 %v223
  %v303 = vpop.f32.mrb[0].mxu0
  %v304 = vadd.f32 0.0, %v303
  %v305 = vpop.f32.mrb[0].mxu0
  %306 = vmatprep.mubr.f32.mxu0 0.0
  %307 = vmatmul.mubr.f32.gmra.mrb[0].mxu0 %v226
  %v308 = vpop.f32.mrb[0].mxu0
  %v309 = vadd.f32 0.0, %v308
  %v310 = vpop.f32.mrb[0].mxu0
  %311 = vmatprep.mubr.f32.mxu0 0.0
  %312 = vmatmul.mubr.f32.gmra.mrb[0].mxu0 %v229
  %v313 = vpop.f32.mrb[0].mxu0
  %v314 = vadd.f32 0.0, %v313
  %v315 = vpop.f32.mrb[0].mxu0
  %316 = vmatprep.mubr.f32.mxu0 0.0
  %317 = vmatmul.mubr.f32.gmra.mrb[0].mxu0 %v232
  %v318 = vpop.f32.mrb[0].mxu0
  %v319 = vadd.f32 0.0, %v318
  %v320 = vpop.f32.mrb[0].mxu0
  %321 = vmatprep.mubr.f32.mxu0 0.0
  %322 = vmatmul.mubr.f32.gmra.mrb[0].mxu0 %v235
  %v323 = vpop.f32.mrb[0].mxu0
  %v324 = vadd.f32 0.0, %v323
  %v325 = vpop.f32.mrb[0].mxu0
  %326 = vdwg.mxu0
  %vm327 = vcmask 195584
  %v329 = vsel %vm327, %v220, 0
  %v332 = vsel %vm327, %v304, 0
  %v335 = vsel %vm327, %v309, 0
  %v338 = vsel %vm327, %v314, 0
  %v341 = vsel %vm327, %v319, 0
  %v344 = vsel %vm327, %v324, 0
  %346 = vmatprep.subr.mxu0 0.0
  %347 = vmatpush1.xpose.msra.mxu0 %v332
  %348 = vmatprep.subr.mxu0 0.0
  %349 = vmatpush1.xpose.msra.mxu0 %v335
  %350 = vmatprep.subr.mxu0 0.0
  %351 = vmatpush1.xpose.msra.mxu0 %v338
  %352 = vmatprep.subr.mxu0 0.0
  %353 = vmatpush1.xpose.msra.mxu0 %v341
  %354 = vmatprep.subr.mxu0 0.0
  %355 = vmatpush1.xpose.msra.mxu0 %v344
  %356 = vmatprep.subr.mxu0 0.0
  %357 = vmatpush1.xpose.msra.mxu0 0.0
  %358 = vmatprep.subr.mxu0 0.0
  %359 = vmatpush1.xpose.msra.mxu0 0.0
  %360 = vmatprep.subr.mxu0 0.0
  %361 = vmatpush1.xpose.msra.mxu0 0.0
  %362 = vmatprep.subr.mxu0 0.0
  %363 = vmatpush1.xpose.msra.mxu0 0.0
  %364 = vmatprep.subr.mxu0 0.0
  %365 = vmatpush1.xpose.msra.mxu0 0.0
  %366 = vmatprep.subr.mxu0 0.0
  %367 = vmatpush1.xpose.msra.mxu0 0.0
  %368 = vmatprep.subr.mxu0 0.0
  %369 = vmatpush1.xpose.msra.mxu0 0.0
  %370 = vmatprep.subr.mxu0 0.0
  %371 = vmatpush1.xpose.msra.mxu0 0.0
  %372 = vmatprep.subr.mxu0 0.0
  %373 = vmatpush1.xpose.msra.mxu0 0.0
  %374 = vmatprep.subr.mxu0 0.0
  %375 = vmatpush1.xpose.msra.mxu0 0.0
  %376 = vmatprep.subr.mxu0 0.0
  %377 = vmatpush1.xpose.msra.mxu0 0.0
  %378 = vmatprep.subr.mxu0 0.0
  %379 = vmatpush1.xpose.msra.mxu0 0.0
  %380 = vmatprep.subr.mxu0 0.0
  %381 = vmatpush1.xpose.msra.mxu0 0.0
  %382 = vmatprep.subr.mxu0 0.0
  %383 = vmatpush1.xpose.msra.mxu0 0.0
  %384 = vmatprep.subr.mxu0 0.0
  %385 = vmatpush1.xpose.msra.mxu0 0.0
  %386 = vmatprep.subr.mxu0 0.0
  %387 = vmatpush1.xpose.msra.mxu0 0.0
  %388 = vmatprep.subr.mxu0 0.0
  %389 = vmatpush1.xpose.msra.mxu0 0.0
  %390 = vmatprep.subr.mxu0 0.0
  %391 = vmatpush1.xpose.msra.mxu0 0.0
  %392 = vmatprep.subr.mxu0 0.0
  %393 = vmatpush1.xpose.msra.mxu0 0.0
  %394 = vmatprep.subr.mxu0 0.0
  %395 = vmatpush1.xpose.msra.mxu0 0.0
  %396 = vmatprep.subr.mxu0 0.0
  %397 = vmatpush1.xpose.msra.mxu0 0.0
  %398 = vmatprep.subr.mxu0 0.0
  %399 = vmatpush1.xpose.msra.mxu0 0.0
  %400 = vmatprep.subr.mxu0 0.0
  %401 = vmatpush1.xpose.msra.mxu0 0.0
  %402 = vmatprep.subr.mxu0 0.0
  %403 = vmatpush1.xpose.msra.mxu0 0.0
  %404 = vmatprep.subr.mxu0 0.0
  %405 = vmatpush1.xpose.msra.mxu0 0.0
  %406 = vmatprep.subr.mxu0 0.0
  %407 = vmatpush1.xpose.msra.mxu0 0.0
  %408 = vmatprep.subr.mxu0 0.0
  %409 = vmatpush1.xpose.msra.mxu0 0.0
  %410 = vmatprep.mubr.f32.mxu0 0.0
  %411 = vmatmul.mubr.f32.gmra.mrb[0].mxu0 %v329
  %v412 = vpop.f32.mrb[0].mxu0
  %v413 = vadd.f32 0.0, %v412
  %v414 = vpop.f32.mrb[0].mxu0
  %415 = vdwg.mxu0
  %v417 = vlaneseq
  %v418 = vshrl.u32 %v417, 7
  %v419 = vsub.s32 0, %v418
  %v420 = vrot.slane %v221, %v419
  %v422 = vmul.f32 %v304, %v420
  %v423 = vmul.f32 %v309, %v420
  %v424 = vmul.f32 %v314, %v420
  %v425 = vmul.f32 %v319, %v420
  %v426 = vmul.f32 %v324, %v420
  %v427 = vsel %vm327, %v422, 0.0
  %428 = vadd.xlane.f32.xlu0 %v427
  %v429 = vpop.xlane.xlu0 %428
  %v430 = vsel %vm327, %v423, 0.0
  %431 = vadd.xlane.f32.xlu0 %v430
  %v432 = vpop.xlane.xlu0 %431
  %v433 = vsel %vm327, %v424, 0.0
  %434 = vadd.xlane.f32.xlu0 %v433
  %v435 = vpop.xlane.xlu0 %434
  %v436 = vsel %vm327, %v425, 0.0
  %437 = vadd.xlane.f32.xlu0 %v436
  %v438 = vpop.xlane.xlu0 %437
  %v439 = vsel %vm327, %v426, 0.0
  %440 = vadd.xlane.f32.xlu0 %v439
  %v441 = vpop.xlane.xlu0 %440
  %v442 = vlaneseq
  %v443 = vshrl.u32 %v442, 7
  %v444 = vsub.s32 0, %v443
  %v445 = vrot.slane %v413, %v444
  %v446 = vadd.f32 %v429, %v445
  %v447 = vadd.f32 %v432, %v445
  %v448 = vadd.f32 %v435, %v445
  %v449 = vadd.f32 %v438, %v445
  %v450 = vadd.f32 %v441, %v445
  %vm451 = vcmp.gt.f32.partialorder %v446, 0.0
  %vm452 = vcmp.gt.f32.partialorder %v447, 0.0
  %vm453 = vcmp.gt.f32.partialorder %v448, 0.0
  %vm454 = vcmp.gt.f32.partialorder %v449, 0.0
  %vm455 = vcmp.gt.f32.partialorder %v450, 0.0
  %v456 = vmul.f32 %v446, 0.2
  %v457 = vmul.f32 %v447, 0.2
  %v458 = vmul.f32 %v448, 0.2
  %v459 = vmul.f32 %v449, 0.2
  %v460 = vmul.f32 %v450, 0.2
  %v461 = vsel %vm451, %v446, %v456
  %v462 = vsel %vm452, %v447, %v457
  %v463 = vsel %vm453, %v448, %v458
  %v464 = vsel %vm454, %v449, %v459
  %v465 = vsel %vm455, %v450, %v460
  %v466 = vadd.f32 %v461, %v49
  %v467 = vadd.f32 %v462, %v50
  %v468 = vadd.f32 %v463, %v51
  %v469 = vadd.f32 %v464, %v52
  %v470 = vadd.f32 %v465, %v53
  %vm471 = vcmask 326656
  %v472 = vsel %vm471, %v466, -inf
  %473 = vmax.xlane.f32.xlu0 %v472
  %v474 = vpop.xlane.xlu0 %473
  %v475 = vsel %vm471, %v467, -inf
  %476 = vmax.xlane.f32.xlu0 %v475
  %v477 = vpop.xlane.xlu0 %476
  %v478 = vsel %vm471, %v468, -inf
  %479 = vmax.xlane.f32.xlu0 %v478
  %v480 = vpop.xlane.xlu0 %479
  %v481 = vsel %vm471, %v469, -inf
  %482 = vmax.xlane.f32.xlu0 %v481
  %v483 = vpop.xlane.xlu0 %482
  %v484 = vsel %vm471, %v470, -inf
  %485 = vmax.xlane.f32.xlu0 %v484
  %v486 = vpop.xlane.xlu0 %485
  %v487 = vsub.f32 %v466, %v474
  %v488 = vsub.f32 %v467, %v477
  %v489 = vsub.f32 %v468, %v480
  %v490 = vsub.f32 %v469, %v483
  %v491 = vsub.f32 %v470, %v486
  %v492 = vmul.f32 %v487, 1.442695
  %v493 = vpow.pop %v492
  %v494 = vmul.f32 %v488, 1.442695
  %v495 = vpow.pop %v494
  %v496 = vmul.f32 %v489, 1.442695
  %v497 = vpow.pop %v496
  %v498 = vmul.f32 %v490, 1.442695
  %v499 = vpow.pop %v498
  %v500 = vmul.f32 %v491, 1.442695
  %v501 = vpow.pop %v500
  %v502 = vsel %vm471, %v493, 0.0
  %503 = vadd.xlane.f32.xlu0 %v502
  %v504 = vpop.xlane.xlu0 %503
  %v505 = vsel %vm471, %v495, 0.0
  %506 = vadd.xlane.f32.xlu0 %v505
  %v507 = vpop.xlane.xlu0 %506
  %v508 = vsel %vm471, %v497, 0.0
  %509 = vadd.xlane.f32.xlu0 %v508
  %v510 = vpop.xlane.xlu0 %509
  %v511 = vsel %vm471, %v499, 0.0
  %512 = vadd.xlane.f32.xlu0 %v511
  %v513 = vpop.xlane.xlu0 %512
  %v514 = vsel %vm471, %v501, 0.0
  %515 = vadd.xlane.f32.xlu0 %v514
  %v516 = vpop.xlane.xlu0 %515
  %v517 = vrcp.pop %v504
  %v518 = vrcp.pop %v507
  %v519 = vrcp.pop %v510
  %v520 = vrcp.pop %v513
  %v521 = vrcp.pop %v516
  %v522 = vmul.f32 %v493, %v517
  %v523 = vmul.f32 %v495, %v518
  %v524 = vmul.f32 %v497, %v519
  %v525 = vmul.f32 %v499, %v520
  %v526 = vmul.f32 %v501, %v521
  %v528 = vsel %vm471, %v522, 0
  %v531 = vsel %vm471, %v523, 0
  %v534 = vsel %vm471, %v524, 0
  %v537 = vsel %vm471, %v525, 0
  %v540 = vsel %vm471, %v526, 0
  %542 = vmatprep.subr.mxu0 0.0
  %543 = vmatpush1.msra.mxu0 %v304
  %544 = vmatprep.subr.mxu0 0.0
  %545 = vmatpush1.msra.mxu0 %v309
  %546 = vmatprep.subr.mxu0 0.0
  %547 = vmatpush1.msra.mxu0 %v314
  %548 = vmatprep.subr.mxu0 0.0
  %549 = vmatpush1.msra.mxu0 %v319
  %550 = vmatprep.subr.mxu0 0.0
  %551 = vmatpush1.msra.mxu0 %v324
  %552 = vmatprep.subr.mxu0 0.0
  %553 = vmatpush1.msra.mxu0 0.0
  %554 = vmatprep.subr.mxu0 0.0
  %555 = vmatpush1.msra.mxu0 0.0
  %556 = vmatprep.subr.mxu0 0.0
  %557 = vmatpush1.msra.mxu0 0.0
  %558 = vmatprep.subr.mxu0 0.0
  %559 = vmatpush1.msra.mxu0 0.0
  %560 = vmatprep.subr.mxu0 0.0
  %561 = vmatpush1.msra.mxu0 0.0
  %562 = vmatprep.subr.mxu0 0.0
  %563 = vmatpush1.msra.mxu0 0.0
  %564 = vmatprep.subr.mxu0 0.0
  %565 = vmatpush1.msra.mxu0 0.0
  %566 = vmatprep.subr.mxu0 0.0
  %567 = vmatpush1.msra.mxu0 0.0
  %568 = vmatprep.subr.mxu0 0.0
  %569 = vmatpush1.msra.mxu0 0.0
  %570 = vmatprep.subr.mxu0 0.0
  %571 = vmatpush1.msra.mxu0 0.0
  %572 = vmatprep.subr.mxu0 0.0
  %573 = vmatpush1.msra.mxu0 0.0
  %574 = vmatprep.subr.mxu0 0.0
  %575 = vmatpush1.msra.mxu0 0.0
  %576 = vmatprep.subr.mxu0 0.0
  %577 = vmatpush1.msra.mxu0 0.0
  %578 = vmatprep.subr.mxu0 0.0
  %579 = vmatpush1.msra.mxu0 0.0
  %580 = vmatprep.subr.mxu0 0.0
  %581 = vmatpush1.msra.mxu0 0.0
  %582 = vmatprep.subr.mxu0 0.0
  %583 = vmatpush1.msra.mxu0 0.0
  %584 = vmatprep.subr.mxu0 0.0
  %585 = vmatpush1.msra.mxu0 0.0
  %586 = vmatprep.subr.mxu0 0.0
  %587 = vmatpush1.msra.mxu0 0.0
  %588 = vmatprep.subr.mxu0 0.0
  %589 = vmatpush1.msra.mxu0 0.0
  %590 = vmatprep.subr.mxu0 0.0
  %591 = vmatpush1.msra.mxu0 0.0
  %592 = vmatprep.subr.mxu0 0.0
  %593 = vmatpush1.msra.mxu0 0.0
  %594 = vmatprep.subr.mxu0 0.0
  %595 = vmatpush1.msra.mxu0 0.0
  %596 = vmatprep.subr.mxu0 0.0
  %597 = vmatpush1.msra.mxu0 0.0
  %598 = vmatprep.subr.mxu0 0.0
  %599 = vmatpush1.msra.mxu0 0.0
  %600 = vmatprep.subr.mxu0 0.0
  %601 = vmatpush1.msra.mxu0 0.0
  %602 = vmatprep.subr.mxu0 0.0
  %603 = vmatpush1.msra.mxu0 0.0
  %604 = vmatprep.subr.mxu0 0.0
  %605 = vmatpush1.msra.mxu0 0.0
  %606 = vmatprep.mubr.f32.mxu0 0.0
  %607 = vmatmul.mubr.f32.gmra.mrb[0].mxu0 %v528
  %v608 = vpop.f32.mrb[0].mxu0
  %v609 = vadd.f32 0.0, %v608
  %v610 = vpop.f32.mrb[0].mxu0
  %611 = vmatprep.mubr.f32.mxu0 0.0
  %612 = vmatmul.mubr.f32.gmra.mrb[0].mxu0 %v531
  %v613 = vpop.f32.mrb[0].mxu0
  %v614 = vadd.f32 0.0, %v613
  %v615 = vpop.f32.mrb[0].mxu0
  %616 = vmatprep.mubr.f32.mxu0 0.0
  %617 = vmatmul.mubr.f32.gmra.mrb[0].mxu0 %v534
  %v618 = vpop.f32.mrb[0].mxu0
  %v619 = vadd.f32 0.0, %v618
  %v620 = vpop.f32.mrb[0].mxu0
  %621 = vmatprep.mubr.f32.mxu0 0.0
  %622 = vmatmul.mubr.f32.gmra.mrb[0].mxu0 %v537
  %v623 = vpop.f32.mrb[0].mxu0
  %v624 = vadd.f32 0.0, %v623
  %v625 = vpop.f32.mrb[0].mxu0
  %626 = vmatprep.mubr.f32.mxu0 0.0
  %627 = vmatmul.mubr.f32.gmra.mrb[0].mxu0 %v540
  %v628 = vpop.f32.mrb[0].mxu0
  %v629 = vadd.f32 0.0, %v628
  %v630 = vpop.f32.mrb[0].mxu0
  %631 = vdwg.mxu0
  %v632 = vmax.f32 %v609, 0.0
  %v633 = vmax.f32 %v614, 0.0
  %v634 = vmax.f32 %v619, 0.0
  %v635 = vmax.f32 %v624, 0.0
  %v636 = vmax.f32 %v629, 0.0
  %v637 = vld [vmem:[%s9] sm:$0xff]
  %v638 = vld [vmem:[%s9 + $0x8] sm:$0xff]
  %v639 = vld [vmem:[%s9 + $0x10] sm:$0xff]
  %v641 = vsel %vm327, %v632, 0
  %v644 = vsel %vm327, %v633, 0
  %v647 = vsel %vm327, %v634, 0
  %v650 = vsel %vm327, %v635, 0
  %v653 = vsel %vm327, %v636, 0
  %655 = vmatprep.subr.mxu0 0.0
  %656 = vmatpush1.msra.mxu0 %v637
  %657 = vmatprep.subr.mxu0 0.0
  %658 = vmatpush1.msra.mxu0 %v638
  %659 = vmatprep.subr.mxu0 0.0
  %660 = vmatpush1.msra.mxu0 %v639
  %661 = vmatprep.subr.mxu0 0.0
  %662 = vmatpush1.msra.mxu0 0.0
  %663 = vmatprep.subr.mxu0 0.0
  %664 = vmatpush1.msra.mxu0 0.0
  %665 = vmatprep.subr.mxu0 0.0
  %666 = vmatpush1.msra.mxu0 0.0
  %667 = vmatprep.subr.mxu0 0.0
  %668 = vmatpush1.msra.mxu0 0.0
  %669 = vmatprep.subr.mxu0 0.0
  %670 = vmatpush1.msra.mxu0 0.0
  %671 = vmatprep.subr.mxu0 0.0
  %672 = vmatpush1.msra.mxu0 0.0
  %673 = vmatprep.subr.mxu0 0.0
  %674 = vmatpush1.msra.mxu0 0.0
  %675 = vmatprep.subr.mxu0 0.0
  %676 = vmatpush1.msra.mxu0 0.0
  %677 = vmatprep.subr.mxu0 0.0
  %678 = vmatpush1.msra.mxu0 0.0
  %679 = vmatprep.subr.mxu0 0.0
  %680 = vmatpush1.msra.mxu0 0.0
  %681 = vmatprep.subr.mxu0 0.0
  %682 = vmatpush1.msra.mxu0 0.0
  %683 = vmatprep.subr.mxu0 0.0
  %684 = vmatpush1.msra.mxu0 0.0
  %685 = vmatprep.subr.mxu0 0.0
  %686 = vmatpush1.msra.mxu0 0.0
  %687 = vmatprep.subr.mxu0 0.0
  %688 = vmatpush1.msra.mxu0 0.0
  %689 = vmatprep.subr.mxu0 0.0
  %690 = vmatpush1.msra.mxu0 0.0
  %691 = vmatprep.subr.mxu0 0.0
  %692 = vmatpush1.msra.mxu0 0.0
  %693 = vmatprep.subr.mxu0 0.0
  %694 = vmatpush1.msra.mxu0 0.0
  %695 = vmatprep.subr.mxu0 0.0
  %696 = vmatpush1.msra.mxu0 0.0
  %697 = vmatprep.subr.mxu0 0.0
  %698 = vmatpush1.msra.mxu0 0.0
  %699 = vmatprep.subr.mxu0 0.0
  %700 = vmatpush1.msra.mxu0 0.0
  %701 = vmatprep.subr.mxu0 0.0
  %702 = vmatpush1.msra.mxu0 0.0
  %703 = vmatprep.subr.mxu0 0.0
  %704 = vmatpush1.msra.mxu0 0.0
  %705 = vmatprep.subr.mxu0 0.0
  %706 = vmatpush1.msra.mxu0 0.0
  %707 = vmatprep.subr.mxu0 0.0
  %708 = vmatpush1.msra.mxu0 0.0
  %709 = vmatprep.subr.mxu0 0.0
  %710 = vmatpush1.msra.mxu0 0.0
  %711 = vmatprep.subr.mxu0 0.0
  %712 = vmatpush1.msra.mxu0 0.0
  %713 = vmatprep.subr.mxu0 0.0
  %714 = vmatpush1.msra.mxu0 0.0
  %715 = vmatprep.subr.mxu0 0.0
  %716 = vmatpush1.msra.mxu0 0.0
  %717 = vmatprep.subr.mxu0 0.0
  %718 = vmatpush1.msra.mxu0 0.0
  %719 = vmatprep.mubr.f32.mxu0 0.0
  %720 = vmatmul.mubr.f32.gmra.mrb[0].mxu0 %v641
  %v721 = vpop.f32.mrb[0].mxu0
  %v722 = vadd.f32 0.0, %v721
  %v723 = vpop.f32.mrb[0].mxu0
  %724 = vmatprep.mubr.f32.mxu0 0.0
  %725 = vmatmul.mubr.f32.gmra.mrb[0].mxu0 %v644
  %v726 = vpop.f32.mrb[0].mxu0
  %v727 = vadd.f32 0.0, %v726
  %v728 = vpop.f32.mrb[0].mxu0
  %729 = vmatprep.mubr.f32.mxu0 0.0
  %730 = vmatmul.mubr.f32.gmra.mrb[0].mxu0 %v647
  %v731 = vpop.f32.mrb[0].mxu0
  %v732 = vadd.f32 0.0, %v731
  %v733 = vpop.f32.mrb[0].mxu0
  %734 = vmatprep.mubr.f32.mxu0 0.0
  %735 = vmatmul.mubr.f32.gmra.mrb[0].mxu0 %v650
  %v736 = vpop.f32.mrb[0].mxu0
  %v737 = vadd.f32 0.0, %v736
  %v738 = vpop.f32.mrb[0].mxu0
  %739 = vmatprep.mubr.f32.mxu0 0.0
  %740 = vmatmul.mubr.f32.gmra.mrb[0].mxu0 %v653
  %v741 = vpop.f32.mrb[0].mxu0
  %v742 = vadd.f32 0.0, %v741
  %v743 = vpop.f32.mrb[0].mxu0
  %744 = vdwg.mxu0
  %v745 = vsub.f32 %v722, %v44
  %v746 = vsub.f32 %v727, %v45
  %v747 = vsub.f32 %v732, %v46
  %v748 = vsub.f32 %v737, %v47
  %v749 = vsub.f32 %v742, %v48
  %751 = vset.pattern.permute.xlu0 0
  %752 = vperm.xlu0 %751, %v59
  %v753 = vpop.permute.xlu0 %752
  %756 = vset.pattern.permute.xlu0 0
  %757 = vperm.xlu0 %756, %v60
  %v758 = vpop.permute.xlu0 %757
  %761 = vset.pattern.permute.xlu0 0
  %762 = vperm.xlu0 %761, %v61
  %v763 = vpop.permute.xlu0 %762
  %766 = vset.pattern.permute.xlu0 0
  %767 = vperm.xlu0 %766, %v62
  %v768 = vpop.permute.xlu0 %767
  %771 = vset.pattern.permute.xlu0 0
  %772 = vperm.xlu0 %771, %v63
  %v773 = vpop.permute.xlu0 %772
  %v775 = vmul.f32 %v753, %v745
  %v776 = vmul.f32 %v758, %v746
  %v777 = vmul.f32 %v763, %v747
  %v778 = vmul.f32 %v768, %v748
  %v779 = vmul.f32 %v773, %v749
  %v780 = vmul.f32 %v775, %v745
  %v781 = vmul.f32 %v776, %v746
  %v782 = vmul.f32 %v777, %v747
  %v783 = vmul.f32 %v778, %v748
  %v784 = vmul.f32 %v779, %v749
  %v785 = vsel %vm68, %v780, 0.0
  %786 = vadd.xlane.f32.xlu0 %v785
  %v787 = vpop.xlane.xlu0 %786
  %v788 = vsel %vm68, %v781, 0.0
  %789 = vadd.xlane.f32.xlu0 %v788
  %v790 = vpop.xlane.xlu0 %789
  %v791 = vsel %vm68, %v782, 0.0
  %792 = vadd.xlane.f32.xlu0 %v791
  %v793 = vpop.xlane.xlu0 %792
  %v794 = vsel %vm68, %v783, 0.0
  %795 = vadd.xlane.f32.xlu0 %v794
  %v796 = vpop.xlane.xlu0 %795
  %v797 = vsel %vm68, %v784, 0.0
  %798 = vadd.xlane.f32.xlu0 %v797
  %v799 = vpop.xlane.xlu0 %798
  %v800 = vadd.f32 %v787, %v790
  %v801 = vadd.f32 %v800, %v793
  %v802 = vadd.f32 %v801, %v796
  %v803 = vadd.f32 %v802, %v799
  %v804 = vrot.slane %v803, 4
  %v805 = vadd.f32 %v803, %v804
  %v806 = vrot.slane %v805, 2
  %v807 = vadd.f32 %v805, %v806
  %v808 = vrot.slane %v807, 1
  %v809 = vadd.f32 %v807, %v808
  %v810 = vrcp.pop 896.0
  %v811 = vmul.f32 %v809, %v810
  %v812 = vld [vmem:[%s10] sm:$0xff]
  %v813 = vld [vmem:[%s10 + $0x8] sm:$0xff]
  %v814 = vld [vmem:[%s10 + $0x10] sm:$0xff]
  %v815 = vld [vmem:[%s10 + $0x18] sm:$0xff]
  %v817 = vsel %vm68, %v722, 0
  %v820 = vsel %vm68, %v727, 0
  %v823 = vsel %vm68, %v732, 0
  %v826 = vsel %vm68, %v737, 0
  %v829 = vsel %vm68, %v742, 0
  %831 = vmatprep.subr.mxu0 0.0
  %832 = vmatpush1.msra.mxu0 %v812
  %833 = vmatprep.subr.mxu0 0.0
  %834 = vmatpush1.msra.mxu0 %v813
  %835 = vmatprep.subr.mxu0 0.0
  %836 = vmatpush1.msra.mxu0 %v814
  %837 = vmatprep.subr.mxu0 0.0
  %838 = vmatpush1.msra.mxu0 %v815
  %839 = vmatprep.subr.mxu0 0.0
  %840 = vmatpush1.msra.mxu0 0.0
  %841 = vmatprep.subr.mxu0 0.0
  %842 = vmatpush1.msra.mxu0 0.0
  %843 = vmatprep.subr.mxu0 0.0
  %844 = vmatpush1.msra.mxu0 0.0
  %845 = vmatprep.subr.mxu0 0.0
  %846 = vmatpush1.msra.mxu0 0.0
  %847 = vmatprep.subr.mxu0 0.0
  %848 = vmatpush1.msra.mxu0 0.0
  %849 = vmatprep.subr.mxu0 0.0
  %850 = vmatpush1.msra.mxu0 0.0
  %851 = vmatprep.subr.mxu0 0.0
  %852 = vmatpush1.msra.mxu0 0.0
  %853 = vmatprep.subr.mxu0 0.0
  %854 = vmatpush1.msra.mxu0 0.0
  %855 = vmatprep.subr.mxu0 0.0
  %856 = vmatpush1.msra.mxu0 0.0
  %857 = vmatprep.subr.mxu0 0.0
  %858 = vmatpush1.msra.mxu0 0.0
  %859 = vmatprep.subr.mxu0 0.0
  %860 = vmatpush1.msra.mxu0 0.0
  %861 = vmatprep.subr.mxu0 0.0
  %862 = vmatpush1.msra.mxu0 0.0
  %863 = vmatprep.subr.mxu0 0.0
  %864 = vmatpush1.msra.mxu0 0.0
  %865 = vmatprep.subr.mxu0 0.0
  %866 = vmatpush1.msra.mxu0 0.0
  %867 = vmatprep.subr.mxu0 0.0
  %868 = vmatpush1.msra.mxu0 0.0
  %869 = vmatprep.subr.mxu0 0.0
  %870 = vmatpush1.msra.mxu0 0.0
  %871 = vmatprep.subr.mxu0 0.0
  %872 = vmatpush1.msra.mxu0 0.0
  %873 = vmatprep.subr.mxu0 0.0
  %874 = vmatpush1.msra.mxu0 0.0
  %875 = vmatprep.subr.mxu0 0.0
  %876 = vmatpush1.msra.mxu0 0.0
  %877 = vmatprep.subr.mxu0 0.0
  %878 = vmatpush1.msra.mxu0 0.0
  %879 = vmatprep.subr.mxu0 0.0
  %880 = vmatpush1.msra.mxu0 0.0
  %881 = vmatprep.subr.mxu0 0.0
  %882 = vmatpush1.msra.mxu0 0.0
  %883 = vmatprep.subr.mxu0 0.0
  %884 = vmatpush1.msra.mxu0 0.0
  %885 = vmatprep.subr.mxu0 0.0
  %886 = vmatpush1.msra.mxu0 0.0
  %887 = vmatprep.subr.mxu0 0.0
  %888 = vmatpush1.msra.mxu0 0.0
  %889 = vmatprep.subr.mxu0 0.0
  %890 = vmatpush1.msra.mxu0 0.0
  %891 = vmatprep.subr.mxu0 0.0
  %892 = vmatpush1.msra.mxu0 0.0
  %893 = vmatprep.subr.mxu0 0.0
  %894 = vmatpush1.msra.mxu0 0.0
  %895 = vmatprep.mubr.f32.mxu0 0.0
  %896 = vmatmul.mubr.f32.gmra.mrb[0].mxu0 %v817
  %v897 = vpop.f32.mrb[0].mxu0
  %v898 = vadd.f32 0.0, %v897
  %v899 = vpop.f32.mrb[0].mxu0
  %900 = vmatprep.mubr.f32.mxu0 0.0
  %901 = vmatmul.mubr.f32.gmra.mrb[0].mxu0 %v820
  %v902 = vpop.f32.mrb[0].mxu0
  %v903 = vadd.f32 0.0, %v902
  %v904 = vpop.f32.mrb[0].mxu0
  %905 = vmatprep.mubr.f32.mxu0 0.0
  %906 = vmatmul.mubr.f32.gmra.mrb[0].mxu0 %v823
  %v907 = vpop.f32.mrb[0].mxu0
  %v908 = vadd.f32 0.0, %v907
  %v909 = vpop.f32.mrb[0].mxu0
  %910 = vmatprep.mubr.f32.mxu0 0.0
  %911 = vmatmul.mubr.f32.gmra.mrb[0].mxu0 %v826
  %v912 = vpop.f32.mrb[0].mxu0
  %v913 = vadd.f32 0.0, %v912
  %v914 = vpop.f32.mrb[0].mxu0
  %915 = vmatprep.mubr.f32.mxu0 0.0
  %916 = vmatmul.mubr.f32.gmra.mrb[0].mxu0 %v829
  %v917 = vpop.f32.mrb[0].mxu0
  %v918 = vadd.f32 0.0, %v917
  %v919 = vpop.f32.mrb[0].mxu0
  %920 = vdwg.mxu0
  %v921 = vld [vmem:[%s1] sm:$0xff]
  %v922 = vld [vmem:[%s1 + $0x8] sm:$0xff]
  %v923 = vld [vmem:[%s1 + $0x10] sm:$0xff]
  %v924 = vld [vmem:[%s1 + $0x18] sm:$0xff]
  %v925 = vld [vmem:[%s1 + $0x20] sm:$0xff]
  %v926 = vmul.f32 %v898, %v898
  %v927 = vmul.f32 %v903, %v903
  %v928 = vmul.f32 %v908, %v908
  %v929 = vmul.f32 %v913, %v913
  %v930 = vmul.f32 %v918, %v918
  %vm931 = vcmask 130048
  %v932 = vsel %vm931, %v926, 0.0
  %933 = vadd.xlane.f32.xlu0 %v932
  %v934 = vpop.xlane.xlu0 %933
  %v935 = vsel %vm931, %v927, 0.0
  %936 = vadd.xlane.f32.xlu0 %v935
  %v937 = vpop.xlane.xlu0 %936
  %v938 = vsel %vm931, %v928, 0.0
  %939 = vadd.xlane.f32.xlu0 %v938
  %v940 = vpop.xlane.xlu0 %939
  %v941 = vsel %vm931, %v929, 0.0
  %942 = vadd.xlane.f32.xlu0 %v941
  %v943 = vpop.xlane.xlu0 %942
  %v944 = vsel %vm931, %v930, 0.0
  %945 = vadd.xlane.f32.xlu0 %v944
  %v946 = vpop.xlane.xlu0 %945
  %v947 = vmax.f32 %v934, 1e-12
  %v948 = vmax.f32 %v937, 1e-12
  %v949 = vmax.f32 %v940, 1e-12
  %v950 = vmax.f32 %v943, 1e-12
  %v951 = vmax.f32 %v946, 1e-12
  %v952 = vrsqrt.pop %v947
  %v953 = vrsqrt.pop %v948
  %v954 = vrsqrt.pop %v949
  %v955 = vrsqrt.pop %v950
  %v956 = vrsqrt.pop %v951
  %v957 = vmul.f32 %v898, %v952
  %v958 = vmul.f32 %v903, %v953
  %v959 = vmul.f32 %v908, %v954
  %v960 = vmul.f32 %v913, %v955
  %v961 = vmul.f32 %v918, %v956
  %v962 = vmul.f32 %v921, %v921
  %v963 = vmul.f32 %v922, %v922
  %v964 = vmul.f32 %v923, %v923
  %v965 = vmul.f32 %v924, %v924
  %v966 = vmul.f32 %v925, %v925
  %v967 = vsel %vm931, %v962, 0.0
  %968 = vadd.xlane.f32.xlu0 %v967
  %v969 = vpop.xlane.xlu0 %968
  %v970 = vsel %vm931, %v963, 0.0
  %971 = vadd.xlane.f32.xlu0 %v970
  %v972 = vpop.xlane.xlu0 %971
  %v973 = vsel %vm931, %v964, 0.0
  %974 = vadd.xlane.f32.xlu0 %v973
  %v975 = vpop.xlane.xlu0 %974
  %v976 = vsel %vm931, %v965, 0.0
  %977 = vadd.xlane.f32.xlu0 %v976
  %v978 = vpop.xlane.xlu0 %977
  %v979 = vsel %vm931, %v966, 0.0
  %980 = vadd.xlane.f32.xlu0 %v979
  %v981 = vpop.xlane.xlu0 %980
  %v982 = vmax.f32 %v969, 1e-12
  %v983 = vmax.f32 %v972, 1e-12
  %v984 = vmax.f32 %v975, 1e-12
  %v985 = vmax.f32 %v978, 1e-12
  %v986 = vmax.f32 %v981, 1e-12
  %v987 = vrsqrt.pop %v982
  %v988 = vrsqrt.pop %v983
  %v989 = vrsqrt.pop %v984
  %v990 = vrsqrt.pop %v985
  %v991 = vrsqrt.pop %v986
  %v992 = vmul.f32 %v921, %v987
  %v993 = vmul.f32 %v922, %v988
  %v994 = vmul.f32 %v923, %v989
  %v995 = vmul.f32 %v924, %v990
  %v996 = vmul.f32 %v925, %v991
  %v997 = vmul.f32 %v957, %v992
  %v998 = vmul.f32 %v958, %v993
  %v999 = vmul.f32 %v959, %v994
  %v1000 = vmul.f32 %v960, %v995
  %v1001 = vmul.f32 %v961, %v996
  %v1002 = vsel %vm931, %v997, 0.0
  %1003 = vadd.xlane.f32.xlu0 %v1002
  %v1004 = vpop.xlane.xlu0 %1003
  %v1005 = vsel %vm931, %v998, 0.0
  %1006 = vadd.xlane.f32.xlu0 %v1005
  %v1007 = vpop.xlane.xlu0 %1006
  %v1008 = vsel %vm931, %v999, 0.0
  %1009 = vadd.xlane.f32.xlu0 %v1008
  %v1010 = vpop.xlane.xlu0 %1009
  %v1011 = vsel %vm931, %v1000, 0.0
  %1012 = vadd.xlane.f32.xlu0 %v1011
  %v1013 = vpop.xlane.xlu0 %1012
  %v1014 = vsel %vm931, %v1001, 0.0
  %1015 = vadd.xlane.f32.xlu0 %v1014
  %v1016 = vpop.xlane.xlu0 %1015
  %v1017 = vadd.f32 %v1004, 1.0
  %v1018 = vadd.f32 %v1007, 1.0
  %v1019 = vadd.f32 %v1010, 1.0
  %v1020 = vadd.f32 %v1013, 1.0
  %v1021 = vadd.f32 %v1016, 1.0
  %v1022 = vmul.f32 %v1017, 0.5
  %v1023 = vmul.f32 %v1018, 0.5
  %v1024 = vmul.f32 %v1019, 0.5
  %v1025 = vmul.f32 %v1020, 0.5
  %v1026 = vmul.f32 %v1021, 0.5
  %v1027 = vmax.f32 %v1022, 1e-12
  %v1028 = vmax.f32 %v1023, 1e-12
  %v1029 = vmax.f32 %v1024, 1e-12
  %v1030 = vmax.f32 %v1025, 1e-12
  %v1031 = vmax.f32 %v1026, 1e-12
  %v1032 = vlog2.pop %v1027
  %v1033 = vmul.f32 %v1032, 0.6931472
  %v1034 = vlog2.pop %v1028
  %v1035 = vmul.f32 %v1034, 0.6931472
  %v1036 = vlog2.pop %v1029
  %v1037 = vmul.f32 %v1036, 0.6931472
  %v1038 = vlog2.pop %v1030
  %v1039 = vmul.f32 %v1038, 0.6931472
  %v1040 = vlog2.pop %v1031
  %v1041 = vmul.f32 %v1040, 0.6931472
  %v1042 = vmul.f32 %v1033, -1.0
  %v1043 = vmul.f32 %v1035, -1.0
  %v1044 = vmul.f32 %v1037, -1.0
  %v1045 = vmul.f32 %v1039, -1.0
  %v1046 = vmul.f32 %v1041, -1.0
  %v1047 = vmul.f32 %v54, %v1042
  %v1048 = vmul.f32 %v55, %v1043
  %v1049 = vmul.f32 %v56, %v1044
  %v1050 = vmul.f32 %v57, %v1045
  %v1051 = vmul.f32 %v58, %v1046
  %vm1052 = vcmask 7168
  %v1053 = vsel %vm1052, %v1047, 0.0
  %v1054 = vsel %vm1052, %v1048, 0.0
  %v1055 = vadd.f32 %v1053, %v1054
  %v1056 = vsel %vm1052, %v1049, 0.0
  %v1057 = vadd.f32 %v1055, %v1056
  %v1058 = vsel %vm1052, %v1050, 0.0
  %v1059 = vadd.f32 %v1057, %v1058
  %v1060 = vsel %vm1052, %v1051, 0.0
  %v1061 = vadd.f32 %v1059, %v1060
  %v1062 = vrot.slane %v1061, 4
  %v1063 = vadd.f32 %v1061, %v1062
  %v1064 = vrot.slane %v1063, 2
  %v1065 = vadd.f32 %v1063, %v1064
  %v1066 = vrot.slane %v1065, 1
  %v1067 = vadd.f32 %v1065, %v1066
  %v1068 = vrcp.pop 12.0
  %v1069 = vmul.f32 %v1067, %v1068
  %v1070 = vadd.f32 %v1069, %v811
  %1072 = vrot.lane.b32.xlu0 %v1069, 2
  %v1073 = vpop.permute.xlu0 %1072
  %v1075 = vsel %vm1052, %v1070, %v811
  %vm1076 = vcmask 15360
  %v1077 = vsel %vm1076, %v1075, %v1073
  %vm1078 = vcmask 23552
  %v1079 = vsel %vm1078, %v1077, 0.0
  %vm1080 = vcmask 24576
  %1081 = vst.msk [vmem:[%s11] sm:$0x1] %vm1080, %v1079
  // Predicated region
  $region46: #{premodel_forward.5} parent=0 // pred_check
    _
  $region47: #{premodel_forward.5} parent=0 // pred_check_branch
    %1083 = sbr.rel (0) target = $region49
  $region48: #{premodel_forward.5} parent=0 // pred_region
    _
  $region49: #{premodel_forward.5} parent=0 // pred_fallthru
    _
  // Predicated region
  $region50: #{premodel_forward.5} parent=0 // pred_check
    _
  $region51: #{premodel_forward.5} parent=0 // pred_check_branch
    %1085 = sbr.rel (0) target = $region53
  $region52: #{premodel_forward.5} parent=0 // pred_region
    _
  $region53: #{premodel_forward.5} parent=0 // pred_fallthru
    _

// kernel: premodel_forward.4
$region0: #{premodel_forward.4}
  #allocation0 [shape = 'u32[]', space=smem, size = 0x4, offset = 0x4, fixed_abs, tag = 'smem constant byte address 0x4 - core index']
  #allocation1 [shape = 'u32[144,128]{1,0:T(1,128)}', space=vmem, size = 0x12000, scoped, tag = 'internal scratch']
  %s0 = inlined_call_operand.vmem [shape: f32[2,40,16], index: 0, kind: input, shape index: {}]
  %s1 = inlined_call_operand.vmem [shape: f32[40,40], index: 1, kind: input, shape index: {}]
  %s2 = inlined_call_operand.vmem [shape: f32[2,16,32], index: 2, kind: input, shape index: {}]
  %s3 = inlined_call_operand.vmem [shape: f32[2,4,8], index: 3, kind: input, shape index: {}]
  %s4 = inlined_call_operand.vmem [shape: f32[2,4,8], index: 4, kind: input, shape index: {}]
  %s5 = inlined_call_operand.vmem [shape: f32[2,32,32], index: 5, kind: input, shape index: {}]
  %s6 = inlined_call_operand.vmem [shape: f32[2,4,8], index: 6, kind: input, shape index: {}]
  %s7 = inlined_call_operand.vmem [shape: f32[2,4,8], index: 7, kind: input, shape index: {}]
  %s8 = inlined_call_operand.vmem [shape: f32[2,40,32], index: 8, kind: output, shape index: {}]
  %s9 = sld [smem:[#allocation0]]
  $region65: #{premodel_forward.4} parent=0
    _
  %s11 = ssub.s32 1, %s9
  %s12 = scalar_select 0, %s11, %s9
  loop: start=0, step=1, limit=4
  $region2: #{premodel_forward.4} parent=0 // loop_pre_header
    _
  $region3: #{premodel_forward.4} parent=0 // loop_header
    %s14 = sphi 0, %s18
    %p15 = scmp.ge.s32.totalorder %s14, 4
    %s24 = sphi 0, %s26
    %s27 = sphi 0, %s24
    %s28 = sphi 0, %s27
    %s44 = sphi 0, %s28
    %s48 = sphi 0, %s48
    %s50 = sphi 0, %s48
    %s51 = sphi 0, %s50
    %s65 = sphi 0, %s51
    %s71 = sphi 0, %s73
    %s74 = sphi 0, %s71
    %s75 = sphi 0, %s74
    %s91 = sphi 0, %s75
    %s97 = sphi 0, %s99
    %s100 = sphi 0, %s97
    %s101 = sphi 0, %s100
    %s117 = sphi 0, %s101
    %s123 = sphi 0, %s125
    %s126 = sphi 0, %s123
    %s127 = sphi 0, %s126
    %s143 = sphi 0, %s127
    %s149 = sphi 0, %s151
    %s152 = sphi 0, %s149
    %s153 = sphi 0, %s152
    %s169 = sphi 0, %s153
    %s175 = sphi 0, %s177
    %s178 = sphi 0, %s175
    %s179 = sphi 0, %s178
    %s195 = sphi 0, %s179
    %s201 = sphi 0, %s203
    %s204 = sphi 0, %s201
    %s205 = sphi 0, %s204
    %s221 = sphi 0, %s205
    %s227 = sphi 0, %s229
    %s230 = sphi 0, %s227
    %s231 = sphi 0, %s230
    %s247 = sphi 0, %s231
  $region4: #{premodel_forward.4} parent=0 // loop_header_branch
    %17 = sbr.rel (%p15) target = $region8
  $region5: #{premodel_forward.4} parent=0 // loop_body
    %s19 = ssub.s32 %s14, 1
    %s20 = ssub.s32 %s14, 2
    %s21 = sadd.s32 %s14, 1
    %s22 = ssub.s32 %s14, %s21
    %p23 = scmp.eq.s32.totalorder %s22, 0
    %s25 = sadd.s32 %s24, 1
    %s26 = scalar_select %p23, %s24, %s25
    %p29 = pneg %p23
    %p30 = scmp.eq.s32.totalorder %s14, 1
    %p31 = por %p29, %p30
    %p32 = scmp.ne.s32.totalorder %s24, %s27
    %p33 = scmp.eq.s32.totalorder %s14, 0
    %p34 = por %p32, %p33
    %p35 = scmp.ne.s32.totalorder %s24, %s27
    %p36 = scmp.eq.s32.totalorder %s19, 1
    %p37 = por %p35, %p36
    %p38 = scmp.ne.s32.totalorder %s27, %s28
    %p39 = scmp.eq.s32.totalorder %s19, 0
    %p40 = por %p38, %p39
    %p41 = scmp.ne.s32.totalorder %s27, %s28
    %p42 = scmp.eq.s32.totalorder %s20, 1
    %p43 = por %p41, %p42
    %p45 = scmp.ne.s32.totalorder %s28, %s44
    %p46 = scmp.eq.s32.totalorder %s20, 0
    %p47 = por %p45, %p46
    %s49 = sadd.s32 %s48, 1
    %p52 = scmp.eq.s32.totalorder %s14, 1
    %p53 = scmp.ne.s32.totalorder %s48, %s50
    %p54 = scmp.eq.s32.totalorder %s14, 0
    %p55 = por %p53, %p54
    %p56 = scmp.ne.s32.totalorder %s48, %s50
    %p57 = scmp.eq.s32.totalorder %s19, 1
    %p58 = por %p56, %p57
    %p59 = scmp.ne.s32.totalorder %s50, %s51
    %p60 = scmp.eq.s32.totalorder %s19, 0
    %p61 = por %p59, %p60
    %p62 = scmp.ne.s32.totalorder %s50, %s51
    %p63 = scmp.eq.s32.totalorder %s20, 1
    %p64 = por %p62, %p63
    %p66 = scmp.ne.s32.totalorder %s51, %s65
    %p67 = scmp.eq.s32.totalorder %s20, 0
    %p68 = por %p66, %p67
    %s69 = ssub.s32 %s14, %s21
    %p70 = scmp.eq.s32.totalorder %s69, 0
    %s72 = sadd.s32 %s71, 1
    %s73 = scalar_select %p70, %s71, %s72
    %p76 = pneg %p70
    %p77 = scmp.eq.s32.totalorder %s14, 1
    %p78 = por %p76, %p77
    %p79 = scmp.ne.s32.totalorder %s71, %s74
    %p80 = scmp.eq.s32.totalorder %s14, 0
    %p81 = por %p79, %p80
    %p82 = scmp.ne.s32.totalorder %s71, %s74
    %p83 = scmp.eq.s32.totalorder %s19, 1
    %p84 = por %p82, %p83
    %p85 = scmp.ne.s32.totalorder %s74, %s75
    %p86 = scmp.eq.s32.totalorder %s19, 0
    %p87 = por %p85, %p86
    %p88 = scmp.ne.s32.totalorder %s74, %s75
    %p89 = scmp.eq.s32.totalorder %s20, 1
    %p90 = por %p88, %p89
    %p92 = scmp.ne.s32.totalorder %s75, %s91
    %p93 = scmp.eq.s32.totalorder %s20, 0
    %p94 = por %p92, %p93
    %s95 = ssub.s32 %s14, %s21
    %p96 = scmp.eq.s32.totalorder %s95, 0
    %s98 = sadd.s32 %s97, 1
    %s99 = scalar_select %p96, %s97, %s98
    %p102 = pneg %p96
    %p103 = scmp.eq.s32.totalorder %s14, 1
    %p104 = por %p102, %p103
    %p105 = scmp.ne.s32.totalorder %s97, %s100
    %p106 = scmp.eq.s32.totalorder %s14, 0
    %p107 = por %p105, %p106
    %p108 = scmp.ne.s32.totalorder %s97, %s100
    %p109 = scmp.eq.s32.totalorder %s19, 1
    %p110 = por %p108, %p109
    %p111 = scmp.ne.s32.totalorder %s100, %s101
    %p112 = scmp.eq.s32.totalorder %s19, 0
    %p113 = por %p111, %p112
    %p114 = scmp.ne.s32.totalorder %s100, %s101
    %p115 = scmp.eq.s32.totalorder %s20, 1
    %p116 = por %p114, %p115
    %p118 = scmp.ne.s32.totalorder %s101, %s117
    %p119 = scmp.eq.s32.totalorder %s20, 0
    %p120 = por %p118, %p119
    %s121 = ssub.s32 %s14, %s21
    %p122 = scmp.eq.s32.totalorder %s121, 0
    %s124 = sadd.s32 %s123, 1
    %s125 = scalar_select %p122, %s123, %s124
    %p128 = pneg %p122
    %p129 = scmp.eq.s32.totalorder %s14, 1
    %p130 = por %p128, %p129
    %p131 = scmp.ne.s32.totalorder %s123, %s126
    %p132 = scmp.eq.s32.totalorder %s14, 0
    %p133 = por %p131, %p132
    %p134 = scmp.ne.s32.totalorder %s123, %s126
    %p135 = scmp.eq.s32.totalorder %s19, 1
    %p136 = por %p134, %p135
    %p137 = scmp.ne.s32.totalorder %s126, %s127
    %p138 = scmp.eq.s32.totalorder %s19, 0
    %p139 = por %p137, %p138
    %p140 = scmp.ne.s32.totalorder %s126, %s127
    %p141 = scmp.eq.s32.totalorder %s20, 1
    %p142 = por %p140, %p141
    %p144 = scmp.ne.s32.totalorder %s127, %s143
    %p145 = scmp.eq.s32.totalorder %s20, 0
    %p146 = por %p144, %p145
    %s147 = ssub.s32 %s14, %s21
    %p148 = scmp.eq.s32.totalorder %s147, 0
    %s150 = sadd.s32 %s149, 1
    %s151 = scalar_select %p148, %s149, %s150
    %p154 = pneg %p148
    %p155 = scmp.eq.s32.totalorder %s14, 1
    %p156 = por %p154, %p155
    %p157 = scmp.ne.s32.totalorder %s149, %s152
    %p158 = scmp.eq.s32.totalorder %s14, 0
    %p159 = por %p157, %p158
    %p160 = scmp.ne.s32.totalorder %s149, %s152
    %p161 = scmp.eq.s32.totalorder %s19, 1
    %p162 = por %p160, %p161
    %p163 = scmp.ne.s32.totalorder %s152, %s153
    %p164 = scmp.eq.s32.totalorder %s19, 0
    %p165 = por %p163, %p164
    %p166 = scmp.ne.s32.totalorder %s152, %s153
    %p167 = scmp.eq.s32.totalorder %s20, 1
    %p168 = por %p166, %p167
    %p170 = scmp.ne.s32.totalorder %s153, %s169
    %p171 = scmp.eq.s32.totalorder %s20, 0
    %p172 = por %p170, %p171
    %s173 = ssub.s32 %s14, %s21
    %p174 = scmp.eq.s32.totalorder %s173, 0
    %s176 = sadd.s32 %s175, 1
    %s177 = scalar_select %p174, %s175, %s176
    %p180 = pneg %p174
    %p181 = scmp.eq.s32.totalorder %s14, 1
    %p182 = por %p180, %p181
    %p183 = scmp.ne.s32.totalorder %s175, %s178
    %p184 = scmp.eq.s32.totalorder %s14, 0
    %p185 = por %p183, %p184
    %p186 = scmp.ne.s32.totalorder %s175, %s178
    %p187 = scmp.eq.s32.totalorder %s19, 1
    %p188 = por %p186, %p187
    %p189 = scmp.ne.s32.totalorder %s178, %s179
    %p190 = scmp.eq.s32.totalorder %s19, 0
    %p191 = por %p189, %p190
    %p192 = scmp.ne.s32.totalorder %s178, %s179
    %p193 = scmp.eq.s32.totalorder %s20, 1
    %p194 = por %p192, %p193
    %p196 = scmp.ne.s32.totalorder %s179, %s195
    %p197 = scmp.eq.s32.totalorder %s20, 0
    %p198 = por %p196, %p197
    %s199 = ssub.s32 %s14, %s21
    %p200 = scmp.eq.s32.totalorder %s199, 0
    %s202 = sadd.s32 %s201, 1
    %s203 = scalar_select %p200, %s201, %s202
    %p206 = pneg %p200
    %p207 = scmp.eq.s32.totalorder %s14, 1
    %p208 = por %p206, %p207
    %p209 = scmp.ne.s32.totalorder %s201, %s204
    %p210 = scmp.eq.s32.totalorder %s14, 0
    %p211 = por %p209, %p210
    %p212 = scmp.ne.s32.totalorder %s201, %s204
    %p213 = scmp.eq.s32.totalorder %s19, 1
    %p214 = por %p212, %p213
    %p215 = scmp.ne.s32.totalorder %s204, %s205
    %p216 = scmp.eq.s32.totalorder %s19, 0
    %p217 = por %p215, %p216
    %p218 = scmp.ne.s32.totalorder %s204, %s205
    %p219 = scmp.eq.s32.totalorder %s20, 1
    %p220 = por %p218, %p219
    %p222 = scmp.ne.s32.totalorder %s205, %s221
    %p223 = scmp.eq.s32.totalorder %s20, 0
    %p224 = por %p222, %p223
    %s225 = ssub.s32 %s14, %s21
    %p226 = scmp.eq.s32.totalorder %s225, 0
    %s228 = sadd.s32 %s227, 1
    %s229 = scalar_select %p226, %s227, %s228
    %p232 = pneg %p226
    %p233 = scmp.eq.s32.totalorder %s14, 1
    %p234 = por %p232, %p233
    %p235 = scmp.ne.s32.totalorder %s227, %s230
    %p236 = scmp.eq.s32.totalorder %s14, 0
    %p237 = por %p235, %p236
    %p238 = scmp.ne.s32.totalorder %s227, %s230
    %p239 = scmp.eq.s32.totalorder %s19, 1
    %p240 = por %p238, %p239
    %p241 = scmp.ne.s32.totalorder %s230, %s231
    %p242 = scmp.eq.s32.totalorder %s19, 0
    %p243 = por %p241, %p242
    %p244 = scmp.ne.s32.totalorder %s230, %s231
    %p245 = scmp.eq.s32.totalorder %s20, 1
    %p246 = por %p244, %p245
    %p248 = scmp.ne.s32.totalorder %s231, %s247
    %p249 = scmp.eq.s32.totalorder %s20, 0
    %p250 = por %p248, %p249
    %p251 = scmp.le.s32.totalorder 1, %s14
    %p252 = scmp.lt.s32.totalorder %s14, 3
    %p253 = pnand %p251, %p252
    %p254 = pneg %p253
    // Predicated region
    $region9: #{premodel_forward.4} parent=5 // pred_check
      _
    $region10: #{premodel_forward.4} parent=5 // pred_check_branch
      %256 = sbr.rel (%p253) target = $region12
    $region11: #{premodel_forward.4} parent=5 // pred_region
      %s257 = ssub.s32 %s14, 1
      // Predicated region
      $region13: #{premodel_forward.4} parent=11 // pred_check
        %p258 = pneg %p61
      $region14: #{premodel_forward.4} parent=11 // pred_check_branch
        %260 = sbr.rel (%p258) target = $region16
      $region15: #{premodel_forward.4} parent=11 // pred_region
        _
      $region16: #{premodel_forward.4} parent=11 // pred_fallthru
        _
    $region12: #{premodel_forward.4} parent=5 // pred_fallthru
      _
    %p261 = scmp.lt.s32.totalorder %s14, 2
    // Predicated region
    $region17: #{premodel_forward.4} parent=5 // pred_check
      %p262 = pneg %p261
    $region18: #{premodel_forward.4} parent=5 // pred_check_branch
      %264 = sbr.rel (%p262) target = $region20
    $region19: #{premodel_forward.4} parent=5 // pred_region
      // Predicated region
      $region21: #{premodel_forward.4} parent=19 // pred_check
        %p265 = pneg %p34
      $region22: #{premodel_forward.4} parent=19 // pred_check_branch
        %267 = sbr.rel (%p265) target = $region24
      $region23: #{premodel_forward.4} parent=19 // pred_region
        %p268 = scmp.lt.s32.totalorder %s14, 1
        %s269 = scalar_select %p268, %s14, 1
        %s270 = smul.addr %s269, 5
        %s271 = smul.addr %s270, 8
        %s272 = scalar_lea.vmem %s0, %s271
      $region24: #{premodel_forward.4} parent=19 // pred_fallthru
        _
      // Predicated region
      $region25: #{premodel_forward.4} parent=19 // pred_check
        %p273 = pneg %p81
      $region26: #{premodel_forward.4} parent=19 // pred_check_branch
        %275 = sbr.rel (%p273) target = $region28
      $region27: #{premodel_forward.4} parent=19 // pred_region
        %p276 = scmp.lt.s32.totalorder %s14, 1
        %s277 = scalar_select %p276, %s14, 1
        %s278 = smul.addr %s277, 2
        %s279 = smul.addr %s278, 8
        %s280 = scalar_lea.vmem %s2, %s279
      $region28: #{premodel_forward.4} parent=19 // pred_fallthru
        _
      // Predicated region
      $region29: #{premodel_forward.4} parent=19 // pred_check
        %p281 = pneg %p107
      $region30: #{premodel_forward.4} parent=19 // pred_check_branch
        %283 = sbr.rel (%p281) target = $region32
      $region31: #{premodel_forward.4} parent=19 // pred_region
        %p284 = scmp.lt.s32.totalorder %s14, 1
        %s285 = scalar_select %p284, %s14, 1
        %s286 = smul.addr %s285, 4
        %s287 = scalar_lea.vmem %s3, %s286
      $region32: #{premodel_forward.4} parent=19 // pred_fallthru
        _
      // Predicated region
      $region33: #{premodel_forward.4} parent=19 // pred_check
        %p288 = pneg %p133
      $region34: #{premodel_forward.4} parent=19 // pred_check_branch
        %290 = sbr.rel (%p288) target = $region36
      $region35: #{premodel_forward.4} parent=19 // pred_region
        %p291 = scmp.lt.s32.totalorder %s14, 1
        %s292 = scalar_select %p291, %s14, 1
        %s293 = smul.addr %s292, 4
        %s294 = scalar_lea.vmem %s4, %s293
      $region36: #{premodel_forward.4} parent=19 // pred_fallthru
        _
      // Predicated region
      $region37: #{premodel_forward.4} parent=19 // pred_check
        %p295 = pneg %p159
      $region38: #{premodel_forward.4} parent=19 // pred_check_branch
        %297 = sbr.rel (%p295) target = $region40
      $region39: #{premodel_forward.4} parent=19 // pred_region
        %p298 = scmp.lt.s32.totalorder %s14, 1
        %s299 = scalar_select %p298, %s14, 1
        %s300 = smul.addr %s299, 4
        %s301 = smul.addr %s300, 8
        %s302 = scalar_lea.vmem %s5, %s301
      $region40: #{premodel_forward.4} parent=19 // pred_fallthru
        _
      // Predicated region
      $region41: #{premodel_forward.4} parent=19 // pred_check
        %p303 = pneg %p185
      $region42: #{premodel_forward.4} parent=19 // pred_check_branch
        %305 = sbr.rel (%p303) target = $region44
      $region43: #{premodel_forward.4} parent=19 // pred_region
        %p306 = scmp.lt.s32.totalorder %s14, 1
        %s307 = scalar_select %p306, %s14, 1
        %s308 = smul.addr %s307, 4
        %s309 = scalar_lea.vmem %s6, %s308
      $region44: #{premodel_forward.4} parent=19 // pred_fallthru
        _
      // Predicated region
      $region45: #{premodel_forward.4} parent=19 // pred_check
        %p310 = pneg %p211
      $region46: #{premodel_forward.4} parent=19 // pred_check_branch
        %312 = sbr.rel (%p310) target = $region48
      $region47: #{premodel_forward.4} parent=19 // pred_region
        %p313 = scmp.lt.s32.totalorder %s14, 1
        %s314 = scalar_select %p313, %s14, 1
        %s315 = smul.addr %s314, 4
        %s316 = scalar_lea.vmem %s7, %s315
      $region48: #{premodel_forward.4} parent=19 // pred_fallthru
        _
    $region20: #{premodel_forward.4} parent=5 // pred_fallthru
      _
    %p317 = scmp.le.s32.totalorder 1, %s14
    %p318 = scmp.lt.s32.totalorder %s14, 3
    %p319 = pnand %p317, %p318
    %p320 = pneg %p319
    // Predicated region
    $region49: #{premodel_forward.4} parent=5 // pred_check
      _
    $region50: #{premodel_forward.4} parent=5 // pred_check_branch
      %322 = sbr.rel (%p319) target = $region52
    $region51: #{premodel_forward.4} parent=5 // pred_region
      %s323 = ssub.s32 %s14, 1
      %p324 = scmp.lt.s32.totalorder %s19, 1
      %s325 = scalar_select %p324, %s19, 1
      %s326 = smul.addr %s325, 5
      %s327 = smul.addr %s326, 8
      %s328 = scalar_lea.vmem %s0, %s327
      %p329 = pneg %p40
      %p330 = pneg %p37
      %p331 = pneg %p61
      %p332 = pneg %p58
      %p333 = scmp.lt.s32.totalorder %s19, 1
      %s334 = scalar_select %p333, %s19, 1
      %s335 = smul.addr %s334, 2
      %s336 = smul.addr %s335, 8
      %s337 = scalar_lea.vmem %s2, %s336
      %p338 = pneg %p87
      %p339 = pneg %p84
      %p340 = scmp.lt.s32.totalorder %s19, 1
      %s341 = scalar_select %p340, %s19, 1
      %s342 = smul.addr %s341, 4
      %s343 = scalar_lea.vmem %s3, %s342
      %p344 = pneg %p113
      %p345 = pneg %p110
      %p346 = scmp.lt.s32.totalorder %s19, 1
      %s347 = scalar_select %p346, %s19, 1
      %s348 = smul.addr %s347, 4
      %s349 = scalar_lea.vmem %s4, %s348
      %p350 = pneg %p139
      %p351 = pneg %p136
      %p352 = scmp.lt.s32.totalorder %s19, 1
      %s353 = scalar_select %p352, %s19, 1
      %s354 = smul.addr %s353, 4
      %s355 = smul.addr %s354, 8
      %s356 = scalar_lea.vmem %s5, %s355
      %p357 = pneg %p165
      %p358 = pneg %p162
      %p359 = scmp.lt.s32.totalorder %s19, 1
      %s360 = scalar_select %p359, %s19, 1
      %s361 = smul.addr %s360, 4
      %s362 = scalar_lea.vmem %s6, %s361
      %p363 = pneg %p191
      %p364 = pneg %p188
      %p365 = scmp.lt.s32.totalorder %s19, 1
      %s366 = scalar_select %p365, %s19, 1
      %s367 = smul.addr %s366, 4
      %s368 = scalar_lea.vmem %s7, %s367
      %p369 = pneg %p217
      %p370 = pneg %p214
      %p371 = pneg %p243
      %p372 = pneg %p240
      %p373 = scmp.lt.s32.totalorder %s19, 1
      %s374 = scalar_select %p373, %s19, 1
      %s375 = smul.addr %s374, 5
      %s376 = smul.addr %s375, 8
      %s377 = scalar_lea.vmem %s8, %s376
      %p378 = scmp.lt.s32.totalorder %s19, 1
      %s379 = scalar_select %p378, %s19, 1
      %s380 = smul.addr %s379, 5
      %s381 = smul.addr %s380, 8
      %s382 = scalar_lea.vmem %s0, %s381
      %p383 = scmp.lt.s32.totalorder %s19, 1
      %s384 = scalar_select %p383, %s19, 1
      %s385 = smul.addr %s384, 2
      %s386 = smul.addr %s385, 8
      %s387 = scalar_lea.vmem %s2, %s386
      %p388 = scmp.lt.s32.totalorder %s19, 1
      %s389 = scalar_select %p388, %s19, 1
      %s390 = smul.addr %s389, 4
      %s391 = scalar_lea.vmem %s3, %s390
      %p392 = scmp.lt.s32.totalorder %s19, 1
      %s393 = scalar_select %p392, %s19, 1
      %s394 = smul.addr %s393, 4
      %s395 = scalar_lea.vmem %s4, %s394
      %p396 = scmp.lt.s32.totalorder %s19, 1
      %s397 = scalar_select %p396, %s19, 1
      %s398 = smul.addr %s397, 4
      %s399 = smul.addr %s398, 8
      %s400 = scalar_lea.vmem %s5, %s399
      %p401 = scmp.lt.s32.totalorder %s19, 1
      %s402 = scalar_select %p401, %s19, 1
      %s403 = smul.addr %s402, 4
      %s404 = scalar_lea.vmem %s6, %s403
      %p405 = scmp.lt.s32.totalorder %s19, 1
      %s406 = scalar_select %p405, %s19, 1
      %s407 = smul.addr %s406, 4
      %s408 = scalar_lea.vmem %s7, %s407
      %p409 = scmp.lt.s32.totalorder %s19, 1
      %s410 = scalar_select %p409, %s19, 1
      %s411 = smul.addr %s410, 5
      %s412 = smul.addr %s411, 8
      %s413 = scalar_lea.vmem %s8, %s412
      %v414 = vld [vmem:[%s1] sm:$0xff]
      %v415 = vld [vmem:[%s1 + $0x8] sm:$0xff]
      %v416 = vld [vmem:[%s1 + $0x10] sm:$0xff]
      %v417 = vld [vmem:[%s1 + $0x18] sm:$0xff]
      %v418 = vld [vmem:[%s1 + $0x20] sm:$0xff]
      %v419 = vld [vmem:[%s382] sm:$0xff]
      %v420 = vld [vmem:[%s382 + $0x8] sm:$0xff]
      %v421 = vld [vmem:[%s382 + $0x10] sm:$0xff]
      %v422 = vld [vmem:[%s382 + $0x18] sm:$0xff]
      %v423 = vld [vmem:[%s382 + $0x20] sm:$0xff]
      %v424 = vld [vmem:[%s387] sm:$0xff]
      %v425 = vld [vmem:[%s387 + $0x8] sm:$0xff]
      %v426 = vld [vmem:[%s391] sm:$0xf]
      %v427 = vld [vmem:[%s395] sm:$0xf]
      %vm428 = vcmask 130048
      %v430 = vsel %vm428, %v419, 0
      %v433 = vsel %vm428, %v420, 0
      %v436 = vsel %vm428, %v421, 0
      %v439 = vsel %vm428, %v422, 0
      %v442 = vsel %vm428, %v423, 0
      %444 = vmatprep.subr.mxu0 0.0
      %445 = vmatpush1.msra.mxu0 %v424
      %446 = vmatprep.subr.mxu0 0.0
      %447 = vmatpush1.msra.mxu0 %v425
      %448 = vmatprep.subr.mxu0 0.0
      %449 = vmatpush1.msra.mxu0 0.0
      %450 = vmatprep.subr.mxu0 0.0
      %451 = vmatpush1.msra.mxu0 0.0
      %452 = vmatprep.subr.mxu0 0.0
      %453 = vmatpush1.msra.mxu0 0.0
      %454 = vmatprep.subr.mxu0 0.0
      %455 = vmatpush1.msra.mxu0 0.0
      %456 = vmatprep.subr.mxu0 0.0
      %457 = vmatpush1.msra.mxu0 0.0
      %458 = vmatprep.subr.mxu0 0.0
      %459 = vmatpush1.msra.mxu0 0.0
      %460 = vmatprep.subr.mxu0 0.0
      %461 = vmatpush1.msra.mxu0 0.0
      %462 = vmatprep.subr.mxu0 0.0
      %463 = vmatpush1.msra.mxu0 0.0
      %464 = vmatprep.subr.mxu0 0.0
      %465 = vmatpush1.msra.mxu0 0.0
      %466 = vmatprep.subr.mxu0 0.0
      %467 = vmatpush1.msra.mxu0 0.0
      %468 = vmatprep.subr.mxu0 0.0
      %469 = vmatpush1.msra.mxu0 0.0
      %470 = vmatprep.subr.mxu0 0.0
      %471 = vmatpush1.msra.mxu0 0.0
      %472 = vmatprep.subr.mxu0 0.0
      %473 = vmatpush1.msra.mxu0 0.0
      %474 = vmatprep.subr.mxu0 0.0
      %475 = vmatpush1.msra.mxu0 0.0
      %476 = vmatprep.subr.mxu0 0.0
      %477 = vmatpush1.msra.mxu0 0.0
      %478 = vmatprep.subr.mxu0 0.0
      %479 = vmatpush1.msra.mxu0 0.0
      %480 = vmatprep.subr.mxu0 0.0
      %481 = vmatpush1.msra.mxu0 0.0
      %482 = vmatprep.subr.mxu0 0.0
      %483 = vmatpush1.msra.mxu0 0.0
      %484 = vmatprep.subr.mxu0 0.0
      %485 = vmatpush1.msra.mxu0 0.0
      %486 = vmatprep.subr.mxu0 0.0
      %487 = vmatpush1.msra.mxu0 0.0
      %488 = vmatprep.subr.mxu0 0.0
      %489 = vmatpush1.msra.mxu0 0.0
      %490 = vmatprep.subr.mxu0 0.0
      %491 = vmatpush1.msra.mxu0 0.0
      %492 = vmatprep.subr.mxu0 0.0
      %493 = vmatpush1.msra.mxu0 0.0
      %494 = vmatprep.subr.mxu0 0.0
      %495 = vmatpush1.msra.mxu0 0.0
      %496 = vmatprep.subr.mxu0 0.0
      %497 = vmatpush1.msra.mxu0 0.0
      %498 = vmatprep.subr.mxu0 0.0
      %499 = vmatpush1.msra.mxu0 0.0
      %500 = vmatprep.subr.mxu0 0.0
      %501 = vmatpush1.msra.mxu0 0.0
      %502 = vmatprep.subr.mxu0 0.0
      %503 = vmatpush1.msra.mxu0 0.0
      %504 = vmatprep.subr.mxu0 0.0
      %505 = vmatpush1.msra.mxu0 0.0
      %506 = vmatprep.subr.mxu0 0.0
      %507 = vmatpush1.msra.mxu0 0.0
      %508 = vmatprep.mubr.f32.mxu0 0.0
      %509 = vmatmul.mubr.f32.gmra.mrb[0].mxu0 %v430
      %v510 = vpop.f32.mrb[0].mxu0
      %v511 = vadd.f32 0.0, %v510
      %v512 = vpop.f32.mrb[0].mxu0
      %513 = vmatprep.mubr.f32.mxu0 0.0
      %514 = vmatmul.mubr.f32.gmra.mrb[0].mxu0 %v433
      %v515 = vpop.f32.mrb[0].mxu0
      %v516 = vadd.f32 0.0, %v515
      %v517 = vpop.f32.mrb[0].mxu0
      %518 = vmatprep.mubr.f32.mxu0 0.0
      %519 = vmatmul.mubr.f32.gmra.mrb[0].mxu0 %v436
      %v520 = vpop.f32.mrb[0].mxu0
      %v521 = vadd.f32 0.0, %v520
      %v522 = vpop.f32.mrb[0].mxu0
      %523 = vmatprep.mubr.f32.mxu0 0.0
      %524 = vmatmul.mubr.f32.gmra.mrb[0].mxu0 %v439
      %v525 = vpop.f32.mrb[0].mxu0
      %v526 = vadd.f32 0.0, %v525
      %v527 = vpop.f32.mrb[0].mxu0
      %528 = vmatprep.mubr.f32.mxu0 0.0
      %529 = vmatmul.mubr.f32.gmra.mrb[0].mxu0 %v442
      %v530 = vpop.f32.mrb[0].mxu0
      %v531 = vadd.f32 0.0, %v530
      %v532 = vpop.f32.mrb[0].mxu0
      %533 = vdwg.mxu0
      %vm534 = vcmask 64512
      %v536 = vsel %vm534, %v426, 0
      %v539 = vsel %vm534, %v511, 0
      %v542 = vsel %vm534, %v516, 0
      %v545 = vsel %vm534, %v521, 0
      %v548 = vsel %vm534, %v526, 0
      %v551 = vsel %vm534, %v531, 0
      %553 = vmatprep.subr.mxu0 0.0
      %554 = vmatpush1.xpose.msra.mxu0 %v539
      %555 = vmatprep.subr.mxu0 0.0
      %556 = vmatpush1.xpose.msra.mxu0 %v542
      %557 = vmatprep.subr.mxu0 0.0
      %558 = vmatpush1.xpose.msra.mxu0 %v545
      %559 = vmatprep.subr.mxu0 0.0
      %560 = vmatpush1.xpose.msra.mxu0 %v548
      %561 = vmatprep.subr.mxu0 0.0
      %562 = vmatpush1.xpose.msra.mxu0 %v551
      %563 = vmatprep.subr.mxu0 0.0
      %564 = vmatpush1.xpose.msra.mxu0 0.0
      %565 = vmatprep.subr.mxu0 0.0
      %566 = vmatpush1.xpose.msra.mxu0 0.0
      %567 = vmatprep.subr.mxu0 0.0
      %568 = vmatpush1.xpose.msra.mxu0 0.0
      %569 = vmatprep.subr.mxu0 0.0
      %570 = vmatpush1.xpose.msra.mxu0 0.0
      %571 = vmatprep.subr.mxu0 0.0
      %572 = vmatpush1.xpose.msra.mxu0 0.0
      %573 = vmatprep.subr.mxu0 0.0
      %574 = vmatpush1.xpose.msra.mxu0 0.0
      %575 = vmatprep.subr.mxu0 0.0
      %576 = vmatpush1.xpose.msra.mxu0 0.0
      %577 = vmatprep.subr.mxu0 0.0
      %578 = vmatpush1.xpose.msra.mxu0 0.0
      %579 = vmatprep.subr.mxu0 0.0
      %580 = vmatpush1.xpose.msra.mxu0 0.0
      %581 = vmatprep.subr.mxu0 0.0
      %582 = vmatpush1.xpose.msra.mxu0 0.0
      %583 = vmatprep.subr.mxu0 0.0
      %584 = vmatpush1.xpose.msra.mxu0 0.0
      %585 = vmatprep.subr.mxu0 0.0
      %586 = vmatpush1.xpose.msra.mxu0 0.0
      %587 = vmatprep.subr.mxu0 0.0
      %588 = vmatpush1.xpose.msra.mxu0 0.0
      %589 = vmatprep.subr.mxu0 0.0
      %590 = vmatpush1.xpose.msra.mxu0 0.0
      %591 = vmatprep.subr.mxu0 0.0
      %592 = vmatpush1.xpose.msra.mxu0 0.0
      %593 = vmatprep.subr.mxu0 0.0
      %594 = vmatpush1.xpose.msra.mxu0 0.0
      %595 = vmatprep.subr.mxu0 0.0
      %596 = vmatpush1.xpose.msra.mxu0 0.0
      %597 = vmatprep.subr.mxu0 0.0
      %598 = vmatpush1.xpose.msra.mxu0 0.0
      %599 = vmatprep.subr.mxu0 0.0
      %600 = vmatpush1.xpose.msra.mxu0 0.0
      %601 = vmatprep.subr.mxu0 0.0
      %602 = vmatpush1.xpose.msra.mxu0 0.0
      %603 = vmatprep.subr.mxu0 0.0
      %604 = vmatpush1.xpose.msra.mxu0 0.0
      %605 = vmatprep.subr.mxu0 0.0
      %606 = vmatpush1.xpose.msra.mxu0 0.0
      %607 = vmatprep.subr.mxu0 0.0
      %608 = vmatpush1.xpose.msra.mxu0 0.0
      %609 = vmatprep.subr.mxu0 0.0
      %610 = vmatpush1.xpose.msra.mxu0 0.0
      %611 = vmatprep.subr.mxu0 0.0
      %612 = vmatpush1.xpose.msra.mxu0 0.0
      %613 = vmatprep.subr.mxu0 0.0
      %614 = vmatpush1.xpose.msra.mxu0 0.0
      %615 = vmatprep.subr.mxu0 0.0
      %616 = vmatpush1.xpose.msra.mxu0 0.0
      %617 = vmatprep.mubr.f32.mxu0 0.0
      %618 = vmatmul.mubr.f32.gmra.mrb[0].mxu0 %v536
      %v619 = vpop.f32.mrb[0].mxu0
      %v620 = vadd.f32 0.0, %v619
      %v621 = vpop.f32.mrb[0].mxu0
      %622 = vdwg.mxu0
      %v623 = vlaneseq
      %v624 = vshrl.u32 %v623, 7
      %v625 = vsub.s32 0, %v624
      %v626 = vrot.slane %v427, %v625
      %v627 = vmul.f32 %v511, %v626
      %v628 = vmul.f32 %v516, %v626
      %v629 = vmul.f32 %v521, %v626
      %v630 = vmul.f32 %v526, %v626
      %v631 = vmul.f32 %v531, %v626
      %v632 = vsel %vm534, %v627, 0.0
      %633 = vadd.xlane.f32.xlu0 %v632
      %v634 = vpop.xlane.xlu0 %633
      %v635 = vsel %vm534, %v628, 0.0
      %636 = vadd.xlane.f32.xlu0 %v635
      %v637 = vpop.xlane.xlu0 %636
      %v638 = vsel %vm534, %v629, 0.0
      %639 = vadd.xlane.f32.xlu0 %v638
      %v640 = vpop.xlane.xlu0 %639
      %v641 = vsel %vm534, %v630, 0.0
      %642 = vadd.xlane.f32.xlu0 %v641
      %v643 = vpop.xlane.xlu0 %642
      %v644 = vsel %vm534, %v631, 0.0
      %645 = vadd.xlane.f32.xlu0 %v644
      %v646 = vpop.xlane.xlu0 %645
      %v647 = vlaneseq
      %v648 = vshrl.u32 %v647, 7
      %v649 = vsub.s32 0, %v648
      %v650 = vrot.slane %v620, %v649
      %v651 = vadd.f32 %v634, %v650
      %v652 = vadd.f32 %v637, %v650
      %v653 = vadd.f32 %v640, %v650
      %v654 = vadd.f32 %v643, %v650
      %v655 = vadd.f32 %v646, %v650
      %vm656 = vcmp.gt.f32.partialorder %v651, 0.0
      %vm657 = vcmp.gt.f32.partialorder %v652, 0.0
      %vm658 = vcmp.gt.f32.partialorder %v653, 0.0
      %vm659 = vcmp.gt.f32.partialorder %v654, 0.0
      %vm660 = vcmp.gt.f32.partialorder %v655, 0.0
      %v661 = vmul.f32 %v651, 0.2
      %v662 = vmul.f32 %v652, 0.2
      %v663 = vmul.f32 %v653, 0.2
      %v664 = vmul.f32 %v654, 0.2
      %v665 = vmul.f32 %v655, 0.2
      %v666 = vsel %vm656, %v651, %v661
      %v667 = vsel %vm657, %v652, %v662
      %v668 = vsel %vm658, %v653, %v663
      %v669 = vsel %vm659, %v654, %v664
      %v670 = vsel %vm660, %v655, %v665
      %v671 = vadd.f32 %v666, %v414
      %v672 = vadd.f32 %v667, %v415
      %v673 = vadd.f32 %v668, %v416
      %v674 = vadd.f32 %v669, %v417
      %v675 = vadd.f32 %v670, %v418
      %vm676 = vcmask 326656
      %v677 = vsel %vm676, %v671, -inf
      %678 = vmax.xlane.f32.xlu0 %v677
      %v679 = vpop.xlane.xlu0 %678
      %v680 = vsel %vm676, %v672, -inf
      %681 = vmax.xlane.f32.xlu0 %v680
      %v682 = vpop.xlane.xlu0 %681
      %v683 = vsel %vm676, %v673, -inf
      %684 = vmax.xlane.f32.xlu0 %v683
      %v685 = vpop.xlane.xlu0 %684
      %v686 = vsel %vm676, %v674, -inf
      %687 = vmax.xlane.f32.xlu0 %v686
      %v688 = vpop.xlane.xlu0 %687
      %v689 = vsel %vm676, %v675, -inf
      %690 = vmax.xlane.f32.xlu0 %v689
      %v691 = vpop.xlane.xlu0 %690
      %v692 = vsub.f32 %v671, %v679
      %v693 = vsub.f32 %v672, %v682
      %v694 = vsub.f32 %v673, %v685
      %v695 = vsub.f32 %v674, %v688
      %v696 = vsub.f32 %v675, %v691
      %v697 = vmul.f32 %v692, 1.442695
      %v698 = vpow.pop %v697
      %v699 = vmul.f32 %v693, 1.442695
      %v700 = vpow.pop %v699
      %v701 = vmul.f32 %v694, 1.442695
      %v702 = vpow.pop %v701
      %v703 = vmul.f32 %v695, 1.442695
      %v704 = vpow.pop %v703
      %v705 = vmul.f32 %v696, 1.442695
      %v706 = vpow.pop %v705
      %v707 = vsel %vm676, %v698, 0.0
      %708 = vadd.xlane.f32.xlu0 %v707
      %v709 = vpop.xlane.xlu0 %708
      %v710 = vsel %vm676, %v700, 0.0
      %711 = vadd.xlane.f32.xlu0 %v710
      %v712 = vpop.xlane.xlu0 %711
      %v713 = vsel %vm676, %v702, 0.0
      %714 = vadd.xlane.f32.xlu0 %v713
      %v715 = vpop.xlane.xlu0 %714
      %v716 = vsel %vm676, %v704, 0.0
      %717 = vadd.xlane.f32.xlu0 %v716
      %v718 = vpop.xlane.xlu0 %717
      %v719 = vsel %vm676, %v706, 0.0
      %720 = vadd.xlane.f32.xlu0 %v719
      %v721 = vpop.xlane.xlu0 %720
      %v722 = vrcp.pop %v709
      %v723 = vrcp.pop %v712
      %v724 = vrcp.pop %v715
      %v725 = vrcp.pop %v718
      %v726 = vrcp.pop %v721
      %v727 = vmul.f32 %v698, %v722
      %v728 = vmul.f32 %v700, %v723
      %v729 = vmul.f32 %v702, %v724
      %v730 = vmul.f32 %v704, %v725
      %v731 = vmul.f32 %v706, %v726
      %v733 = vsel %vm676, %v727, 0
      %v736 = vsel %vm676, %v728, 0
      %v739 = vsel %vm676, %v729, 0
      %v742 = vsel %vm676, %v730, 0
      %v745 = vsel %vm676, %v731, 0
      %747 = vmatprep.subr.mxu0 0.0
      %748 = vmatpush1.msra.mxu0 %v511
      %749 = vmatprep.subr.mxu0 0.0
      %750 = vmatpush1.msra.mxu0 %v516
      %751 = vmatprep.subr.mxu0 0.0
      %752 = vmatpush1.msra.mxu0 %v521
      %753 = vmatprep.subr.mxu0 0.0
      %754 = vmatpush1.msra.mxu0 %v526
      %755 = vmatprep.subr.mxu0 0.0
      %756 = vmatpush1.msra.mxu0 %v531
      %757 = vmatprep.subr.mxu0 0.0
      %758 = vmatpush1.msra.mxu0 0.0
      %759 = vmatprep.subr.mxu0 0.0
      %760 = vmatpush1.msra.mxu0 0.0
      %761 = vmatprep.subr.mxu0 0.0
      %762 = vmatpush1.msra.mxu0 0.0
      %763 = vmatprep.subr.mxu0 0.0
      %764 = vmatpush1.msra.mxu0 0.0
      %765 = vmatprep.subr.mxu0 0.0
      %766 = vmatpush1.msra.mxu0 0.0
      %767 = vmatprep.subr.mxu0 0.0
      %768 = vmatpush1.msra.mxu0 0.0
      %769 = vmatprep.subr.mxu0 0.0
      %770 = vmatpush1.msra.mxu0 0.0
      %771 = vmatprep.subr.mxu0 0.0
      %772 = vmatpush1.msra.mxu0 0.0
      %773 = vmatprep.subr.mxu0 0.0
      %774 = vmatpush1.msra.mxu0 0.0
      %775 = vmatprep.subr.mxu0 0.0
      %776 = vmatpush1.msra.mxu0 0.0
      %777 = vmatprep.subr.mxu0 0.0
      %778 = vmatpush1.msra.mxu0 0.0
      %779 = vmatprep.subr.mxu0 0.0
      %780 = vmatpush1.msra.mxu0 0.0
      %781 = vmatprep.subr.mxu0 0.0
      %782 = vmatpush1.msra.mxu0 0.0
      %783 = vmatprep.subr.mxu0 0.0
      %784 = vmatpush1.msra.mxu0 0.0
      %785 = vmatprep.subr.mxu0 0.0
      %786 = vmatpush1.msra.mxu0 0.0
      %787 = vmatprep.subr.mxu0 0.0
      %788 = vmatpush1.msra.mxu0 0.0
      %789 = vmatprep.subr.mxu0 0.0
      %790 = vmatpush1.msra.mxu0 0.0
      %791 = vmatprep.subr.mxu0 0.0
      %792 = vmatpush1.msra.mxu0 0.0
      %793 = vmatprep.subr.mxu0 0.0
      %794 = vmatpush1.msra.mxu0 0.0
      %795 = vmatprep.subr.mxu0 0.0
      %796 = vmatpush1.msra.mxu0 0.0
      %797 = vmatprep.subr.mxu0 0.0
      %798 = vmatpush1.msra.mxu0 0.0
      %799 = vmatprep.subr.mxu0 0.0
      %800 = vmatpush1.msra.mxu0 0.0
      %801 = vmatprep.subr.mxu0 0.0
      %802 = vmatpush1.msra.mxu0 0.0
      %803 = vmatprep.subr.mxu0 0.0
      %804 = vmatpush1.msra.mxu0 0.0
      %805 = vmatprep.subr.mxu0 0.0
      %806 = vmatpush1.msra.mxu0 0.0
      %807 = vmatprep.subr.mxu0 0.0
      %808 = vmatpush1.msra.mxu0 0.0
      %809 = vmatprep.subr.mxu0 0.0
      %810 = vmatpush1.msra.mxu0 0.0
      %811 = vmatprep.mubr.f32.mxu0 0.0
      %812 = vmatmul.mubr.f32.gmra.mrb[0].mxu0 %v733
      %v813 = vpop.f32.mrb[0].mxu0
      %v814 = vadd.f32 0.0, %v813
      %v815 = vpop.f32.mrb[0].mxu0
      %816 = vmatprep.mubr.f32.mxu0 0.0
      %817 = vmatmul.mubr.f32.gmra.mrb[0].mxu0 %v736
      %v818 = vpop.f32.mrb[0].mxu0
      %v819 = vadd.f32 0.0, %v818
      %v820 = vpop.f32.mrb[0].mxu0
      %821 = vmatprep.mubr.f32.mxu0 0.0
      %822 = vmatmul.mubr.f32.gmra.mrb[0].mxu0 %v739
      %v823 = vpop.f32.mrb[0].mxu0
      %v824 = vadd.f32 0.0, %v823
      %v825 = vpop.f32.mrb[0].mxu0
      %826 = vmatprep.mubr.f32.mxu0 0.0
      %827 = vmatmul.mubr.f32.gmra.mrb[0].mxu0 %v742
      %v828 = vpop.f32.mrb[0].mxu0
      %v829 = vadd.f32 0.0, %v828
      %v830 = vpop.f32.mrb[0].mxu0
      %831 = vmatprep.mubr.f32.mxu0 0.0
      %832 = vmatmul.mubr.f32.gmra.mrb[0].mxu0 %v745
      %v833 = vpop.f32.mrb[0].mxu0
      %v834 = vadd.f32 0.0, %v833
      %v835 = vpop.f32.mrb[0].mxu0
      %836 = vdwg.mxu0
      %v837 = vrot.slane %v426, 1
      %838 = vrot.lane.b32.xlu0 %v511, 120
      %v839 = vpop.permute.xlu0 %838
      %840 = vrot.lane.b32.xlu0 %v516, 120
      %v841 = vpop.permute.xlu0 %840
      %842 = vrot.lane.b32.xlu0 %v521, 120
      %v843 = vpop.permute.xlu0 %842
      %844 = vrot.lane.b32.xlu0 %v526, 120
      %v845 = vpop.permute.xlu0 %844
      %846 = vrot.lane.b32.xlu0 %v531, 120
      %v847 = vpop.permute.xlu0 %846
      %v848 = vsel %vm534, %v837, 0
      %v850 = vsel %vm534, %v839, 0
      %v852 = vsel %vm534, %v841, 0
      %v854 = vsel %vm534, %v843, 0
      %v856 = vsel %vm534, %v845, 0
      %v858 = vsel %vm534, %v847, 0
      %860 = vmatprep.subr.mxu0 0.0
      %861 = vmatpush1.xpose.msra.mxu0 %v850
      %862 = vmatprep.subr.mxu0 0.0
      %863 = vmatpush1.xpose.msra.mxu0 %v852
      %864 = vmatprep.subr.mxu0 0.0
      %865 = vmatpush1.xpose.msra.mxu0 %v854
      %866 = vmatprep.subr.mxu0 0.0
      %867 = vmatpush1.xpose.msra.mxu0 %v856
      %868 = vmatprep.subr.mxu0 0.0
      %869 = vmatpush1.xpose.msra.mxu0 %v858
      %870 = vmatprep.subr.mxu0 0.0
      %871 = vmatpush1.xpose.msra.mxu0 0.0
      %872 = vmatprep.subr.mxu0 0.0
      %873 = vmatpush1.xpose.msra.mxu0 0.0
      %874 = vmatprep.subr.mxu0 0.0
      %875 = vmatpush1.xpose.msra.mxu0 0.0
      %876 = vmatprep.subr.mxu0 0.0
      %877 = vmatpush1.xpose.msra.mxu0 0.0
      %878 = vmatprep.subr.mxu0 0.0
      %879 = vmatpush1.xpose.msra.mxu0 0.0
      %880 = vmatprep.subr.mxu0 0.0
      %881 = vmatpush1.xpose.msra.mxu0 0.0
      %882 = vmatprep.subr.mxu0 0.0
      %883 = vmatpush1.xpose.msra.mxu0 0.0
      %884 = vmatprep.subr.mxu0 0.0
      %885 = vmatpush1.xpose.msra.mxu0 0.0
      %886 = vmatprep.subr.mxu0 0.0
      %887 = vmatpush1.xpose.msra.mxu0 0.0
      %888 = vmatprep.subr.mxu0 0.0
      %889 = vmatpush1.xpose.msra.mxu0 0.0
      %890 = vmatprep.subr.mxu0 0.0
      %891 = vmatpush1.xpose.msra.mxu0 0.0
      %892 = vmatprep.subr.mxu0 0.0
      %893 = vmatpush1.xpose.msra.mxu0 0.0
      %894 = vmatprep.subr.mxu0 0.0
      %895 = vmatpush1.xpose.msra.mxu0 0.0
      %896 = vmatprep.subr.mxu0 0.0
      %897 = vmatpush1.xpose.msra.mxu0 0.0
      %898 = vmatprep.subr.mxu0 0.0
      %899 = vmatpush1.xpose.msra.mxu0 0.0
      %900 = vmatprep.subr.mxu0 0.0
      %901 = vmatpush1.xpose.msra.mxu0 0.0
      %902 = vmatprep.subr.mxu0 0.0
      %903 = vmatpush1.xpose.msra.mxu0 0.0
      %904 = vmatprep.subr.mxu0 0.0
      %905 = vmatpush1.xpose.msra.mxu0 0.0
      %906 = vmatprep.subr.mxu0 0.0
      %907 = vmatpush1.xpose.msra.mxu0 0.0
      %908 = vmatprep.subr.mxu0 0.0
      %909 = vmatpush1.xpose.msra.mxu0 0.0
      %910 = vmatprep.subr.mxu0 0.0
      %911 = vmatpush1.xpose.msra.mxu0 0.0
      %912 = vmatprep.subr.mxu0 0.0
      %913 = vmatpush1.xpose.msra.mxu0 0.0
      %914 = vmatprep.subr.mxu0 0.0
      %915 = vmatpush1.xpose.msra.mxu0 0.0
      %916 = vmatprep.subr.mxu0 0.0
      %917 = vmatpush1.xpose.msra.mxu0 0.0
      %918 = vmatprep.subr.mxu0 0.0
      %919 = vmatpush1.xpose.msra.mxu0 0.0
      %920 = vmatprep.subr.mxu0 0.0
      %921 = vmatpush1.xpose.msra.mxu0 0.0
      %922 = vmatprep.subr.mxu0 0.0
      %923 = vmatpush1.xpose.msra.mxu0 0.0
      %924 = vmatprep.mubr.f32.mxu0 0.0
      %925 = vmatmul.mubr.f32.gmra.mrb[0].mxu0 %v848
      %v926 = vpop.f32.mrb[0].mxu0
      %v927 = vadd.f32 0.0, %v926
      %v928 = vpop.f32.mrb[0].mxu0
      %929 = vdwg.mxu0
      %v930 = vlaneseq
      %v931 = vshrl.u32 %v930, 7
      %v932 = vsub.s32 1, %v931
      %v933 = vrot.slane %v427, %v932
      %935 = vrot.lane.b32.xlu0 %v933, 8
      %v936 = vpop.permute.xlu0 %935
      %v938 = vmul.f32 %v511, %v936
      %v939 = vmul.f32 %v516, %v936
      %v940 = vmul.f32 %v521, %v936
      %v941 = vmul.f32 %v526, %v936
      %v942 = vmul.f32 %v531, %v936
      %948 = vrot.lane.b32.xlu0 %v938, 120
      %v949 = vpop.permute.xlu0 %948
      %950 = vrot.lane.b32.xlu0 %v939, 120
      %v951 = vpop.permute.xlu0 %950
      %952 = vrot.lane.b32.xlu0 %v940, 120
      %v953 = vpop.permute.xlu0 %952
      %954 = vrot.lane.b32.xlu0 %v941, 120
      %v955 = vpop.permute.xlu0 %954
      %956 = vrot.lane.b32.xlu0 %v942, 120
      %v957 = vpop.permute.xlu0 %956
      %v963 = vsel %vm534, %v949, 0.0
      %964 = vadd.xlane.f32.xlu0 %v963
      %v965 = vpop.xlane.xlu0 %964
      %v966 = vsel %vm534, %v951, 0.0
      %967 = vadd.xlane.f32.xlu0 %v966
      %v968 = vpop.xlane.xlu0 %967
      %v969 = vsel %vm534, %v953, 0.0
      %970 = vadd.xlane.f32.xlu0 %v969
      %v971 = vpop.xlane.xlu0 %970
      %v972 = vsel %vm534, %v955, 0.0
      %973 = vadd.xlane.f32.xlu0 %v972
      %v974 = vpop.xlane.xlu0 %973
      %v975 = vsel %vm534, %v957, 0.0
      %976 = vadd.xlane.f32.xlu0 %v975
      %v977 = vpop.xlane.xlu0 %976
      %v978 = vlaneseq
      %v979 = vshrl.u32 %v978, 7
      %v980 = vsub.s32 0, %v979
      %v981 = vrot.slane %v927, %v980
      %v982 = vadd.f32 %v965, %v981
      %v983 = vadd.f32 %v968, %v981
      %v984 = vadd.f32 %v971, %v981
      %v985 = vadd.f32 %v974, %v981
      %v986 = vadd.f32 %v977, %v981
      %vm987 = vcmp.gt.f32.partialorder %v982, 0.0
      %vm988 = vcmp.gt.f32.partialorder %v983, 0.0
      %vm989 = vcmp.gt.f32.partialorder %v984, 0.0
      %vm990 = vcmp.gt.f32.partialorder %v985, 0.0
      %vm991 = vcmp.gt.f32.partialorder %v986, 0.0
      %v992 = vmul.f32 %v982, 0.2
      %v993 = vmul.f32 %v983, 0.2
      %v994 = vmul.f32 %v984, 0.2
      %v995 = vmul.f32 %v985, 0.2
      %v996 = vmul.f32 %v986, 0.2
      %v997 = vsel %vm987, %v982, %v992
      %v998 = vsel %vm988, %v983, %v993
      %v999 = vsel %vm989, %v984, %v994
      %v1000 = vsel %vm990, %v985, %v995
      %v1001 = vsel %vm991, %v986, %v996
      %v1002 = vadd.f32 %v997, %v414
      %v1003 = vadd.f32 %v998, %v415
      %v1004 = vadd.f32 %v999, %v416
      %v1005 = vadd.f32 %v1000, %v417
      %v1006 = vadd.f32 %v1001, %v418
      %v1007 = vsel %vm676, %v1002, -inf
      %1008 = vmax.xlane.f32.xlu0 %v1007
      %v1009 = vpop.xlane.xlu0 %1008
      %v1010 = vsel %vm676, %v1003, -inf
      %1011 = vmax.xlane.f32.xlu0 %v1010
      %v1012 = vpop.xlane.xlu0 %1011
      %v1013 = vsel %vm676, %v1004, -inf
      %1014 = vmax.xlane.f32.xlu0 %v1013
      %v1015 = vpop.xlane.xlu0 %1014
      %v1016 = vsel %vm676, %v1005, -inf
      %1017 = vmax.xlane.f32.xlu0 %v1016
      %v1018 = vpop.xlane.xlu0 %1017
      %v1019 = vsel %vm676, %v1006, -inf
      %1020 = vmax.xlane.f32.xlu0 %v1019
      %v1021 = vpop.xlane.xlu0 %1020
      %v1022 = vsub.f32 %v1002, %v1009
      %v1023 = vsub.f32 %v1003, %v1012
      %v1024 = vsub.f32 %v1004, %v1015
      %v1025 = vsub.f32 %v1005, %v1018
      %v1026 = vsub.f32 %v1006, %v1021
      %v1027 = vmul.f32 %v1022, 1.442695
      %v1028 = vpow.pop %v1027
      %v1029 = vmul.f32 %v1023, 1.442695
      %v1030 = vpow.pop %v1029
      %v1031 = vmul.f32 %v1024, 1.442695
      %v1032 = vpow.pop %v1031
      %v1033 = vmul.f32 %v1025, 1.442695
      %v1034 = vpow.pop %v1033
      %v1035 = vmul.f32 %v1026, 1.442695
      %v1036 = vpow.pop %v1035
      %v1037 = vsel %vm676, %v1028, 0.0
      %1038 = vadd.xlane.f32.xlu0 %v1037
      %v1039 = vpop.xlane.xlu0 %1038
      %v1040 = vsel %vm676, %v1030, 0.0
      %1041 = vadd.xlane.f32.xlu0 %v1040
      %v1042 = vpop.xlane.xlu0 %1041
      %v1043 = vsel %vm676, %v1032, 0.0
      %1044 = vadd.xlane.f32.xlu0 %v1043
      %v1045 = vpop.xlane.xlu0 %1044
      %v1046 = vsel %vm676, %v1034, 0.0
      %1047 = vadd.xlane.f32.xlu0 %v1046
      %v1048 = vpop.xlane.xlu0 %1047
      %v1049 = vsel %vm676, %v1036, 0.0
      %1050 = vadd.xlane.f32.xlu0 %v1049
      %v1051 = vpop.xlane.xlu0 %1050
      %v1052 = vrcp.pop %v1039
      %v1053 = vrcp.pop %v1042
      %v1054 = vrcp.pop %v1045
      %v1055 = vrcp.pop %v1048
      %v1056 = vrcp.pop %v1051
      %v1057 = vmul.f32 %v1028, %v1052
      %v1058 = vmul.f32 %v1030, %v1053
      %v1059 = vmul.f32 %v1032, %v1054
      %v1060 = vmul.f32 %v1034, %v1055
      %v1061 = vmul.f32 %v1036, %v1056
      %v1068 = vsel %vm676, %v1057, 0
      %v1071 = vsel %vm676, %v1058, 0
      %v1074 = vsel %vm676, %v1059, 0
      %v1077 = vsel %vm676, %v1060, 0
      %v1080 = vsel %vm676, %v1061, 0
      %1082 = vmatprep.subr.mxu0 0.0
      %1083 = vmatpush1.msra.mxu0 %v839
      %1084 = vmatprep.subr.mxu0 0.0
      %1085 = vmatpush1.msra.mxu0 %v841
      %1086 = vmatprep.subr.mxu0 0.0
      %1087 = vmatpush1.msra.mxu0 %v843
      %1088 = vmatprep.subr.mxu0 0.0
      %1089 = vmatpush1.msra.mxu0 %v845
      %1090 = vmatprep.subr.mxu0 0.0
      %1091 = vmatpush1.msra.mxu0 %v847
      %1092 = vmatprep.subr.mxu0 0.0
      %1093 = vmatpush1.msra.mxu0 0.0
      %1094 = vmatprep.subr.mxu0 0.0
      %1095 = vmatpush1.msra.mxu0 0.0
      %1096 = vmatprep.subr.mxu0 0.0
      %1097 = vmatpush1.msra.mxu0 0.0
      %1098 = vmatprep.subr.mxu0 0.0
      %1099 = vmatpush1.msra.mxu0 0.0
      %1100 = vmatprep.subr.mxu0 0.0
      %1101 = vmatpush1.msra.mxu0 0.0
      %1102 = vmatprep.subr.mxu0 0.0
      %1103 = vmatpush1.msra.mxu0 0.0
      %1104 = vmatprep.subr.mxu0 0.0
      %1105 = vmatpush1.msra.mxu0 0.0
      %1106 = vmatprep.subr.mxu0 0.0
      %1107 = vmatpush1.msra.mxu0 0.0
      %1108 = vmatprep.subr.mxu0 0.0
      %1109 = vmatpush1.msra.mxu0 0.0
      %1110 = vmatprep.subr.mxu0 0.0
      %1111 = vmatpush1.msra.mxu0 0.0
      %1112 = vmatprep.subr.mxu0 0.0
      %1113 = vmatpush1.msra.mxu0 0.0
      %1114 = vmatprep.subr.mxu0 0.0
      %1115 = vmatpush1.msra.mxu0 0.0
      %1116 = vmatprep.subr.mxu0 0.0
      %1117 = vmatpush1.msra.mxu0 0.0
      %1118 = vmatprep.subr.mxu0 0.0
      %1119 = vmatpush1.msra.mxu0 0.0
      %1120 = vmatprep.subr.mxu0 0.0
      %1121 = vmatpush1.msra.mxu0 0.0
      %1122 = vmatprep.subr.mxu0 0.0
      %1123 = vmatpush1.msra.mxu0 0.0
      %1124 = vmatprep.subr.mxu0 0.0
      %1125 = vmatpush1.msra.mxu0 0.0
      %1126 = vmatprep.subr.mxu0 0.0
      %1127 = vmatpush1.msra.mxu0 0.0
      %1128 = vmatprep.subr.mxu0 0.0
      %1129 = vmatpush1.msra.mxu0 0.0
      %1130 = vmatprep.subr.mxu0 0.0
      %1131 = vmatpush1.msra.mxu0 0.0
      %1132 = vmatprep.subr.mxu0 0.0
      %1133 = vmatpush1.msra.mxu0 0.0
      %1134 = vmatprep.subr.mxu0 0.0
      %1135 = vmatpush1.msra.mxu0 0.0
      %1136 = vmatprep.subr.mxu0 0.0
      %1137 = vmatpush1.msra.mxu0 0.0
      %1138 = vmatprep.subr.mxu0 0.0
      %1139 = vmatpush1.msra.mxu0 0.0
      %1140 = vmatprep.subr.mxu0 0.0
      %1141 = vmatpush1.msra.mxu0 0.0
      %1142 = vmatprep.subr.mxu0 0.0
      %1143 = vmatpush1.msra.mxu0 0.0
      %1144 = vmatprep.subr.mxu0 0.0
      %1145 = vmatpush1.msra.mxu0 0.0
      %1146 = vmatprep.mubr.f32.mxu0 0.0
      %1147 = vmatmul.mubr.f32.gmra.mrb[0].mxu0 %v1068
      %v1148 = vpop.f32.mrb[0].mxu0
      %v1149 = vadd.f32 0.0, %v1148
      %v1150 = vpop.f32.mrb[0].mxu0
      %1151 = vmatprep.mubr.f32.mxu0 0.0
      %1152 = vmatmul.mubr.f32.gmra.mrb[0].mxu0 %v1071
      %v1153 = vpop.f32.mrb[0].mxu0
      %v1154 = vadd.f32 0.0, %v1153
      %v1155 = vpop.f32.mrb[0].mxu0
      %1156 = vmatprep.mubr.f32.mxu0 0.0
      %1157 = vmatmul.mubr.f32.gmra.mrb[0].mxu0 %v1074
      %v1158 = vpop.f32.mrb[0].mxu0
      %v1159 = vadd.f32 0.0, %v1158
      %v1160 = vpop.f32.mrb[0].mxu0
      %1161 = vmatprep.mubr.f32.mxu0 0.0
      %1162 = vmatmul.mubr.f32.gmra.mrb[0].mxu0 %v1077
      %v1163 = vpop.f32.mrb[0].mxu0
      %v1164 = vadd.f32 0.0, %v1163
      %v1165 = vpop.f32.mrb[0].mxu0
      %1166 = vmatprep.mubr.f32.mxu0 0.0
      %1167 = vmatmul.mubr.f32.gmra.mrb[0].mxu0 %v1080
      %v1168 = vpop.f32.mrb[0].mxu0
      %v1169 = vadd.f32 0.0, %v1168
      %v1170 = vpop.f32.mrb[0].mxu0
      %1171 = vdwg.mxu0
      %v1172 = vrot.slane %v426, 2
      %1173 = vrot.lane.b32.xlu0 %v511, 112
      %v1174 = vpop.permute.xlu0 %1173
      %1175 = vrot.lane.b32.xlu0 %v516, 112
      %v1176 = vpop.permute.xlu0 %1175
      %1177 = vrot.lane.b32.xlu0 %v521, 112
      %v1178 = vpop.permute.xlu0 %1177
      %1179 = vrot.lane.b32.xlu0 %v526, 112
      %v1180 = vpop.permute.xlu0 %1179
      %1181 = vrot.lane.b32.xlu0 %v531, 112
      %v1182 = vpop.permute.xlu0 %1181
      %v1183 = vsel %vm534, %v1172, 0
      %v1185 = vsel %vm534, %v1174, 0
      %v1187 = vsel %vm534, %v1176, 0
      %v1189 = vsel %vm534, %v1178, 0
      %v1191 = vsel %vm534, %v1180, 0
      %v1193 = vsel %vm534, %v1182, 0
      %1195 = vmatprep.subr.mxu0 0.0
      %1196 = vmatpush1.xpose.msra.mxu0 %v1185
      %1197 = vmatprep.subr.mxu0 0.0
      %1198 = vmatpush1.xpose.msra.mxu0 %v1187
      %1199 = vmatprep.subr.mxu0 0.0
      %1200 = vmatpush1.xpose.msra.mxu0 %v1189
      %1201 = vmatprep.subr.mxu0 0.0
      %1202 = vmatpush1.xpose.msra.mxu0 %v1191
      %1203 = vmatprep.subr.mxu0 0.0
      %1204 = vmatpush1.xpose.msra.mxu0 %v1193
      %1205 = vmatprep.subr.mxu0 0.0
      %1206 = vmatpush1.xpose.msra.mxu0 0.0
      %1207 = vmatprep.subr.mxu0 0.0
      %1208 = vmatpush1.xpose.msra.mxu0 0.0
      %1209 = vmatprep.subr.mxu0 0.0
      %1210 = vmatpush1.xpose.msra.mxu0 0.0
      %1211 = vmatprep.subr.mxu0 0.0
      %1212 = vmatpush1.xpose.msra.mxu0 0.0
      %1213 = vmatprep.subr.mxu0 0.0
      %1214 = vmatpush1.xpose.msra.mxu0 0.0
      %1215 = vmatprep.subr.mxu0 0.0
      %1216 = vmatpush1.xpose.msra.mxu0 0.0
      %1217 = vmatprep.subr.mxu0 0.0
      %1218 = vmatpush1.xpose.msra.mxu0 0.0
      %1219 = vmatprep.subr.mxu0 0.0
      %1220 = vmatpush1.xpose.msra.mxu0 0.0
      %1221 = vmatprep.subr.mxu0 0.0
      %1222 = vmatpush1.xpose.msra.mxu0 0.0
      %1223 = vmatprep.subr.mxu0 0.0
      %1224 = vmatpush1.xpose.msra.mxu0 0.0
      %1225 = vmatprep.subr.mxu0 0.0
      %1226 = vmatpush1.xpose.msra.mxu0 0.0
      %1227 = vmatprep.subr.mxu0 0.0
      %1228 = vmatpush1.xpose.msra.mxu0 0.0
      %1229 = vmatprep.subr.mxu0 0.0
      %1230 = vmatpush1.xpose.msra.mxu0 0.0
      %1231 = vmatprep.subr.mxu0 0.0
      %1232 = vmatpush1.xpose.msra.mxu0 0.0
      %1233 = vmatprep.subr.mxu0 0.0
      %1234 = vmatpush1.xpose.msra.mxu0 0.0
      %1235 = vmatprep.subr.mxu0 0.0
      %1236 = vmatpush1.xpose.msra.mxu0 0.0
      %1237 = vmatprep.subr.mxu0 0.0
      %1238 = vmatpush1.xpose.msra.mxu0 0.0
      %1239 = vmatprep.subr.mxu0 0.0
      %1240 = vmatpush1.xpose.msra.mxu0 0.0
      %1241 = vmatprep.subr.mxu0 0.0
      %1242 = vmatpush1.xpose.msra.mxu0 0.0
      %1243 = vmatprep.subr.mxu0 0.0
      %1244 = vmatpush1.xpose.msra.mxu0 0.0
      %1245 = vmatprep.subr.mxu0 0.0
      %1246 = vmatpush1.xpose.msra.mxu0 0.0
      %1247 = vmatprep.subr.mxu0 0.0
      %1248 = vmatpush1.xpose.msra.mxu0 0.0
      %1249 = vmatprep.subr.mxu0 0.0
      %1250 = vmatpush1.xpose.msra.mxu0 0.0
      %1251 = vmatprep.subr.mxu0 0.0
      %1252 = vmatpush1.xpose.msra.mxu0 0.0
      %1253 = vmatprep.subr.mxu0 0.0
      %1254 = vmatpush1.xpose.msra.mxu0 0.0
      %1255 = vmatprep.subr.mxu0 0.0
      %1256 = vmatpush1.xpose.msra.mxu0 0.0
      %1257 = vmatprep.subr.mxu0 0.0
      %1258 = vmatpush1.xpose.msra.mxu0 0.0
      %1259 = vmatprep.mubr.f32.mxu0 0.0
      %1260 = vmatmul.mubr.f32.gmra.mrb[0].mxu0 %v1183
      %v1261 = vpop.f32.mrb[0].mxu0
      %v1262 = vadd.f32 0.0, %v1261
      %v1263 = vpop.f32.mrb[0].mxu0
      %1264 = vdwg.mxu0
      %v1265 = vlaneseq
      %v1266 = vshrl.u32 %v1265, 7
      %v1267 = vsub.s32 2, %v1266
      %v1268 = vrot.slane %v427, %v1267
      %1270 = vrot.lane.b32.xlu0 %v1268, 16
      %v1271 = vpop.permute.xlu0 %1270
      %v1273 = vmul.f32 %v511, %v1271
      %v1274 = vmul.f32 %v516, %v1271
      %v1275 = vmul.f32 %v521, %v1271
      %v1276 = vmul.f32 %v526, %v1271
      %v1277 = vmul.f32 %v531, %v1271
      %1283 = vrot.lane.b32.xlu0 %v1273, 112
      %v1284 = vpop.permute.xlu0 %1283
      %1285 = vrot.lane.b32.xlu0 %v1274, 112
      %v1286 = vpop.permute.xlu0 %1285
      %1287 = vrot.lane.b32.xlu0 %v1275, 112
      %v1288 = vpop.permute.xlu0 %1287
      %1289 = vrot.lane.b32.xlu0 %v1276, 112
      %v1290 = vpop.permute.xlu0 %1289
      %1291 = vrot.lane.b32.xlu0 %v1277, 112
      %v1292 = vpop.permute.xlu0 %1291
      %v1298 = vsel %vm534, %v1284, 0.0
      %1299 = vadd.xlane.f32.xlu0 %v1298
      %v1300 = vpop.xlane.xlu0 %1299
      %v1301 = vsel %vm534, %v1286, 0.0
      %1302 = vadd.xlane.f32.xlu0 %v1301
      %v1303 = vpop.xlane.xlu0 %1302
      %v1304 = vsel %vm534, %v1288, 0.0
      %1305 = vadd.xlane.f32.xlu0 %v1304
      %v1306 = vpop.xlane.xlu0 %1305
      %v1307 = vsel %vm534, %v1290, 0.0
      %1308 = vadd.xlane.f32.xlu0 %v1307
      %v1309 = vpop.xlane.xlu0 %1308
      %v1310 = vsel %vm534, %v1292, 0.0
      %1311 = vadd.xlane.f32.xlu0 %v1310
      %v1312 = vpop.xlane.xlu0 %1311
      %v1313 = vlaneseq
      %v1314 = vshrl.u32 %v1313, 7
      %v1315 = vsub.s32 0, %v1314
      %v1316 = vrot.slane %v1262, %v1315
      %v1317 = vadd.f32 %v1300, %v1316
      %v1318 = vadd.f32 %v1303, %v1316
      %v1319 = vadd.f32 %v1306, %v1316
      %v1320 = vadd.f32 %v1309, %v1316
      %v1321 = vadd.f32 %v1312, %v1316
      %vm1322 = vcmp.gt.f32.partialorder %v1317, 0.0
      %vm1323 = vcmp.gt.f32.partialorder %v1318, 0.0
      %vm1324 = vcmp.gt.f32.partialorder %v1319, 0.0
      %vm1325 = vcmp.gt.f32.partialorder %v1320, 0.0
      %vm1326 = vcmp.gt.f32.partialorder %v1321, 0.0
      %v1327 = vmul.f32 %v1317, 0.2
      %v1328 = vmul.f32 %v1318, 0.2
      %v1329 = vmul.f32 %v1319, 0.2
      %v1330 = vmul.f32 %v1320, 0.2
      %v1331 = vmul.f32 %v1321, 0.2
      %v1332 = vsel %vm1322, %v1317, %v1327
      %v1333 = vsel %vm1323, %v1318, %v1328
      %v1334 = vsel %vm1324, %v1319, %v1329
      %v1335 = vsel %vm1325, %v1320, %v1330
      %v1336 = vsel %vm1326, %v1321, %v1331
      %v1337 = vadd.f32 %v1332, %v414
      %v1338 = vadd.f32 %v1333, %v415
      %v1339 = vadd.f32 %v1334, %v416
      %v1340 = vadd.f32 %v1335, %v417
      %v1341 = vadd.f32 %v1336, %v418
      %v1342 = vsel %vm676, %v1337, -inf
      %1343 = vmax.xlane.f32.xlu0 %v1342
      %v1344 = vpop.xlane.xlu0 %1343
      %v1345 = vsel %vm676, %v1338, -inf
      %1346 = vmax.xlane.f32.xlu0 %v1345
      %v1347 = vpop.xlane.xlu0 %1346
      %v1348 = vsel %vm676, %v1339, -inf
      %1349 = vmax.xlane.f32.xlu0 %v1348
      %v1350 = vpop.xlane.xlu0 %1349
      %v1351 = vsel %vm676, %v1340, -inf
      %1352 = vmax.xlane.f32.xlu0 %v1351
      %v1353 = vpop.xlane.xlu0 %1352
      %v1354 = vsel %vm676, %v1341, -inf
      %1355 = vmax.xlane.f32.xlu0 %v1354
      %v1356 = vpop.xlane.xlu0 %1355
      %v1357 = vsub.f32 %v1337, %v1344
      %v1358 = vsub.f32 %v1338, %v1347
      %v1359 = vsub.f32 %v1339, %v1350
      %v1360 = vsub.f32 %v1340, %v1353
      %v1361 = vsub.f32 %v1341, %v1356
      %v1362 = vmul.f32 %v1357, 1.442695
      %v1363 = vpow.pop %v1362
      %v1364 = vmul.f32 %v1358, 1.442695
      %v1365 = vpow.pop %v1364
      %v1366 = vmul.f32 %v1359, 1.442695
      %v1367 = vpow.pop %v1366
      %v1368 = vmul.f32 %v1360, 1.442695
      %v1369 = vpow.pop %v1368
      %v1370 = vmul.f32 %v1361, 1.442695
      %v1371 = vpow.pop %v1370
      %v1372 = vsel %vm676, %v1363, 0.0
      %1373 = vadd.xlane.f32.xlu0 %v1372
      %v1374 = vpop.xlane.xlu0 %1373
      %v1375 = vsel %vm676, %v1365, 0.0
      %1376 = vadd.xlane.f32.xlu0 %v1375
      %v1377 = vpop.xlane.xlu0 %1376
      %v1378 = vsel %vm676, %v1367, 0.0
      %1379 = vadd.xlane.f32.xlu0 %v1378
      %v1380 = vpop.xlane.xlu0 %1379
      %v1381 = vsel %vm676, %v1369, 0.0
      %1382 = vadd.xlane.f32.xlu0 %v1381
      %v1383 = vpop.xlane.xlu0 %1382
      %v1384 = vsel %vm676, %v1371, 0.0
      %1385 = vadd.xlane.f32.xlu0 %v1384
      %v1386 = vpop.xlane.xlu0 %1385
      %v1387 = vrcp.pop %v1374
      %v1388 = vrcp.pop %v1377
      %v1389 = vrcp.pop %v1380
      %v1390 = vrcp.pop %v1383
      %v1391 = vrcp.pop %v1386
      %v1392 = vmul.f32 %v1363, %v1387
      %v1393 = vmul.f32 %v1365, %v1388
      %v1394 = vmul.f32 %v1367, %v1389
      %v1395 = vmul.f32 %v1369, %v1390
      %v1396 = vmul.f32 %v1371, %v1391
      %v1403 = vsel %vm676, %v1392, 0
      %v1406 = vsel %vm676, %v1393, 0
      %v1409 = vsel %vm676, %v1394, 0
      %v1412 = vsel %vm676, %v1395, 0
      %v1415 = vsel %vm676, %v1396, 0
      %1417 = vmatprep.subr.mxu0 0.0
      %1418 = vmatpush1.msra.mxu0 %v1174
      %1419 = vmatprep.subr.mxu0 0.0
      %1420 = vmatpush1.msra.mxu0 %v1176
      %1421 = vmatprep.subr.mxu0 0.0
      %1422 = vmatpush1.msra.mxu0 %v1178
      %1423 = vmatprep.subr.mxu0 0.0
      %1424 = vmatpush1.msra.mxu0 %v1180
      %1425 = vmatprep.subr.mxu0 0.0
      %1426 = vmatpush1.msra.mxu0 %v1182
      %1427 = vmatprep.subr.mxu0 0.0
      %1428 = vmatpush1.msra.mxu0 0.0
      %1429 = vmatprep.subr.mxu0 0.0
      %1430 = vmatpush1.msra.mxu0 0.0
      %1431 = vmatprep.subr.mxu0 0.0
      %1432 = vmatpush1.msra.mxu0 0.0
      %1433 = vmatprep.subr.mxu0 0.0
      %1434 = vmatpush1.msra.mxu0 0.0
      %1435 = vmatprep.subr.mxu0 0.0
      %1436 = vmatpush1.msra.mxu0 0.0
      %1437 = vmatprep.subr.mxu0 0.0
      %1438 = vmatpush1.msra.mxu0 0.0
      %1439 = vmatprep.subr.mxu0 0.0
      %1440 = vmatpush1.msra.mxu0 0.0
      %1441 = vmatprep.subr.mxu0 0.0
      %1442 = vmatpush1.msra.mxu0 0.0
      %1443 = vmatprep.subr.mxu0 0.0
      %1444 = vmatpush1.msra.mxu0 0.0
      %1445 = vmatprep.subr.mxu0 0.0
      %1446 = vmatpush1.msra.mxu0 0.0
      %1447 = vmatprep.subr.mxu0 0.0
      %1448 = vmatpush1.msra.mxu0 0.0
      %1449 = vmatprep.subr.mxu0 0.0
      %1450 = vmatpush1.msra.mxu0 0.0
      %1451 = vmatprep.subr.mxu0 0.0
      %1452 = vmatpush1.msra.mxu0 0.0
      %1453 = vmatprep.subr.mxu0 0.0
      %1454 = vmatpush1.msra.mxu0 0.0
      %1455 = vmatprep.subr.mxu0 0.0
      %1456 = vmatpush1.msra.mxu0 0.0
      %1457 = vmatprep.subr.mxu0 0.0
      %1458 = vmatpush1.msra.mxu0 0.0
      %1459 = vmatprep.subr.mxu0 0.0
      %1460 = vmatpush1.msra.mxu0 0.0
      %1461 = vmatprep.subr.mxu0 0.0
      %1462 = vmatpush1.msra.mxu0 0.0
      %1463 = vmatprep.subr.mxu0 0.0
      %1464 = vmatpush1.msra.mxu0 0.0
      %1465 = vmatprep.subr.mxu0 0.0
      %1466 = vmatpush1.msra.mxu0 0.0
      %1467 = vmatprep.subr.mxu0 0.0
      %1468 = vmatpush1.msra.mxu0 0.0
      %1469 = vmatprep.subr.mxu0 0.0
      %1470 = vmatpush1.msra.mxu0 0.0
      %1471 = vmatprep.subr.mxu0 0.0
      %1472 = vmatpush1.msra.mxu0 0.0
      %1473 = vmatprep.subr.mxu0 0.0
      %1474 = vmatpush1.msra.mxu0 0.0
      %1475 = vmatprep.subr.mxu0 0.0
      %1476 = vmatpush1.msra.mxu0 0.0
      %1477 = vmatprep.subr.mxu0 0.0
      %1478 = vmatpush1.msra.mxu0 0.0
      %1479 = vmatprep.subr.mxu0 0.0
      %1480 = vmatpush1.msra.mxu0 0.0
      %1481 = vmatprep.mubr.f32.mxu0 0.0
      %1482 = vmatmul.mubr.f32.gmra.mrb[0].mxu0 %v1403
      %v1483 = vpop.f32.mrb[0].mxu0
      %v1484 = vadd.f32 0.0, %v1483
      %v1485 = vpop.f32.mrb[0].mxu0
      %1486 = vmatprep.mubr.f32.mxu0 0.0
      %1487 = vmatmul.mubr.f32.gmra.mrb[0].mxu0 %v1406
      %v1488 = vpop.f32.mrb[0].mxu0
      %v1489 = vadd.f32 0.0, %v1488
      %v1490 = vpop.f32.mrb[0].mxu0
      %1491 = vmatprep.mubr.f32.mxu0 0.0
      %1492 = vmatmul.mubr.f32.gmra.mrb[0].mxu0 %v1409
      %v1493 = vpop.f32.mrb[0].mxu0
      %v1494 = vadd.f32 0.0, %v1493
      %v1495 = vpop.f32.mrb[0].mxu0
      %1496 = vmatprep.mubr.f32.mxu0 0.0
      %1497 = vmatmul.mubr.f32.gmra.mrb[0].mxu0 %v1412
      %v1498 = vpop.f32.mrb[0].mxu0
      %v1499 = vadd.f32 0.0, %v1498
      %v1500 = vpop.f32.mrb[0].mxu0
      %1501 = vmatprep.mubr.f32.mxu0 0.0
      %1502 = vmatmul.mubr.f32.gmra.mrb[0].mxu0 %v1415
      %v1503 = vpop.f32.mrb[0].mxu0
      %v1504 = vadd.f32 0.0, %v1503
      %v1505 = vpop.f32.mrb[0].mxu0
      %1506 = vdwg.mxu0
      %v1507 = vrot.slane %v426, 3
      %1508 = vrot.lane.b32.xlu0 %v511, 104
      %v1509 = vpop.permute.xlu0 %1508
      %1510 = vrot.lane.b32.xlu0 %v516, 104
      %v1511 = vpop.permute.xlu0 %1510
      %1512 = vrot.lane.b32.xlu0 %v521, 104
      %v1513 = vpop.permute.xlu0 %1512
      %1514 = vrot.lane.b32.xlu0 %v526, 104
      %v1515 = vpop.permute.xlu0 %1514
      %1516 = vrot.lane.b32.xlu0 %v531, 104
      %v1517 = vpop.permute.xlu0 %1516
      %v1518 = vsel %vm534, %v1507, 0
      %v1520 = vsel %vm534, %v1509, 0
      %v1522 = vsel %vm534, %v1511, 0
      %v1524 = vsel %vm534, %v1513, 0
      %v1526 = vsel %vm534, %v1515, 0
      %v1528 = vsel %vm534, %v1517, 0
      %1530 = vmatprep.subr.mxu0 0.0
      %1531 = vmatpush1.xpose.msra.mxu0 %v1520
      %1532 = vmatprep.subr.mxu0 0.0
      %1533 = vmatpush1.xpose.msra.mxu0 %v1522
      %1534 = vmatprep.subr.mxu0 0.0
      %1535 = vmatpush1.xpose.msra.mxu0 %v1524
      %1536 = vmatprep.subr.mxu0 0.0
      %1537 = vmatpush1.xpose.msra.mxu0 %v1526
      %1538 = vmatprep.subr.mxu0 0.0
      %1539 = vmatpush1.xpose.msra.mxu0 %v1528
      %1540 = vmatprep.subr.mxu0 0.0
      %1541 = vmatpush1.xpose.msra.mxu0 0.0
      %1542 = vmatprep.subr.mxu0 0.0
      %1543 = vmatpush1.xpose.msra.mxu0 0.0
      %1544 = vmatprep.subr.mxu0 0.0
      %1545 = vmatpush1.xpose.msra.mxu0 0.0
      %1546 = vmatprep.subr.mxu0 0.0
      %1547 = vmatpush1.xpose.msra.mxu0 0.0
      %1548 = vmatprep.subr.mxu0 0.0
      %1549 = vmatpush1.xpose.msra.mxu0 0.0
      %1550 = vmatprep.subr.mxu0 0.0
      %1551 = vmatpush1.xpose.msra.mxu0 0.0
      %1552 = vmatprep.subr.mxu0 0.0
      %1553 = vmatpush1.xpose.msra.mxu0 0.0
      %1554 = vmatprep.subr.mxu0 0.0
      %1555 = vmatpush1.xpose.msra.mxu0 0.0
      %1556 = vmatprep.subr.mxu0 0.0
      %1557 = vmatpush1.xpose.msra.mxu0 0.0
      %1558 = vmatprep.subr.mxu0 0.0
      %1559 = vmatpush1.xpose.msra.mxu0 0.0
      %1560 = vmatprep.subr.mxu0 0.0
      %1561 = vmatpush1.xpose.msra.mxu0 0.0
      %1562 = vmatprep.subr.mxu0 0.0
      %1563 = vmatpush1.xpose.msra.mxu0 0.0
      %1564 = vmatprep.subr.mxu0 0.0
      %1565 = vmatpush1.xpose.msra.mxu0 0.0
      %1566 = vmatprep.subr.mxu0 0.0
      %1567 = vmatpush1.xpose.msra.mxu0 0.0
      %1568 = vmatprep.subr.mxu0 0.0
      %1569 = vmatpush1.xpose.msra.mxu0 0.0
      %1570 = vmatprep.subr.mxu0 0.0
      %1571 = vmatpush1.xpose.msra.mxu0 0.0
      %1572 = vmatprep.subr.mxu0 0.0
      %1573 = vmatpush1.xpose.msra.mxu0 0.0
      %1574 = vmatprep.subr.mxu0 0.0
      %1575 = vmatpush1.xpose.msra.mxu0 0.0
      %1576 = vmatprep.subr.mxu0 0.0
      %1577 = vmatpush1.xpose.msra.mxu0 0.0
      %1578 = vmatprep.subr.mxu0 0.0
      %1579 = vmatpush1.xpose.msra.mxu0 0.0
      %1580 = vmatprep.subr.mxu0 0.0
      %1581 = vmatpush1.xpose.msra.mxu0 0.0
      %1582 = vmatprep.subr.mxu0 0.0
      %1583 = vmatpush1.xpose.msra.mxu0 0.0
      %1584 = vmatprep.subr.mxu0 0.0
      %1585 = vmatpush1.xpose.msra.mxu0 0.0
      %1586 = vmatprep.subr.mxu0 0.0
      %1587 = vmatpush1.xpose.msra.mxu0 0.0
      %1588 = vmatprep.subr.mxu0 0.0
      %1589 = vmatpush1.xpose.msra.mxu0 0.0
      %1590 = vmatprep.subr.mxu0 0.0
      %1591 = vmatpush1.xpose.msra.mxu0 0.0
      %1592 = vmatprep.subr.mxu0 0.0
      %1593 = vmatpush1.xpose.msra.mxu0 0.0
      %1594 = vmatprep.mubr.f32.mxu0 0.0
      %1595 = vmatmul.mubr.f32.gmra.mrb[0].mxu0 %v1518
      %v1596 = vpop.f32.mrb[0].mxu0
      %v1597 = vadd.f32 0.0, %v1596
      %v1598 = vpop.f32.mrb[0].mxu0
      %1599 = vdwg.mxu0
      %v1600 = vlaneseq
      %v1601 = vshrl.u32 %v1600, 7
      %v1602 = vsub.s32 3, %v1601
      %v1603 = vrot.slane %v427, %v1602
      %1605 = vrot.lane.b32.xlu0 %v1603, 24
      %v1606 = vpop.permute.xlu0 %1605
      %v1608 = vmul.f32 %v511, %v1606
      %v1609 = vmul.f32 %v516, %v1606
      %v1610 = vmul.f32 %v521, %v1606
      %v1611 = vmul.f32 %v526, %v1606
      %v1612 = vmul.f32 %v531, %v1606
      %1618 = vrot.lane.b32.xlu0 %v1608, 104
      %v1619 = vpop.permute.xlu0 %1618
      %1620 = vrot.lane.b32.xlu0 %v1609, 104
      %v1621 = vpop.permute.xlu0 %1620
      %1622 = vrot.lane.b32.xlu0 %v1610, 104
      %v1623 = vpop.permute.xlu0 %1622
      %1624 = vrot.lane.b32.xlu0 %v1611, 104
      %v1625 = vpop.permute.xlu0 %1624
      %1626 = vrot.lane.b32.xlu0 %v1612, 104
      %v1627 = vpop.permute.xlu0 %1626
      %v1633 = vsel %vm534, %v1619, 0.0
      %1634 = vadd.xlane.f32.xlu0 %v1633
      %v1635 = vpop.xlane.xlu0 %1634
      %v1636 = vsel %vm534, %v1621, 0.0
      %1637 = vadd.xlane.f32.xlu0 %v1636
      %v1638 = vpop.xlane.xlu0 %1637
      %v1639 = vsel %vm534, %v1623, 0.0
      %1640 = vadd.xlane.f32.xlu0 %v1639
      %v1641 = vpop.xlane.xlu0 %1640
      %v1642 = vsel %vm534, %v1625, 0.0
      %1643 = vadd.xlane.f32.xlu0 %v1642
      %v1644 = vpop.xlane.xlu0 %1643
      %v1645 = vsel %vm534, %v1627, 0.0
      %1646 = vadd.xlane.f32.xlu0 %v1645
      %v1647 = vpop.xlane.xlu0 %1646
      %v1648 = vlaneseq
      %v1649 = vshrl.u32 %v1648, 7
      %v1650 = vsub.s32 0, %v1649
      %v1651 = vrot.slane %v1597, %v1650
      %v1652 = vadd.f32 %v1635, %v1651
      %v1653 = vadd.f32 %v1638, %v1651
      %v1654 = vadd.f32 %v1641, %v1651
      %v1655 = vadd.f32 %v1644, %v1651
      %v1656 = vadd.f32 %v1647, %v1651
      %vm1657 = vcmp.gt.f32.partialorder %v1652, 0.0
      %vm1658 = vcmp.gt.f32.partialorder %v1653, 0.0
      %vm1659 = vcmp.gt.f32.partialorder %v1654, 0.0
      %vm1660 = vcmp.gt.f32.partialorder %v1655, 0.0
      %vm1661 = vcmp.gt.f32.partialorder %v1656, 0.0
      %v1662 = vmul.f32 %v1652, 0.2
      %v1663 = vmul.f32 %v1653, 0.2
      %v1664 = vmul.f32 %v1654, 0.2
      %v1665 = vmul.f32 %v1655, 0.2
      %v1666 = vmul.f32 %v1656, 0.2
      %v1667 = vsel %vm1657, %v1652, %v1662
      %v1668 = vsel %vm1658, %v1653, %v1663
      %v1669 = vsel %vm1659, %v1654, %v1664
      %v1670 = vsel %vm1660, %v1655, %v1665
      %v1671 = vsel %vm1661, %v1656, %v1666
      %v1672 = vadd.f32 %v1667, %v414
      %v1673 = vadd.f32 %v1668, %v415
      %v1674 = vadd.f32 %v1669, %v416
      %v1675 = vadd.f32 %v1670, %v417
      %v1676 = vadd.f32 %v1671, %v418
      %v1677 = vsel %vm676, %v1672, -inf
      %1678 = vmax.xlane.f32.xlu0 %v1677
      %v1679 = vpop.xlane.xlu0 %1678
      %v1680 = vsel %vm676, %v1673, -inf
      %1681 = vmax.xlane.f32.xlu0 %v1680
      %v1682 = vpop.xlane.xlu0 %1681
      %v1683 = vsel %vm676, %v1674, -inf
      %1684 = vmax.xlane.f32.xlu0 %v1683
      %v1685 = vpop.xlane.xlu0 %1684
      %v1686 = vsel %vm676, %v1675, -inf
      %1687 = vmax.xlane.f32.xlu0 %v1686
      %v1688 = vpop.xlane.xlu0 %1687
      %v1689 = vsel %vm676, %v1676, -inf
      %1690 = vmax.xlane.f32.xlu0 %v1689
      %v1691 = vpop.xlane.xlu0 %1690
      %v1692 = vsub.f32 %v1672, %v1679
      %v1693 = vsub.f32 %v1673, %v1682
      %v1694 = vsub.f32 %v1674, %v1685
      %v1695 = vsub.f32 %v1675, %v1688
      %v1696 = vsub.f32 %v1676, %v1691
      %v1697 = vmul.f32 %v1692, 1.442695
      %v1698 = vpow.pop %v1697
      %v1699 = vmul.f32 %v1693, 1.442695
      %v1700 = vpow.pop %v1699
      %v1701 = vmul.f32 %v1694, 1.442695
      %v1702 = vpow.pop %v1701
      %v1703 = vmul.f32 %v1695, 1.442695
      %v1704 = vpow.pop %v1703
      %v1705 = vmul.f32 %v1696, 1.442695
      %v1706 = vpow.pop %v1705
      %v1707 = vsel %vm676, %v1698, 0.0
      %1708 = vadd.xlane.f32.xlu0 %v1707
      %v1709 = vpop.xlane.xlu0 %1708
      %v1710 = vsel %vm676, %v1700, 0.0
      %1711 = vadd.xlane.f32.xlu0 %v1710
      %v1712 = vpop.xlane.xlu0 %1711
      %v1713 = vsel %vm676, %v1702, 0.0
      %1714 = vadd.xlane.f32.xlu0 %v1713
      %v1715 = vpop.xlane.xlu0 %1714
      %v1716 = vsel %vm676, %v1704, 0.0
      %1717 = vadd.xlane.f32.xlu0 %v1716
      %v1718 = vpop.xlane.xlu0 %1717
      %v1719 = vsel %vm676, %v1706, 0.0
      %1720 = vadd.xlane.f32.xlu0 %v1719
      %v1721 = vpop.xlane.xlu0 %1720
      %v1722 = vrcp.pop %v1709
      %v1723 = vrcp.pop %v1712
      %v1724 = vrcp.pop %v1715
      %v1725 = vrcp.pop %v1718
      %v1726 = vrcp.pop %v1721
      %v1727 = vmul.f32 %v1698, %v1722
      %v1728 = vmul.f32 %v1700, %v1723
      %v1729 = vmul.f32 %v1702, %v1724
      %v1730 = vmul.f32 %v1704, %v1725
      %v1731 = vmul.f32 %v1706, %v1726
      %v1738 = vsel %vm676, %v1727, 0
      %v1741 = vsel %vm676, %v1728, 0
      %v1744 = vsel %vm676, %v1729, 0
      %v1747 = vsel %vm676, %v1730, 0
      %v1750 = vsel %vm676, %v1731, 0
      %1752 = vmatprep.subr.mxu0 0.0
      %1753 = vmatpush1.msra.mxu0 %v1509
      %1754 = vmatprep.subr.mxu0 0.0
      %1755 = vmatpush1.msra.mxu0 %v1511
      %1756 = vmatprep.subr.mxu0 0.0
      %1757 = vmatpush1.msra.mxu0 %v1513
      %1758 = vmatprep.subr.mxu0 0.0
      %1759 = vmatpush1.msra.mxu0 %v1515
      %1760 = vmatprep.subr.mxu0 0.0
      %1761 = vmatpush1.msra.mxu0 %v1517
      %1762 = vmatprep.subr.mxu0 0.0
      %1763 = vmatpush1.msra.mxu0 0.0
      %1764 = vmatprep.subr.mxu0 0.0
      %1765 = vmatpush1.msra.mxu0 0.0
      %1766 = vmatprep.subr.mxu0 0.0
      %1767 = vmatpush1.msra.mxu0 0.0
      %1768 = vmatprep.subr.mxu0 0.0
      %1769 = vmatpush1.msra.mxu0 0.0
      %1770 = vmatprep.subr.mxu0 0.0
      %1771 = vmatpush1.msra.mxu0 0.0
      %1772 = vmatprep.subr.mxu0 0.0
      %1773 = vmatpush1.msra.mxu0 0.0
      %1774 = vmatprep.subr.mxu0 0.0
      %1775 = vmatpush1.msra.mxu0 0.0
      %1776 = vmatprep.subr.mxu0 0.0
      %1777 = vmatpush1.msra.mxu0 0.0
      %1778 = vmatprep.subr.mxu0 0.0
      %1779 = vmatpush1.msra.mxu0 0.0
      %1780 = vmatprep.subr.mxu0 0.0
      %1781 = vmatpush1.msra.mxu0 0.0
      %1782 = vmatprep.subr.mxu0 0.0
      %1783 = vmatpush1.msra.mxu0 0.0
      %1784 = vmatprep.subr.mxu0 0.0
      %1785 = vmatpush1.msra.mxu0 0.0
      %1786 = vmatprep.subr.mxu0 0.0
      %1787 = vmatpush1.msra.mxu0 0.0
      %1788 = vmatprep.subr.mxu0 0.0
      %1789 = vmatpush1.msra.mxu0 0.0
      %1790 = vmatprep.subr.mxu0 0.0
      %1791 = vmatpush1.msra.mxu0 0.0
      %1792 = vmatprep.subr.mxu0 0.0
      %1793 = vmatpush1.msra.mxu0 0.0
      %1794 = vmatprep.subr.mxu0 0.0
      %1795 = vmatpush1.msra.mxu0 0.0
      %1796 = vmatprep.subr.mxu0 0.0
      %1797 = vmatpush1.msra.mxu0 0.0
      %1798 = vmatprep.subr.mxu0 0.0
      %1799 = vmatpush1.msra.mxu0 0.0
      %1800 = vmatprep.subr.mxu0 0.0
      %1801 = vmatpush1.msra.mxu0 0.0
      %1802 = vmatprep.subr.mxu0 0.0
      %1803 = vmatpush1.msra.mxu0 0.0
      %1804 = vmatprep.subr.mxu0 0.0
      %1805 = vmatpush1.msra.mxu0 0.0
      %1806 = vmatprep.subr.mxu0 0.0
      %1807 = vmatpush1.msra.mxu0 0.0
      %1808 = vmatprep.subr.mxu0 0.0
      %1809 = vmatpush1.msra.mxu0 0.0
      %1810 = vmatprep.subr.mxu0 0.0
      %1811 = vmatpush1.msra.mxu0 0.0
      %1812 = vmatprep.subr.mxu0 0.0
      %1813 = vmatpush1.msra.mxu0 0.0
      %1814 = vmatprep.subr.mxu0 0.0
      %1815 = vmatpush1.msra.mxu0 0.0
      %1816 = vmatprep.mubr.f32.mxu0 0.0
      %1817 = vmatmul.mubr.f32.gmra.mrb[0].mxu0 %v1738
      %v1818 = vpop.f32.mrb[0].mxu0
      %v1819 = vadd.f32 0.0, %v1818
      %v1820 = vpop.f32.mrb[0].mxu0
      %1821 = vmatprep.mubr.f32.mxu0 0.0
      %1822 = vmatmul.mubr.f32.gmra.mrb[0].mxu0 %v1741
      %v1823 = vpop.f32.mrb[0].mxu0
      %v1824 = vadd.f32 0.0, %v1823
      %v1825 = vpop.f32.mrb[0].mxu0
      %1826 = vmatprep.mubr.f32.mxu0 0.0
      %1827 = vmatmul.mubr.f32.gmra.mrb[0].mxu0 %v1744
      %v1828 = vpop.f32.mrb[0].mxu0
      %v1829 = vadd.f32 0.0, %v1828
      %v1830 = vpop.f32.mrb[0].mxu0
      %1831 = vmatprep.mubr.f32.mxu0 0.0
      %1832 = vmatmul.mubr.f32.gmra.mrb[0].mxu0 %v1747
      %v1833 = vpop.f32.mrb[0].mxu0
      %v1834 = vadd.f32 0.0, %v1833
      %v1835 = vpop.f32.mrb[0].mxu0
      %1836 = vmatprep.mubr.f32.mxu0 0.0
      %1837 = vmatmul.mubr.f32.gmra.mrb[0].mxu0 %v1750
      %v1838 = vpop.f32.mrb[0].mxu0
      %v1839 = vadd.f32 0.0, %v1838
      %v1840 = vpop.f32.mrb[0].mxu0
      %1841 = vdwg.mxu0
      %1847 = vrot.lane.b32.xlu0 %v1149, 8
      %v1848 = vpop.permute.xlu0 %1847
      %1849 = vrot.lane.b32.xlu0 %v1154, 8
      %v1850 = vpop.permute.xlu0 %1849
      %1851 = vrot.lane.b32.xlu0 %v1159, 8
      %v1852 = vpop.permute.xlu0 %1851
      %1853 = vrot.lane.b32.xlu0 %v1164, 8
      %v1854 = vpop.permute.xlu0 %1853
      %1855 = vrot.lane.b32.xlu0 %v1169, 8
      %v1856 = vpop.permute.xlu0 %1855
      %1867 = vrot.lane.b32.xlu0 %v1484, 16
      %v1868 = vpop.permute.xlu0 %1867
      %1869 = vrot.lane.b32.xlu0 %v1489, 16
      %v1870 = vpop.permute.xlu0 %1869
      %1871 = vrot.lane.b32.xlu0 %v1494, 16
      %v1872 = vpop.permute.xlu0 %1871
      %1873 = vrot.lane.b32.xlu0 %v1499, 16
      %v1874 = vpop.permute.xlu0 %1873
      %1875 = vrot.lane.b32.xlu0 %v1504, 16
      %v1876 = vpop.permute.xlu0 %1875
      %1887 = vrot.lane.b32.xlu0 %v1819, 24
      %v1888 = vpop.permute.xlu0 %1887
      %1889 = vrot.lane.b32.xlu0 %v1824, 24
      %v1890 = vpop.permute.xlu0 %1889
      %1891 = vrot.lane.b32.xlu0 %v1829, 24
      %v1892 = vpop.permute.xlu0 %1891
      %1893 = vrot.lane.b32.xlu0 %v1834, 24
      %v1894 = vpop.permute.xlu0 %1893
      %1895 = vrot.lane.b32.xlu0 %v1839, 24
      %v1896 = vpop.permute.xlu0 %1895
      %v1902 = vsel %vm534, %v814, %v1848
      %v1903 = vsel %vm534, %v819, %v1850
      %v1904 = vsel %vm534, %v824, %v1852
      %v1905 = vsel %vm534, %v829, %v1854
      %v1906 = vsel %vm534, %v834, %v1856
      %v1907 = vsel %vm428, %v1902, %v1868
      %v1908 = vsel %vm428, %v1903, %v1870
      %v1909 = vsel %vm428, %v1904, %v1872
      %v1910 = vsel %vm428, %v1905, %v1874
      %v1911 = vsel %vm428, %v1906, %v1876
      %vm1912 = vcmask 195584
      %v1913 = vsel %vm1912, %v1907, %v1888
      %v1914 = vsel %vm1912, %v1908, %v1890
      %v1915 = vsel %vm1912, %v1909, %v1892
      %v1916 = vsel %vm1912, %v1910, %v1894
      %v1917 = vsel %vm1912, %v1911, %v1896
      %v1918 = vmax.f32 %v1913, 0.0
      %v1919 = vmax.f32 %v1914, 0.0
      %v1920 = vmax.f32 %v1915, 0.0
      %v1921 = vmax.f32 %v1916, 0.0
      %v1922 = vmax.f32 %v1917, 0.0
      %v1923 = vld [vmem:[%s400] sm:$0xff]
      %v1924 = vld [vmem:[%s400 + $0x8] sm:$0xff]
      %v1925 = vld [vmem:[%s400 + $0x10] sm:$0xff]
      %v1926 = vld [vmem:[%s400 + $0x18] sm:$0xff]
      %v1927 = vld [vmem:[%s404] sm:$0xf]
      %v1928 = vld [vmem:[%s408] sm:$0xf]
      %vm1929 = vcmask 261120
      %v1931 = vsel %vm1929, %v1918, 0
      %v1934 = vsel %vm1929, %v1919, 0
      %v1937 = vsel %vm1929, %v1920, 0
      %v1940 = vsel %vm1929, %v1921, 0
      %v1943 = vsel %vm1929, %v1922, 0
      %1945 = vmatprep.subr.mxu0 0.0
      %1946 = vmatpush1.msra.mxu0 %v1923
      %1947 = vmatprep.subr.mxu0 0.0
      %1948 = vmatpush1.msra.mxu0 %v1924
      %1949 = vmatprep.subr.mxu0 0.0
      %1950 = vmatpush1.msra.mxu0 %v1925
      %1951 = vmatprep.subr.mxu0 0.0
      %1952 = vmatpush1.msra.mxu0 %v1926
      %1953 = vmatprep.subr.mxu0 0.0
      %1954 = vmatpush1.msra.mxu0 0.0
      %1955 = vmatprep.subr.mxu0 0.0
      %1956 = vmatpush1.msra.mxu0 0.0
      %1957 = vmatprep.subr.mxu0 0.0
      %1958 = vmatpush1.msra.mxu0 0.0
      %1959 = vmatprep.subr.mxu0 0.0
      %1960 = vmatpush1.msra.mxu0 0.0
      %1961 = vmatprep.subr.mxu0 0.0
      %1962 = vmatpush1.msra.mxu0 0.0
      %1963 = vmatprep.subr.mxu0 0.0
      %1964 = vmatpush1.msra.mxu0 0.0
      %1965 = vmatprep.subr.mxu0 0.0
      %1966 = vmatpush1.msra.mxu0 0.0
      %1967 = vmatprep.subr.mxu0 0.0
      %1968 = vmatpush1.msra.mxu0 0.0
      %1969 = vmatprep.subr.mxu0 0.0
      %1970 = vmatpush1.msra.mxu0 0.0
      %1971 = vmatprep.subr.mxu0 0.0
      %1972 = vmatpush1.msra.mxu0 0.0
      %1973 = vmatprep.subr.mxu0 0.0
      %1974 = vmatpush1.msra.mxu0 0.0
      %1975 = vmatprep.subr.mxu0 0.0
      %1976 = vmatpush1.msra.mxu0 0.0
      %1977 = vmatprep.subr.mxu0 0.0
      %1978 = vmatpush1.msra.mxu0 0.0
      %1979 = vmatprep.subr.mxu0 0.0
      %1980 = vmatpush1.msra.mxu0 0.0
      %1981 = vmatprep.subr.mxu0 0.0
      %1982 = vmatpush1.msra.mxu0 0.0
      %1983 = vmatprep.subr.mxu0 0.0
      %1984 = vmatpush1.msra.mxu0 0.0
      %1985 = vmatprep.subr.mxu0 0.0
      %1986 = vmatpush1.msra.mxu0 0.0
      %1987 = vmatprep.subr.mxu0 0.0
      %1988 = vmatpush1.msra.mxu0 0.0
      %1989 = vmatprep.subr.mxu0 0.0
      %1990 = vmatpush1.msra.mxu0 0.0
      %1991 = vmatprep.subr.mxu0 0.0
      %1992 = vmatpush1.msra.mxu0 0.0
      %1993 = vmatprep.subr.mxu0 0.0
      %1994 = vmatpush1.msra.mxu0 0.0
      %1995 = vmatprep.subr.mxu0 0.0
      %1996 = vmatpush1.msra.mxu0 0.0
      %1997 = vmatprep.subr.mxu0 0.0
      %1998 = vmatpush1.msra.mxu0 0.0
      %1999 = vmatprep.subr.mxu0 0.0
      %2000 = vmatpush1.msra.mxu0 0.0
      %2001 = vmatprep.subr.mxu0 0.0
      %2002 = vmatpush1.msra.mxu0 0.0
      %2003 = vmatprep.subr.mxu0 0.0
      %2004 = vmatpush1.msra.mxu0 0.0
      %2005 = vmatprep.subr.mxu0 0.0
      %2006 = vmatpush1.msra.mxu0 0.0
      %2007 = vmatprep.subr.mxu0 0.0
      %2008 = vmatpush1.msra.mxu0 0.0
      %2009 = vmatprep.mubr.f32.mxu0 0.0
      %2010 = vmatmul.mubr.f32.gmra.mrb[0].mxu0 %v1931
      %v2011 = vpop.f32.mrb[0].mxu0
      %v2012 = vadd.f32 0.0, %v2011
      %v2013 = vpop.f32.mrb[0].mxu0
      %2014 = vmatprep.mubr.f32.mxu0 0.0
      %2015 = vmatmul.mubr.f32.gmra.mrb[0].mxu0 %v1934
      %v2016 = vpop.f32.mrb[0].mxu0
      %v2017 = vadd.f32 0.0, %v2016
      %v2018 = vpop.f32.mrb[0].mxu0
      %2019 = vmatprep.mubr.f32.mxu0 0.0
      %2020 = vmatmul.mubr.f32.gmra.mrb[0].mxu0 %v1937
      %v2021 = vpop.f32.mrb[0].mxu0
      %v2022 = vadd.f32 0.0, %v2021
      %v2023 = vpop.f32.mrb[0].mxu0
      %2024 = vmatprep.mubr.f32.mxu0 0.0
      %2025 = vmatmul.mubr.f32.gmra.mrb[0].mxu0 %v1940
      %v2026 = vpop.f32.mrb[0].mxu0
      %v2027 = vadd.f32 0.0, %v2026
      %v2028 = vpop.f32.mrb[0].mxu0
      %2029 = vmatprep.mubr.f32.mxu0 0.0
      %2030 = vmatmul.mubr.f32.gmra.mrb[0].mxu0 %v1943
      %v2031 = vpop.f32.mrb[0].mxu0
      %v2032 = vadd.f32 0.0, %v2031
      %v2033 = vpop.f32.mrb[0].mxu0
      %2034 = vdwg.mxu0
      %v2036 = vsel %vm534, %v1927, 0
      %v2039 = vsel %vm534, %v2012, 0
      %v2042 = vsel %vm534, %v2017, 0
      %v2045 = vsel %vm534, %v2022, 0
      %v2048 = vsel %vm534, %v2027, 0
      %v2051 = vsel %vm534, %v2032, 0
      %2053 = vmatprep.subr.mxu0 0.0
      %2054 = vmatpush1.xpose.msra.mxu0 %v2039
      %2055 = vmatprep.subr.mxu0 0.0
      %2056 = vmatpush1.xpose.msra.mxu0 %v2042
      %2057 = vmatprep.subr.mxu0 0.0
      %2058 = vmatpush1.xpose.msra.mxu0 %v2045
      %2059 = vmatprep.subr.mxu0 0.0
      %2060 = vmatpush1.xpose.msra.mxu0 %v2048
      %2061 = vmatprep.subr.mxu0 0.0
      %2062 = vmatpush1.xpose.msra.mxu0 %v2051
      %2063 = vmatprep.subr.mxu0 0.0
      %2064 = vmatpush1.xpose.msra.mxu0 0.0
      %2065 = vmatprep.subr.mxu0 0.0
      %2066 = vmatpush1.xpose.msra.mxu0 0.0
      %2067 = vmatprep.subr.mxu0 0.0
      %2068 = vmatpush1.xpose.msra.mxu0 0.0
      %2069 = vmatprep.subr.mxu0 0.0
      %2070 = vmatpush1.xpose.msra.mxu0 0.0
      %2071 = vmatprep.subr.mxu0 0.0
      %2072 = vmatpush1.xpose.msra.mxu0 0.0
      %2073 = vmatprep.subr.mxu0 0.0
      %2074 = vmatpush1.xpose.msra.mxu0 0.0
      %2075 = vmatprep.subr.mxu0 0.0
      %2076 = vmatpush1.xpose.msra.mxu0 0.0
      %2077 = vmatprep.subr.mxu0 0.0
      %2078 = vmatpush1.xpose.msra.mxu0 0.0
      %2079 = vmatprep.subr.mxu0 0.0
      %2080 = vmatpush1.xpose.msra.mxu0 0.0
      %2081 = vmatprep.subr.mxu0 0.0
      %2082 = vmatpush1.xpose.msra.mxu0 0.0
      %2083 = vmatprep.subr.mxu0 0.0
      %2084 = vmatpush1.xpose.msra.mxu0 0.0
      %2085 = vmatprep.subr.mxu0 0.0
      %2086 = vmatpush1.xpose.msra.mxu0 0.0
      %2087 = vmatprep.subr.mxu0 0.0
      %2088 = vmatpush1.xpose.msra.mxu0 0.0
      %2089 = vmatprep.subr.mxu0 0.0
      %2090 = vmatpush1.xpose.msra.mxu0 0.0
      %2091 = vmatprep.subr.mxu0 0.0
      %2092 = vmatpush1.xpose.msra.mxu0 0.0
      %2093 = vmatprep.subr.mxu0 0.0
      %2094 = vmatpush1.xpose.msra.mxu0 0.0
      %2095 = vmatprep.subr.mxu0 0.0
      %2096 = vmatpush1.xpose.msra.mxu0 0.0
      %2097 = vmatprep.subr.mxu0 0.0
      %2098 = vmatpush1.xpose.msra.mxu0 0.0
      %2099 = vmatprep.subr.mxu0 0.0
      %2100 = vmatpush1.xpose.msra.mxu0 0.0
      %2101 = vmatprep.subr.mxu0 0.0
      %2102 = vmatpush1.xpose.msra.mxu0 0.0
      %2103 = vmatprep.subr.mxu0 0.0
      %2104 = vmatpush1.xpose.msra.mxu0 0.0
      %2105 = vmatprep.subr.mxu0 0.0
      %2106 = vmatpush1.xpose.msra.mxu0 0.0
      %2107 = vmatprep.subr.mxu0 0.0
      %2108 = vmatpush1.xpose.msra.mxu0 0.0
      %2109 = vmatprep.subr.mxu0 0.0
      %2110 = vmatpush1.xpose.msra.mxu0 0.0
      %2111 = vmatprep.subr.mxu0 0.0
      %2112 = vmatpush1.xpose.msra.mxu0 0.0
      %2113 = vmatprep.subr.mxu0 0.0
      %2114 = vmatpush1.xpose.msra.mxu0 0.0
      %2115 = vmatprep.subr.mxu0 0.0
      %2116 = vmatpush1.xpose.msra.mxu0 0.0
      %2117 = vmatprep.mubr.f32.mxu0 0.0
      %2118 = vmatmul.mubr.f32.gmra.mrb[0].mxu0 %v2036
      %v2119 = vpop.f32.mrb[0].mxu0
      %v2120 = vadd.f32 0.0, %v2119
      %v2121 = vpop.f32.mrb[0].mxu0
      %2122 = vdwg.mxu0
      %v2123 = vlaneseq
      %v2124 = vshrl.u32 %v2123, 7
      %v2125 = vsub.s32 0, %v2124
      %v2126 = vrot.slane %v1928, %v2125
      %v2127 = vmul.f32 %v2012, %v2126
      %v2128 = vmul.f32 %v2017, %v2126
      %v2129 = vmul.f32 %v2022, %v2126
      %v2130 = vmul.f32 %v2027, %v2126
      %v2131 = vmul.f32 %v2032, %v2126
      %v2132 = vsel %vm534, %v2127, 0.0
      %2133 = vadd.xlane.f32.xlu0 %v2132
      %v2134 = vpop.xlane.xlu0 %2133
      %v2135 = vsel %vm534, %v2128, 0.0
      %2136 = vadd.xlane.f32.xlu0 %v2135
      %v2137 = vpop.xlane.xlu0 %2136
      %v2138 = vsel %vm534, %v2129, 0.0
      %2139 = vadd.xlane.f32.xlu0 %v2138
      %v2140 = vpop.xlane.xlu0 %2139
      %v2141 = vsel %vm534, %v2130, 0.0
      %2142 = vadd.xlane.f32.xlu0 %v2141
      %v2143 = vpop.xlane.xlu0 %2142
      %v2144 = vsel %vm534, %v2131, 0.0
      %2145 = vadd.xlane.f32.xlu0 %v2144
      %v2146 = vpop.xlane.xlu0 %2145
      %v2147 = vlaneseq
      %v2148 = vshrl.u32 %v2147, 7
      %v2149 = vsub.s32 0, %v2148
      %v2150 = vrot.slane %v2120, %v2149
      %v2151 = vadd.f32 %v2134, %v2150
      %v2152 = vadd.f32 %v2137, %v2150
      %v2153 = vadd.f32 %v2140, %v2150
      %v2154 = vadd.f32 %v2143, %v2150
      %v2155 = vadd.f32 %v2146, %v2150
      %vm2156 = vcmp.gt.f32.partialorder %v2151, 0.0
      %vm2157 = vcmp.gt.f32.partialorder %v2152, 0.0
      %vm2158 = vcmp.gt.f32.partialorder %v2153, 0.0
      %vm2159 = vcmp.gt.f32.partialorder %v2154, 0.0
      %vm2160 = vcmp.gt.f32.partialorder %v2155, 0.0
      %v2161 = vmul.f32 %v2151, 0.2
      %v2162 = vmul.f32 %v2152, 0.2
      %v2163 = vmul.f32 %v2153, 0.2
      %v2164 = vmul.f32 %v2154, 0.2
      %v2165 = vmul.f32 %v2155, 0.2
      %v2166 = vsel %vm2156, %v2151, %v2161
      %v2167 = vsel %vm2157, %v2152, %v2162
      %v2168 = vsel %vm2158, %v2153, %v2163
      %v2169 = vsel %vm2159, %v2154, %v2164
      %v2170 = vsel %vm2160, %v2155, %v2165
      %v2171 = vadd.f32 %v2166, %v414
      %v2172 = vadd.f32 %v2167, %v415
      %v2173 = vadd.f32 %v2168, %v416
      %v2174 = vadd.f32 %v2169, %v417
      %v2175 = vadd.f32 %v2170, %v418
      %v2176 = vsel %vm676, %v2171, -inf
      %2177 = vmax.xlane.f32.xlu0 %v2176
      %v2178 = vpop.xlane.xlu0 %2177
      %v2179 = vsel %vm676, %v2172, -inf
      %2180 = vmax.xlane.f32.xlu0 %v2179
      %v2181 = vpop.xlane.xlu0 %2180
      %v2182 = vsel %vm676, %v2173, -inf
      %2183 = vmax.xlane.f32.xlu0 %v2182
      %v2184 = vpop.xlane.xlu0 %2183
      %v2185 = vsel %vm676, %v2174, -inf
      %2186 = vmax.xlane.f32.xlu0 %v2185
      %v2187 = vpop.xlane.xlu0 %2186
      %v2188 = vsel %vm676, %v2175, -inf
      %2189 = vmax.xlane.f32.xlu0 %v2188
      %v2190 = vpop.xlane.xlu0 %2189
      %v2191 = vsub.f32 %v2171, %v2178
      %v2192 = vsub.f32 %v2172, %v2181
      %v2193 = vsub.f32 %v2173, %v2184
      %v2194 = vsub.f32 %v2174, %v2187
      %v2195 = vsub.f32 %v2175, %v2190
      %v2196 = vmul.f32 %v2191, 1.442695
      %v2197 = vpow.pop %v2196
      %v2198 = vmul.f32 %v2192, 1.442695
      %v2199 = vpow.pop %v2198
      %v2200 = vmul.f32 %v2193, 1.442695
      %v2201 = vpow.pop %v2200
      %v2202 = vmul.f32 %v2194, 1.442695
      %v2203 = vpow.pop %v2202
      %v2204 = vmul.f32 %v2195, 1.442695
      %v2205 = vpow.pop %v2204
      %v2206 = vsel %vm676, %v2197, 0.0
      %2207 = vadd.xlane.f32.xlu0 %v2206
      %v2208 = vpop.xlane.xlu0 %2207
      %v2209 = vsel %vm676, %v2199, 0.0
      %2210 = vadd.xlane.f32.xlu0 %v2209
      %v2211 = vpop.xlane.xlu0 %2210
      %v2212 = vsel %vm676, %v2201, 0.0
      %2213 = vadd.xlane.f32.xlu0 %v2212
      %v2214 = vpop.xlane.xlu0 %2213
      %v2215 = vsel %vm676, %v2203, 0.0
      %2216 = vadd.xlane.f32.xlu0 %v2215
      %v2217 = vpop.xlane.xlu0 %2216
      %v2218 = vsel %vm676, %v2205, 0.0
      %2219 = vadd.xlane.f32.xlu0 %v2218
      %v2220 = vpop.xlane.xlu0 %2219
      %v2221 = vrcp.pop %v2208
      %v2222 = vrcp.pop %v2211
      %v2223 = vrcp.pop %v2214
      %v2224 = vrcp.pop %v2217
      %v2225 = vrcp.pop %v2220
      %v2226 = vmul.f32 %v2197, %v2221
      %v2227 = vmul.f32 %v2199, %v2222
      %v2228 = vmul.f32 %v2201, %v2223
      %v2229 = vmul.f32 %v2203, %v2224
      %v2230 = vmul.f32 %v2205, %v2225
      %v2232 = vsel %vm676, %v2226, 0
      %v2235 = vsel %vm676, %v2227, 0
      %v2238 = vsel %vm676, %v2228, 0
      %v2241 = vsel %vm676, %v2229, 0
      %v2244 = vsel %vm676, %v2230, 0
      %2246 = vmatprep.subr.mxu0 0.0
      %2247 = vmatpush1.msra.mxu0 %v2012
      %2248 = vmatprep.subr.mxu0 0.0
      %2249 = vmatpush1.msra.mxu0 %v2017
      %2250 = vmatprep.subr.mxu0 0.0
      %2251 = vmatpush1.msra.mxu0 %v2022
      %2252 = vmatprep.subr.mxu0 0.0
      %2253 = vmatpush1.msra.mxu0 %v2027
      %2254 = vmatprep.subr.mxu0 0.0
      %2255 = vmatpush1.msra.mxu0 %v2032
      %2256 = vmatprep.subr.mxu0 0.0
      %2257 = vmatpush1.msra.mxu0 0.0
      %2258 = vmatprep.subr.mxu0 0.0
      %2259 = vmatpush1.msra.mxu0 0.0
      %2260 = vmatprep.subr.mxu0 0.0
      %2261 = vmatpush1.msra.mxu0 0.0
      %2262 = vmatprep.subr.mxu0 0.0
      %2263 = vmatpush1.msra.mxu0 0.0
      %2264 = vmatprep.subr.mxu0 0.0
      %2265 = vmatpush1.msra.mxu0 0.0
      %2266 = vmatprep.subr.mxu0 0.0
      %2267 = vmatpush1.msra.mxu0 0.0
      %2268 = vmatprep.subr.mxu0 0.0
      %2269 = vmatpush1.msra.mxu0 0.0
      %2270 = vmatprep.subr.mxu0 0.0
      %2271 = vmatpush1.msra.mxu0 0.0
      %2272 = vmatprep.subr.mxu0 0.0
      %2273 = vmatpush1.msra.mxu0 0.0
      %2274 = vmatprep.subr.mxu0 0.0
      %2275 = vmatpush1.msra.mxu0 0.0
      %2276 = vmatprep.subr.mxu0 0.0
      %2277 = vmatpush1.msra.mxu0 0.0
      %2278 = vmatprep.subr.mxu0 0.0
      %2279 = vmatpush1.msra.mxu0 0.0
      %2280 = vmatprep.subr.mxu0 0.0
      %2281 = vmatpush1.msra.mxu0 0.0
      %2282 = vmatprep.subr.mxu0 0.0
      %2283 = vmatpush1.msra.mxu0 0.0
      %2284 = vmatprep.subr.mxu0 0.0
      %2285 = vmatpush1.msra.mxu0 0.0
      %2286 = vmatprep.subr.mxu0 0.0
      %2287 = vmatpush1.msra.mxu0 0.0
      %2288 = vmatprep.subr.mxu0 0.0
      %2289 = vmatpush1.msra.mxu0 0.0
      %2290 = vmatprep.subr.mxu0 0.0
      %2291 = vmatpush1.msra.mxu0 0.0
      %2292 = vmatprep.subr.mxu0 0.0
      %2293 = vmatpush1.msra.mxu0 0.0
      %2294 = vmatprep.subr.mxu0 0.0
      %2295 = vmatpush1.msra.mxu0 0.0
      %2296 = vmatprep.subr.mxu0 0.0
      %2297 = vmatpush1.msra.mxu0 0.0
      %2298 = vmatprep.subr.mxu0 0.0
      %2299 = vmatpush1.msra.mxu0 0.0
      %2300 = vmatprep.subr.mxu0 0.0
      %2301 = vmatpush1.msra.mxu0 0.0
      %2302 = vmatprep.subr.mxu0 0.0
      %2303 = vmatpush1.msra.mxu0 0.0
      %2304 = vmatprep.subr.mxu0 0.0
      %2305 = vmatpush1.msra.mxu0 0.0
      %2306 = vmatprep.subr.mxu0 0.0
      %2307 = vmatpush1.msra.mxu0 0.0
      %2308 = vmatprep.subr.mxu0 0.0
      %2309 = vmatpush1.msra.mxu0 0.0
      %2310 = vmatprep.mubr.f32.mxu0 0.0
      %2311 = vmatmul.mubr.f32.gmra.mrb[0].mxu0 %v2232
      %v2312 = vpop.f32.mrb[0].mxu0
      %v2313 = vadd.f32 0.0, %v2312
      %v2314 = vpop.f32.mrb[0].mxu0
      %2315 = vmatprep.mubr.f32.mxu0 0.0
      %2316 = vmatmul.mubr.f32.gmra.mrb[0].mxu0 %v2235
      %v2317 = vpop.f32.mrb[0].mxu0
      %v2318 = vadd.f32 0.0, %v2317
      %v2319 = vpop.f32.mrb[0].mxu0
      %2320 = vmatprep.mubr.f32.mxu0 0.0
      %2321 = vmatmul.mubr.f32.gmra.mrb[0].mxu0 %v2238
      %v2322 = vpop.f32.mrb[0].mxu0
      %v2323 = vadd.f32 0.0, %v2322
      %v2324 = vpop.f32.mrb[0].mxu0
      %2325 = vmatprep.mubr.f32.mxu0 0.0
      %2326 = vmatmul.mubr.f32.gmra.mrb[0].mxu0 %v2241
      %v2327 = vpop.f32.mrb[0].mxu0
      %v2328 = vadd.f32 0.0, %v2327
      %v2329 = vpop.f32.mrb[0].mxu0
      %2330 = vmatprep.mubr.f32.mxu0 0.0
      %2331 = vmatmul.mubr.f32.gmra.mrb[0].mxu0 %v2244
      %v2332 = vpop.f32.mrb[0].mxu0
      %v2333 = vadd.f32 0.0, %v2332
      %v2334 = vpop.f32.mrb[0].mxu0
      %2335 = vdwg.mxu0
      %v2336 = vrot.slane %v1927, 1
      %2337 = vrot.lane.b32.xlu0 %v2012, 120
      %v2338 = vpop.permute.xlu0 %2337
      %2339 = vrot.lane.b32.xlu0 %v2017, 120
      %v2340 = vpop.permute.xlu0 %2339
      %2341 = vrot.lane.b32.xlu0 %v2022, 120
      %v2342 = vpop.permute.xlu0 %2341
      %2343 = vrot.lane.b32.xlu0 %v2027, 120
      %v2344 = vpop.permute.xlu0 %2343
      %2345 = vrot.lane.b32.xlu0 %v2032, 120
      %v2346 = vpop.permute.xlu0 %2345
      %v2347 = vsel %vm534, %v2336, 0
      %v2349 = vsel %vm534, %v2338, 0
      %v2351 = vsel %vm534, %v2340, 0
      %v2353 = vsel %vm534, %v2342, 0
      %v2355 = vsel %vm534, %v2344, 0
      %v2357 = vsel %vm534, %v2346, 0
      %2359 = vmatprep.subr.mxu0 0.0
      %2360 = vmatpush1.xpose.msra.mxu0 %v2349
      %2361 = vmatprep.subr.mxu0 0.0
      %2362 = vmatpush1.xpose.msra.mxu0 %v2351
      %2363 = vmatprep.subr.mxu0 0.0
      %2364 = vmatpush1.xpose.msra.mxu0 %v2353
      %2365 = vmatprep.subr.mxu0 0.0
      %2366 = vmatpush1.xpose.msra.mxu0 %v2355
      %2367 = vmatprep.subr.mxu0 0.0
      %2368 = vmatpush1.xpose.msra.mxu0 %v2357
      %2369 = vmatprep.subr.mxu0 0.0
      %2370 = vmatpush1.xpose.msra.mxu0 0.0
      %2371 = vmatprep.subr.mxu0 0.0
      %2372 = vmatpush1.xpose.msra.mxu0 0.0
      %2373 = vmatprep.subr.mxu0 0.0
      %2374 = vmatpush1.xpose.msra.mxu0 0.0
      %2375 = vmatprep.subr.mxu0 0.0
      %2376 = vmatpush1.xpose.msra.mxu0 0.0
      %2377 = vmatprep.subr.mxu0 0.0
      %2378 = vmatpush1.xpose.msra.mxu0 0.0
      %2379 = vmatprep.subr.mxu0 0.0
      %2380 = vmatpush1.xpose.msra.mxu0 0.0
      %2381 = vmatprep.subr.mxu0 0.0
      %2382 = vmatpush1.xpose.msra.mxu0 0.0
      %2383 = vmatprep.subr.mxu0 0.0
      %2384 = vmatpush1.xpose.msra.mxu0 0.0
      %2385 = vmatprep.subr.mxu0 0.0
      %2386 = vmatpush1.xpose.msra.mxu0 0.0
      %2387 = vmatprep.subr.mxu0 0.0
      %2388 = vmatpush1.xpose.msra.mxu0 0.0
      %2389 = vmatprep.subr.mxu0 0.0
      %2390 = vmatpush1.xpose.msra.mxu0 0.0
      %2391 = vmatprep.subr.mxu0 0.0
      %2392 = vmatpush1.xpose.msra.mxu0 0.0
      %2393 = vmatprep.subr.mxu0 0.0
      %2394 = vmatpush1.xpose.msra.mxu0 0.0
      %2395 = vmatprep.subr.mxu0 0.0
      %2396 = vmatpush1.xpose.msra.mxu0 0.0
      %2397 = vmatprep.subr.mxu0 0.0
      %2398 = vmatpush1.xpose.msra.mxu0 0.0
      %2399 = vmatprep.subr.mxu0 0.0
      %2400 = vmatpush1.xpose.msra.mxu0 0.0
      %2401 = vmatprep.subr.mxu0 0.0
      %2402 = vmatpush1.xpose.msra.mxu0 0.0
      %2403 = vmatprep.subr.mxu0 0.0
      %2404 = vmatpush1.xpose.msra.mxu0 0.0
      %2405 = vmatprep.subr.mxu0 0.0
      %2406 = vmatpush1.xpose.msra.mxu0 0.0
      %2407 = vmatprep.subr.mxu0 0.0
      %2408 = vmatpush1.xpose.msra.mxu0 0.0
      %2409 = vmatprep.subr.mxu0 0.0
      %2410 = vmatpush1.xpose.msra.mxu0 0.0
      %2411 = vmatprep.subr.mxu0 0.0
      %2412 = vmatpush1.xpose.msra.mxu0 0.0
      %2413 = vmatprep.subr.mxu0 0.0
      %2414 = vmatpush1.xpose.msra.mxu0 0.0
      %2415 = vmatprep.subr.mxu0 0.0
      %2416 = vmatpush1.xpose.msra.mxu0 0.0
      %2417 = vmatprep.subr.mxu0 0.0
      %2418 = vmatpush1.xpose.msra.mxu0 0.0
      %2419 = vmatprep.subr.mxu0 0.0
      %2420 = vmatpush1.xpose.msra.mxu0 0.0
      %2421 = vmatprep.subr.mxu0 0.0
      %2422 = vmatpush1.xpose.msra.mxu0 0.0
      %2423 = vmatprep.mubr.f32.mxu0 0.0
      %2424 = vmatmul.mubr.f32.gmra.mrb[0].mxu0 %v2347
      %v2425 = vpop.f32.mrb[0].mxu0
      %v2426 = vadd.f32 0.0, %v2425
      %v2427 = vpop.f32.mrb[0].mxu0
      %2428 = vdwg.mxu0
      %v2429 = vlaneseq
      %v2430 = vshrl.u32 %v2429, 7
      %v2431 = vsub.s32 1, %v2430
      %v2432 = vrot.slane %v1928, %v2431
      %2434 = vrot.lane.b32.xlu0 %v2432, 8
      %v2435 = vpop.permute.xlu0 %2434
      %v2437 = vmul.f32 %v2012, %v2435
      %v2438 = vmul.f32 %v2017, %v2435
      %v2439 = vmul.f32 %v2022, %v2435
      %v2440 = vmul.f32 %v2027, %v2435
      %v2441 = vmul.f32 %v2032, %v2435
      %2447 = vrot.lane.b32.xlu0 %v2437, 120
      %v2448 = vpop.permute.xlu0 %2447
      %2449 = vrot.lane.b32.xlu0 %v2438, 120
      %v2450 = vpop.permute.xlu0 %2449
      %2451 = vrot.lane.b32.xlu0 %v2439, 120
      %v2452 = vpop.permute.xlu0 %2451
      %2453 = vrot.lane.b32.xlu0 %v2440, 120
      %v2454 = vpop.permute.xlu0 %2453
      %2455 = vrot.lane.b32.xlu0 %v2441, 120
      %v2456 = vpop.permute.xlu0 %2455
      %v2462 = vsel %vm534, %v2448, 0.0
      %2463 = vadd.xlane.f32.xlu0 %v2462
      %v2464 = vpop.xlane.xlu0 %2463
      %v2465 = vsel %vm534, %v2450, 0.0
      %2466 = vadd.xlane.f32.xlu0 %v2465
      %v2467 = vpop.xlane.xlu0 %2466
      %v2468 = vsel %vm534, %v2452, 0.0
      %2469 = vadd.xlane.f32.xlu0 %v2468
      %v2470 = vpop.xlane.xlu0 %2469
      %v2471 = vsel %vm534, %v2454, 0.0
      %2472 = vadd.xlane.f32.xlu0 %v2471
      %v2473 = vpop.xlane.xlu0 %2472
      %v2474 = vsel %vm534, %v2456, 0.0
      %2475 = vadd.xlane.f32.xlu0 %v2474
      %v2476 = vpop.xlane.xlu0 %2475
      %v2477 = vlaneseq
      %v2478 = vshrl.u32 %v2477, 7
      %v2479 = vsub.s32 0, %v2478
      %v2480 = vrot.slane %v2426, %v2479
      %v2481 = vadd.f32 %v2464, %v2480
      %v2482 = vadd.f32 %v2467, %v2480
      %v2483 = vadd.f32 %v2470, %v2480
      %v2484 = vadd.f32 %v2473, %v2480
      %v2485 = vadd.f32 %v2476, %v2480
      %vm2486 = vcmp.gt.f32.partialorder %v2481, 0.0
      %vm2487 = vcmp.gt.f32.partialorder %v2482, 0.0
      %vm2488 = vcmp.gt.f32.partialorder %v2483, 0.0
      %vm2489 = vcmp.gt.f32.partialorder %v2484, 0.0
      %vm2490 = vcmp.gt.f32.partialorder %v2485, 0.0
      %v2491 = vmul.f32 %v2481, 0.2
      %v2492 = vmul.f32 %v2482, 0.2
      %v2493 = vmul.f32 %v2483, 0.2
      %v2494 = vmul.f32 %v2484, 0.2
      %v2495 = vmul.f32 %v2485, 0.2
      %v2496 = vsel %vm2486, %v2481, %v2491
      %v2497 = vsel %vm2487, %v2482, %v2492
      %v2498 = vsel %vm2488, %v2483, %v2493
      %v2499 = vsel %vm2489, %v2484, %v2494
      %v2500 = vsel %vm2490, %v2485, %v2495
      %v2501 = vadd.f32 %v2496, %v414
      %v2502 = vadd.f32 %v2497, %v415
      %v2503 = vadd.f32 %v2498, %v416
      %v2504 = vadd.f32 %v2499, %v417
      %v2505 = vadd.f32 %v2500, %v418
      %v2506 = vsel %vm676, %v2501, -inf
      %2507 = vmax.xlane.f32.xlu0 %v2506
      %v2508 = vpop.xlane.xlu0 %2507
      %v2509 = vsel %vm676, %v2502, -inf
      %2510 = vmax.xlane.f32.xlu0 %v2509
      %v2511 = vpop.xlane.xlu0 %2510
      %v2512 = vsel %vm676, %v2503, -inf
      %2513 = vmax.xlane.f32.xlu0 %v2512
      %v2514 = vpop.xlane.xlu0 %2513
      %v2515 = vsel %vm676, %v2504, -inf
      %2516 = vmax.xlane.f32.xlu0 %v2515
      %v2517 = vpop.xlane.xlu0 %2516
      %v2518 = vsel %vm676, %v2505, -inf
      %2519 = vmax.xlane.f32.xlu0 %v2518
      %v2520 = vpop.xlane.xlu0 %2519
      %v2521 = vsub.f32 %v2501, %v2508
      %v2522 = vsub.f32 %v2502, %v2511
      %v2523 = vsub.f32 %v2503, %v2514
      %v2524 = vsub.f32 %v2504, %v2517
      %v2525 = vsub.f32 %v2505, %v2520
      %v2526 = vmul.f32 %v2521, 1.442695
      %v2527 = vpow.pop %v2526
      %v2528 = vmul.f32 %v2522, 1.442695
      %v2529 = vpow.pop %v2528
      %v2530 = vmul.f32 %v2523, 1.442695
      %v2531 = vpow.pop %v2530
      %v2532 = vmul.f32 %v2524, 1.442695
      %v2533 = vpow.pop %v2532
      %v2534 = vmul.f32 %v2525, 1.442695
      %v2535 = vpow.pop %v2534
      %v2536 = vsel %vm676, %v2527, 0.0
      %2537 = vadd.xlane.f32.xlu0 %v2536
      %v2538 = vpop.xlane.xlu0 %2537
      %v2539 = vsel %vm676, %v2529, 0.0
      %2540 = vadd.xlane.f32.xlu0 %v2539
      %v2541 = vpop.xlane.xlu0 %2540
      %v2542 = vsel %vm676, %v2531, 0.0
      %2543 = vadd.xlane.f32.xlu0 %v2542
      %v2544 = vpop.xlane.xlu0 %2543
      %v2545 = vsel %vm676, %v2533, 0.0
      %2546 = vadd.xlane.f32.xlu0 %v2545
      %v2547 = vpop.xlane.xlu0 %2546
      %v2548 = vsel %vm676, %v2535, 0.0
      %2549 = vadd.xlane.f32.xlu0 %v2548
      %v2550 = vpop.xlane.xlu0 %2549
      %v2551 = vrcp.pop %v2538
      %v2552 = vrcp.pop %v2541
      %v2553 = vrcp.pop %v2544
      %v2554 = vrcp.pop %v2547
      %v2555 = vrcp.pop %v2550
      %v2556 = vmul.f32 %v2527, %v2551
      %v2557 = vmul.f32 %v2529, %v2552
      %v2558 = vmul.f32 %v2531, %v2553
      %v2559 = vmul.f32 %v2533, %v2554
      %v2560 = vmul.f32 %v2535, %v2555
      %v2567 = vsel %vm676, %v2556, 0
      %v2570 = vsel %vm676, %v2557, 0
      %v2573 = vsel %vm676, %v2558, 0
      %v2576 = vsel %vm676, %v2559, 0
      %v2579 = vsel %vm676, %v2560, 0
      %2581 = vmatprep.subr.mxu0 0.0
      %2582 = vmatpush1.msra.mxu0 %v2338
      %2583 = vmatprep.subr.mxu0 0.0
      %2584 = vmatpush1.msra.mxu0 %v2340
      %2585 = vmatprep.subr.mxu0 0.0
      %2586 = vmatpush1.msra.mxu0 %v2342
      %2587 = vmatprep.subr.mxu0 0.0
      %2588 = vmatpush1.msra.mxu0 %v2344
      %2589 = vmatprep.subr.mxu0 0.0
      %2590 = vmatpush1.msra.mxu0 %v2346
      %2591 = vmatprep.subr.mxu0 0.0
      %2592 = vmatpush1.msra.mxu0 0.0
      %2593 = vmatprep.subr.mxu0 0.0
      %2594 = vmatpush1.msra.mxu0 0.0
      %2595 = vmatprep.subr.mxu0 0.0
      %2596 = vmatpush1.msra.mxu0 0.0
      %2597 = vmatprep.subr.mxu0 0.0
      %2598 = vmatpush1.msra.mxu0 0.0
      %2599 = vmatprep.subr.mxu0 0.0
      %2600 = vmatpush1.msra.mxu0 0.0
      %2601 = vmatprep.subr.mxu0 0.0
      %2602 = vmatpush1.msra.mxu0 0.0
      %2603 = vmatprep.subr.mxu0 0.0
      %2604 = vmatpush1.msra.mxu0 0.0
      %2605 = vmatprep.subr.mxu0 0.0
      %2606 = vmatpush1.msra.mxu0 0.0
      %2607 = vmatprep.subr.mxu0 0.0
      %2608 = vmatpush1.msra.mxu0 0.0
      %2609 = vmatprep.subr.mxu0 0.0
      %2610 = vmatpush1.msra.mxu0 0.0
      %2611 = vmatprep.subr.mxu0 0.0
      %2612 = vmatpush1.msra.mxu0 0.0
      %2613 = vmatprep.subr.mxu0 0.0
      %2614 = vmatpush1.msra.mxu0 0.0
      %2615 = vmatprep.subr.mxu0 0.0
      %2616 = vmatpush1.msra.mxu0 0.0
      %2617 = vmatprep.subr.mxu0 0.0
      %2618 = vmatpush1.msra.mxu0 0.0
      %2619 = vmatprep.subr.mxu0 0.0
      %2620 = vmatpush1.msra.mxu0 0.0
      %2621 = vmatprep.subr.mxu0 0.0
      %2622 = vmatpush1.msra.mxu0 0.0
      %2623 = vmatprep.subr.mxu0 0.0
      %2624 = vmatpush1.msra.mxu0 0.0
      %2625 = vmatprep.subr.mxu0 0.0
      %2626 = vmatpush1.msra.mxu0 0.0
      %2627 = vmatprep.subr.mxu0 0.0
      %2628 = vmatpush1.msra.mxu0 0.0
      %2629 = vmatprep.subr.mxu0 0.0
      %2630 = vmatpush1.msra.mxu0 0.0
      %2631 = vmatprep.subr.mxu0 0.0
      %2632 = vmatpush1.msra.mxu0 0.0
      %2633 = vmatprep.subr.mxu0 0.0
      %2634 = vmatpush1.msra.mxu0 0.0
      %2635 = vmatprep.subr.mxu0 0.0
      %2636 = vmatpush1.msra.mxu0 0.0
      %2637 = vmatprep.subr.mxu0 0.0
      %2638 = vmatpush1.msra.mxu0 0.0
      %2639 = vmatprep.subr.mxu0 0.0
      %2640 = vmatpush1.msra.mxu0 0.0
      %2641 = vmatprep.subr.mxu0 0.0
      %2642 = vmatpush1.msra.mxu0 0.0
      %2643 = vmatprep.subr.mxu0 0.0
      %2644 = vmatpush1.msra.mxu0 0.0
      %2645 = vmatprep.mubr.f32.mxu0 0.0
      %2646 = vmatmul.mubr.f32.gmra.mrb[0].mxu0 %v2567
      %v2647 = vpop.f32.mrb[0].mxu0
      %v2648 = vadd.f32 0.0, %v2647
      %v2649 = vpop.f32.mrb[0].mxu0
      %2650 = vmatprep.mubr.f32.mxu0 0.0
      %2651 = vmatmul.mubr.f32.gmra.mrb[0].mxu0 %v2570
      %v2652 = vpop.f32.mrb[0].mxu0
      %v2653 = vadd.f32 0.0, %v2652
      %v2654 = vpop.f32.mrb[0].mxu0
      %2655 = vmatprep.mubr.f32.mxu0 0.0
      %2656 = vmatmul.mubr.f32.gmra.mrb[0].mxu0 %v2573
      %v2657 = vpop.f32.mrb[0].mxu0
      %v2658 = vadd.f32 0.0, %v2657
      %v2659 = vpop.f32.mrb[0].mxu0
      %2660 = vmatprep.mubr.f32.mxu0 0.0
      %2661 = vmatmul.mubr.f32.gmra.mrb[0].mxu0 %v2576
      %v2662 = vpop.f32.mrb[0].mxu0
      %v2663 = vadd.f32 0.0, %v2662
      %v2664 = vpop.f32.mrb[0].mxu0
      %2665 = vmatprep.mubr.f32.mxu0 0.0
      %2666 = vmatmul.mubr.f32.gmra.mrb[0].mxu0 %v2579
      %v2667 = vpop.f32.mrb[0].mxu0
      %v2668 = vadd.f32 0.0, %v2667
      %v2669 = vpop.f32.mrb[0].mxu0
      %2670 = vdwg.mxu0
      %v2671 = vrot.slane %v1927, 2
      %2672 = vrot.lane.b32.xlu0 %v2012, 112
      %v2673 = vpop.permute.xlu0 %2672
      %2674 = vrot.lane.b32.xlu0 %v2017, 112
      %v2675 = vpop.permute.xlu0 %2674
      %2676 = vrot.lane.b32.xlu0 %v2022, 112
      %v2677 = vpop.permute.xlu0 %2676
      %2678 = vrot.lane.b32.xlu0 %v2027, 112
      %v2679 = vpop.permute.xlu0 %2678
      %2680 = vrot.lane.b32.xlu0 %v2032, 112
      %v2681 = vpop.permute.xlu0 %2680
      %v2682 = vsel %vm534, %v2671, 0
      %v2684 = vsel %vm534, %v2673, 0
      %v2686 = vsel %vm534, %v2675, 0
      %v2688 = vsel %vm534, %v2677, 0
      %v2690 = vsel %vm534, %v2679, 0
      %v2692 = vsel %vm534, %v2681, 0
      %2694 = vmatprep.subr.mxu0 0.0
      %2695 = vmatpush1.xpose.msra.mxu0 %v2684
      %2696 = vmatprep.subr.mxu0 0.0
      %2697 = vmatpush1.xpose.msra.mxu0 %v2686
      %2698 = vmatprep.subr.mxu0 0.0
      %2699 = vmatpush1.xpose.msra.mxu0 %v2688
      %2700 = vmatprep.subr.mxu0 0.0
      %2701 = vmatpush1.xpose.msra.mxu0 %v2690
      %2702 = vmatprep.subr.mxu0 0.0
      %2703 = vmatpush1.xpose.msra.mxu0 %v2692
      %2704 = vmatprep.subr.mxu0 0.0
      %2705 = vmatpush1.xpose.msra.mxu0 0.0
      %2706 = vmatprep.subr.mxu0 0.0
      %2707 = vmatpush1.xpose.msra.mxu0 0.0
      %2708 = vmatprep.subr.mxu0 0.0
      %2709 = vmatpush1.xpose.msra.mxu0 0.0
      %2710 = vmatprep.subr.mxu0 0.0
      %2711 = vmatpush1.xpose.msra.mxu0 0.0
      %2712 = vmatprep.subr.mxu0 0.0
      %2713 = vmatpush1.xpose.msra.mxu0 0.0
      %2714 = vmatprep.subr.mxu0 0.0
      %2715 = vmatpush1.xpose.msra.mxu0 0.0
      %2716 = vmatprep.subr.mxu0 0.0
      %2717 = vmatpush1.xpose.msra.mxu0 0.0
      %2718 = vmatprep.subr.mxu0 0.0
      %2719 = vmatpush1.xpose.msra.mxu0 0.0
      %2720 = vmatprep.subr.mxu0 0.0
      %2721 = vmatpush1.xpose.msra.mxu0 0.0
      %2722 = vmatprep.subr.mxu0 0.0
      %2723 = vmatpush1.xpose.msra.mxu0 0.0
      %2724 = vmatprep.subr.mxu0 0.0
      %2725 = vmatpush1.xpose.msra.mxu0 0.0
      %2726 = vmatprep.subr.mxu0 0.0
      %2727 = vmatpush1.xpose.msra.mxu0 0.0
      %2728 = vmatprep.subr.mxu0 0.0
      %2729 = vmatpush1.xpose.msra.mxu0 0.0
      %2730 = vmatprep.subr.mxu0 0.0
      %2731 = vmatpush1.xpose.msra.mxu0 0.0
      %2732 = vmatprep.subr.mxu0 0.0
      %2733 = vmatpush1.xpose.msra.mxu0 0.0
      %2734 = vmatprep.subr.mxu0 0.0
      %2735 = vmatpush1.xpose.msra.mxu0 0.0
      %2736 = vmatprep.subr.mxu0 0.0
      %2737 = vmatpush1.xpose.msra.mxu0 0.0
      %2738 = vmatprep.subr.mxu0 0.0
      %2739 = vmatpush1.xpose.msra.mxu0 0.0
      %2740 = vmatprep.subr.mxu0 0.0
      %2741 = vmatpush1.xpose.msra.mxu0 0.0
      %2742 = vmatprep.subr.mxu0 0.0
      %2743 = vmatpush1.xpose.msra.mxu0 0.0
      %2744 = vmatprep.subr.mxu0 0.0
      %2745 = vmatpush1.xpose.msra.mxu0 0.0
      %2746 = vmatprep.subr.mxu0 0.0
      %2747 = vmatpush1.xpose.msra.mxu0 0.0
      %2748 = vmatprep.subr.mxu0 0.0
      %2749 = vmatpush1.xpose.msra.mxu0 0.0
      %2750 = vmatprep.subr.mxu0 0.0
      %2751 = vmatpush1.xpose.msra.mxu0 0.0
      %2752 = vmatprep.subr.mxu0 0.0
      %2753 = vmatpush1.xpose.msra.mxu0 0.0
      %2754 = vmatprep.subr.mxu0 0.0
      %2755 = vmatpush1.xpose.msra.mxu0 0.0
      %2756 = vmatprep.subr.mxu0 0.0
      %2757 = vmatpush1.xpose.msra.mxu0 0.0
      %2758 = vmatprep.mubr.f32.mxu0 0.0
      %2759 = vmatmul.mubr.f32.gmra.mrb[0].mxu0 %v2682
      %v2760 = vpop.f32.mrb[0].mxu0
      %v2761 = vadd.f32 0.0, %v2760
      %v2762 = vpop.f32.mrb[0].mxu0
      %2763 = vdwg.mxu0
      %v2764 = vlaneseq
      %v2765 = vshrl.u32 %v2764, 7
      %v2766 = vsub.s32 2, %v2765
      %v2767 = vrot.slane %v1928, %v2766
      %2769 = vrot.lane.b32.xlu0 %v2767, 16
      %v2770 = vpop.permute.xlu0 %2769
      %v2772 = vmul.f32 %v2012, %v2770
      %v2773 = vmul.f32 %v2017, %v2770
      %v2774 = vmul.f32 %v2022, %v2770
      %v2775 = vmul.f32 %v2027, %v2770
      %v2776 = vmul.f32 %v2032, %v2770
      %2782 = vrot.lane.b32.xlu0 %v2772, 112
      %v2783 = vpop.permute.xlu0 %2782
      %2784 = vrot.lane.b32.xlu0 %v2773, 112
      %v2785 = vpop.permute.xlu0 %2784
      %2786 = vrot.lane.b32.xlu0 %v2774, 112
      %v2787 = vpop.permute.xlu0 %2786
      %2788 = vrot.lane.b32.xlu0 %v2775, 112
      %v2789 = vpop.permute.xlu0 %2788
      %2790 = vrot.lane.b32.xlu0 %v2776, 112
      %v2791 = vpop.permute.xlu0 %2790
      %v2797 = vsel %vm534, %v2783, 0.0
      %2798 = vadd.xlane.f32.xlu0 %v2797
      %v2799 = vpop.xlane.xlu0 %2798
      %v2800 = vsel %vm534, %v2785, 0.0
      %2801 = vadd.xlane.f32.xlu0 %v2800
      %v2802 = vpop.xlane.xlu0 %2801
      %v2803 = vsel %vm534, %v2787, 0.0
      %2804 = vadd.xlane.f32.xlu0 %v2803
      %v2805 = vpop.xlane.xlu0 %2804
      %v2806 = vsel %vm534, %v2789, 0.0
      %2807 = vadd.xlane.f32.xlu0 %v2806
      %v2808 = vpop.xlane.xlu0 %2807
      %v2809 = vsel %vm534, %v2791, 0.0
      %2810 = vadd.xlane.f32.xlu0 %v2809
      %v2811 = vpop.xlane.xlu0 %2810
      %v2812 = vlaneseq
      %v2813 = vshrl.u32 %v2812, 7
      %v2814 = vsub.s32 0, %v2813
      %v2815 = vrot.slane %v2761, %v2814
      %v2816 = vadd.f32 %v2799, %v2815
      %v2817 = vadd.f32 %v2802, %v2815
      %v2818 = vadd.f32 %v2805, %v2815
      %v2819 = vadd.f32 %v2808, %v2815
      %v2820 = vadd.f32 %v2811, %v2815
      %vm2821 = vcmp.gt.f32.partialorder %v2816, 0.0
      %vm2822 = vcmp.gt.f32.partialorder %v2817, 0.0
      %vm2823 = vcmp.gt.f32.partialorder %v2818, 0.0
      %vm2824 = vcmp.gt.f32.partialorder %v2819, 0.0
      %vm2825 = vcmp.gt.f32.partialorder %v2820, 0.0
      %v2826 = vmul.f32 %v2816, 0.2
      %v2827 = vmul.f32 %v2817, 0.2
      %v2828 = vmul.f32 %v2818, 0.2
      %v2829 = vmul.f32 %v2819, 0.2
      %v2830 = vmul.f32 %v2820, 0.2
      %v2831 = vsel %vm2821, %v2816, %v2826
      %v2832 = vsel %vm2822, %v2817, %v2827
      %v2833 = vsel %vm2823, %v2818, %v2828
      %v2834 = vsel %vm2824, %v2819, %v2829
      %v2835 = vsel %vm2825, %v2820, %v2830
      %v2836 = vadd.f32 %v2831, %v414
      %v2837 = vadd.f32 %v2832, %v415
      %v2838 = vadd.f32 %v2833, %v416
      %v2839 = vadd.f32 %v2834, %v417
      %v2840 = vadd.f32 %v2835, %v418
      %v2841 = vsel %vm676, %v2836, -inf
      %2842 = vmax.xlane.f32.xlu0 %v2841
      %v2843 = vpop.xlane.xlu0 %2842
      %v2844 = vsel %vm676, %v2837, -inf
      %2845 = vmax.xlane.f32.xlu0 %v2844
      %v2846 = vpop.xlane.xlu0 %2845
      %v2847 = vsel %vm676, %v2838, -inf
      %2848 = vmax.xlane.f32.xlu0 %v2847
      %v2849 = vpop.xlane.xlu0 %2848
      %v2850 = vsel %vm676, %v2839, -inf
      %2851 = vmax.xlane.f32.xlu0 %v2850
      %v2852 = vpop.xlane.xlu0 %2851
      %v2853 = vsel %vm676, %v2840, -inf
      %2854 = vmax.xlane.f32.xlu0 %v2853
      %v2855 = vpop.xlane.xlu0 %2854
      %v2856 = vsub.f32 %v2836, %v2843
      %v2857 = vsub.f32 %v2837, %v2846
      %v2858 = vsub.f32 %v2838, %v2849
      %v2859 = vsub.f32 %v2839, %v2852
      %v2860 = vsub.f32 %v2840, %v2855
      %v2861 = vmul.f32 %v2856, 1.442695
      %v2862 = vpow.pop %v2861
      %v2863 = vmul.f32 %v2857, 1.442695
      %v2864 = vpow.pop %v2863
      %v2865 = vmul.f32 %v2858, 1.442695
      %v2866 = vpow.pop %v2865
      %v2867 = vmul.f32 %v2859, 1.442695
      %v2868 = vpow.pop %v2867
      %v2869 = vmul.f32 %v2860, 1.442695
      %v2870 = vpow.pop %v2869
      %v2871 = vsel %vm676, %v2862, 0.0
      %2872 = vadd.xlane.f32.xlu0 %v2871
      %v2873 = vpop.xlane.xlu0 %2872
      %v2874 = vsel %vm676, %v2864, 0.0
      %2875 = vadd.xlane.f32.xlu0 %v2874
      %v2876 = vpop.xlane.xlu0 %2875
      %v2877 = vsel %vm676, %v2866, 0.0
      %2878 = vadd.xlane.f32.xlu0 %v2877
      %v2879 = vpop.xlane.xlu0 %2878
      %v2880 = vsel %vm676, %v2868, 0.0
      %2881 = vadd.xlane.f32.xlu0 %v2880
      %v2882 = vpop.xlane.xlu0 %2881
      %v2883 = vsel %vm676, %v2870, 0.0
      %2884 = vadd.xlane.f32.xlu0 %v2883
      %v2885 = vpop.xlane.xlu0 %2884
      %v2886 = vrcp.pop %v2873
      %v2887 = vrcp.pop %v2876
      %v2888 = vrcp.pop %v2879
      %v2889 = vrcp.pop %v2882
      %v2890 = vrcp.pop %v2885
      %v2891 = vmul.f32 %v2862, %v2886
      %v2892 = vmul.f32 %v2864, %v2887
      %v2893 = vmul.f32 %v2866, %v2888
      %v2894 = vmul.f32 %v2868, %v2889
      %v2895 = vmul.f32 %v2870, %v2890
      %v2902 = vsel %vm676, %v2891, 0
      %v2905 = vsel %vm676, %v2892, 0
      %v2908 = vsel %vm676, %v2893, 0
      %v2911 = vsel %vm676, %v2894, 0
      %v2914 = vsel %vm676, %v2895, 0
      %2916 = vmatprep.subr.mxu0 0.0
      %2917 = vmatpush1.msra.mxu0 %v2673
      %2918 = vmatprep.subr.mxu0 0.0
      %2919 = vmatpush1.msra.mxu0 %v2675
      %2920 = vmatprep.subr.mxu0 0.0
      %2921 = vmatpush1.msra.mxu0 %v2677
      %2922 = vmatprep.subr.mxu0 0.0
      %2923 = vmatpush1.msra.mxu0 %v2679
      %2924 = vmatprep.subr.mxu0 0.0
      %2925 = vmatpush1.msra.mxu0 %v2681
      %2926 = vmatprep.subr.mxu0 0.0
      %2927 = vmatpush1.msra.mxu0 0.0
      %2928 = vmatprep.subr.mxu0 0.0
      %2929 = vmatpush1.msra.mxu0 0.0
      %2930 = vmatprep.subr.mxu0 0.0
      %2931 = vmatpush1.msra.mxu0 0.0
      %2932 = vmatprep.subr.mxu0 0.0
      %2933 = vmatpush1.msra.mxu0 0.0
      %2934 = vmatprep.subr.mxu0 0.0
      %2935 = vmatpush1.msra.mxu0 0.0
      %2936 = vmatprep.subr.mxu0 0.0
      %2937 = vmatpush1.msra.mxu0 0.0
      %2938 = vmatprep.subr.mxu0 0.0
      %2939 = vmatpush1.msra.mxu0 0.0
      %2940 = vmatprep.subr.mxu0 0.0
      %2941 = vmatpush1.msra.mxu0 0.0
      %2942 = vmatprep.subr.mxu0 0.0
      %2943 = vmatpush1.msra.mxu0 0.0
      %2944 = vmatprep.subr.mxu0 0.0
      %2945 = vmatpush1.msra.mxu0 0.0
      %2946 = vmatprep.subr.mxu0 0.0
      %2947 = vmatpush1.msra.mxu0 0.0
      %2948 = vmatprep.subr.mxu0 0.0
      %2949 = vmatpush1.msra.mxu0 0.0
      %2950 = vmatprep.subr.mxu0 0.0
      %2951 = vmatpush1.msra.mxu0 0.0
      %2952 = vmatprep.subr.mxu0 0.0
      %2953 = vmatpush1.msra.mxu0 0.0
      %2954 = vmatprep.subr.mxu0 0.0
      %2955 = vmatpush1.msra.mxu0 0.0
      %2956 = vmatprep.subr.mxu0 0.0
      %2957 = vmatpush1.msra.mxu0 0.0
      %2958 = vmatprep.subr.mxu0 0.0
      %2959 = vmatpush1.msra.mxu0 0.0
      %2960 = vmatprep.subr.mxu0 0.0
      %2961 = vmatpush1.msra.mxu0 0.0
      %2962 = vmatprep.subr.mxu0 0.0
      %2963 = vmatpush1.msra.mxu0 0.0
      %2964 = vmatprep.subr.mxu0 0.0
      %2965 = vmatpush1.msra.mxu0 0.0
      %2966 = vmatprep.subr.mxu0 0.0
      %2967 = vmatpush1.msra.mxu0 0.0
      %2968 = vmatprep.subr.mxu0 0.0
      %2969 = vmatpush1.msra.mxu0 0.0
      %2970 = vmatprep.subr.mxu0 0.0
      %2971 = vmatpush1.msra.mxu0 0.0
      %2972 = vmatprep.subr.mxu0 0.0
      %2973 = vmatpush1.msra.mxu0 0.0
      %2974 = vmatprep.subr.mxu0 0.0
      %2975 = vmatpush1.msra.mxu0 0.0
      %2976 = vmatprep.subr.mxu0 0.0
      %2977 = vmatpush1.msra.mxu0 0.0
      %2978 = vmatprep.subr.mxu0 0.0
      %2979 = vmatpush1.msra.mxu0 0.0
      %2980 = vmatprep.mubr.f32.mxu0 0.0
      %2981 = vmatmul.mubr.f32.gmra.mrb[0].mxu0 %v2902
      %v2982 = vpop.f32.mrb[0].mxu0
      %v2983 = vadd.f32 0.0, %v2982
      %v2984 = vpop.f32.mrb[0].mxu0
      %2985 = vmatprep.mubr.f32.mxu0 0.0
      %2986 = vmatmul.mubr.f32.gmra.mrb[0].mxu0 %v2905
      %v2987 = vpop.f32.mrb[0].mxu0
      %v2988 = vadd.f32 0.0, %v2987
      %v2989 = vpop.f32.mrb[0].mxu0
      %2990 = vmatprep.mubr.f32.mxu0 0.0
      %2991 = vmatmul.mubr.f32.gmra.mrb[0].mxu0 %v2908
      %v2992 = vpop.f32.mrb[0].mxu0
      %v2993 = vadd.f32 0.0, %v2992
      %v2994 = vpop.f32.mrb[0].mxu0
      %2995 = vmatprep.mubr.f32.mxu0 0.0
      %2996 = vmatmul.mubr.f32.gmra.mrb[0].mxu0 %v2911
      %v2997 = vpop.f32.mrb[0].mxu0
      %v2998 = vadd.f32 0.0, %v2997
      %v2999 = vpop.f32.mrb[0].mxu0
      %3000 = vmatprep.mubr.f32.mxu0 0.0
      %3001 = vmatmul.mubr.f32.gmra.mrb[0].mxu0 %v2914
      %v3002 = vpop.f32.mrb[0].mxu0
      %v3003 = vadd.f32 0.0, %v3002
      %v3004 = vpop.f32.mrb[0].mxu0
      %3005 = vdwg.mxu0
      %v3006 = vrot.slane %v1927, 3
      %3007 = vrot.lane.b32.xlu0 %v2012, 104
      %v3008 = vpop.permute.xlu0 %3007
      %3009 = vrot.lane.b32.xlu0 %v2017, 104
      %v3010 = vpop.permute.xlu0 %3009
      %3011 = vrot.lane.b32.xlu0 %v2022, 104
      %v3012 = vpop.permute.xlu0 %3011
      %3013 = vrot.lane.b32.xlu0 %v2027, 104
      %v3014 = vpop.permute.xlu0 %3013
      %3015 = vrot.lane.b32.xlu0 %v2032, 104
      %v3016 = vpop.permute.xlu0 %3015
      %v3017 = vsel %vm534, %v3006, 0
      %v3019 = vsel %vm534, %v3008, 0
      %v3021 = vsel %vm534, %v3010, 0
      %v3023 = vsel %vm534, %v3012, 0
      %v3025 = vsel %vm534, %v3014, 0
      %v3027 = vsel %vm534, %v3016, 0
      %3029 = vmatprep.subr.mxu0 0.0
      %3030 = vmatpush1.xpose.msra.mxu0 %v3019
      %3031 = vmatprep.subr.mxu0 0.0
      %3032 = vmatpush1.xpose.msra.mxu0 %v3021
      %3033 = vmatprep.subr.mxu0 0.0
      %3034 = vmatpush1.xpose.msra.mxu0 %v3023
      %3035 = vmatprep.subr.mxu0 0.0
      %3036 = vmatpush1.xpose.msra.mxu0 %v3025
      %3037 = vmatprep.subr.mxu0 0.0
      %3038 = vmatpush1.xpose.msra.mxu0 %v3027
      %3039 = vmatprep.subr.mxu0 0.0
      %3040 = vmatpush1.xpose.msra.mxu0 0.0
      %3041 = vmatprep.subr.mxu0 0.0
      %3042 = vmatpush1.xpose.msra.mxu0 0.0
      %3043 = vmatprep.subr.mxu0 0.0
      %3044 = vmatpush1.xpose.msra.mxu0 0.0
      %3045 = vmatprep.subr.mxu0 0.0
      %3046 = vmatpush1.xpose.msra.mxu0 0.0
      %3047 = vmatprep.subr.mxu0 0.0
      %3048 = vmatpush1.xpose.msra.mxu0 0.0
      %3049 = vmatprep.subr.mxu0 0.0
      %3050 = vmatpush1.xpose.msra.mxu0 0.0
      %3051 = vmatprep.subr.mxu0 0.0
      %3052 = vmatpush1.xpose.msra.mxu0 0.0
      %3053 = vmatprep.subr.mxu0 0.0
      %3054 = vmatpush1.xpose.msra.mxu0 0.0
      %3055 = vmatprep.subr.mxu0 0.0
      %3056 = vmatpush1.xpose.msra.mxu0 0.0
      %3057 = vmatprep.subr.mxu0 0.0
      %3058 = vmatpush1.xpose.msra.mxu0 0.0
      %3059 = vmatprep.subr.mxu0 0.0
      %3060 = vmatpush1.xpose.msra.mxu0 0.0
      %3061 = vmatprep.subr.mxu0 0.0
      %3062 = vmatpush1.xpose.msra.mxu0 0.0
      %3063 = vmatprep.subr.mxu0 0.0
      %3064 = vmatpush1.xpose.msra.mxu0 0.0
      %3065 = vmatprep.subr.mxu0 0.0
      %3066 = vmatpush1.xpose.msra.mxu0 0.0
      %3067 = vmatprep.subr.mxu0 0.0
      %3068 = vmatpush1.xpose.msra.mxu0 0.0
      %3069 = vmatprep.subr.mxu0 0.0
      %3070 = vmatpush1.xpose.msra.mxu0 0.0
      %3071 = vmatprep.subr.mxu0 0.0
      %3072 = vmatpush1.xpose.msra.mxu0 0.0
      %3073 = vmatprep.subr.mxu0 0.0
      %3074 = vmatpush1.xpose.msra.mxu0 0.0
      %3075 = vmatprep.subr.mxu0 0.0
      %3076 = vmatpush1.xpose.msra.mxu0 0.0
      %3077 = vmatprep.subr.mxu0 0.0
      %3078 = vmatpush1.xpose.msra.mxu0 0.0
      %3079 = vmatprep.subr.mxu0 0.0
      %3080 = vmatpush1.xpose.msra.mxu0 0.0
      %3081 = vmatprep.subr.mxu0 0.0
      %3082 = vmatpush1.xpose.msra.mxu0 0.0
      %3083 = vmatprep.subr.mxu0 0.0
      %3084 = vmatpush1.xpose.msra.mxu0 0.0
      %3085 = vmatprep.subr.mxu0 0.0
      %3086 = vmatpush1.xpose.msra.mxu0 0.0
      %3087 = vmatprep.subr.mxu0 0.0
      %3088 = vmatpush1.xpose.msra.mxu0 0.0
      %3089 = vmatprep.subr.mxu0 0.0
      %3090 = vmatpush1.xpose.msra.mxu0 0.0
      %3091 = vmatprep.subr.mxu0 0.0
      %3092 = vmatpush1.xpose.msra.mxu0 0.0
      %3093 = vmatprep.mubr.f32.mxu0 0.0
      %3094 = vmatmul.mubr.f32.gmra.mrb[0].mxu0 %v3017
      %v3095 = vpop.f32.mrb[0].mxu0
      %v3096 = vadd.f32 0.0, %v3095
      %v3097 = vpop.f32.mrb[0].mxu0
      %3098 = vdwg.mxu0
      %v3099 = vlaneseq
      %v3100 = vshrl.u32 %v3099, 7
      %v3101 = vsub.s32 3, %v3100
      %v3102 = vrot.slane %v1928, %v3101
      %3104 = vrot.lane.b32.xlu0 %v3102, 24
      %v3105 = vpop.permute.xlu0 %3104
      %v3107 = vmul.f32 %v2012, %v3105
      %v3108 = vmul.f32 %v2017, %v3105
      %v3109 = vmul.f32 %v2022, %v3105
      %v3110 = vmul.f32 %v2027, %v3105
      %v3111 = vmul.f32 %v2032, %v3105
      %3117 = vrot.lane.b32.xlu0 %v3107, 104
      %v3118 = vpop.permute.xlu0 %3117
      %3119 = vrot.lane.b32.xlu0 %v3108, 104
      %v3120 = vpop.permute.xlu0 %3119
      %3121 = vrot.lane.b32.xlu0 %v3109, 104
      %v3122 = vpop.permute.xlu0 %3121
      %3123 = vrot.lane.b32.xlu0 %v3110, 104
      %v3124 = vpop.permute.xlu0 %3123
      %3125 = vrot.lane.b32.xlu0 %v3111, 104
      %v3126 = vpop.permute.xlu0 %3125
      %v3132 = vsel %vm534, %v3118, 0.0
      %3133 = vadd.xlane.f32.xlu0 %v3132
      %v3134 = vpop.xlane.xlu0 %3133
      %v3135 = vsel %vm534, %v3120, 0.0
      %3136 = vadd.xlane.f32.xlu0 %v3135
      %v3137 = vpop.xlane.xlu0 %3136
      %v3138 = vsel %vm534, %v3122, 0.0
      %3139 = vadd.xlane.f32.xlu0 %v3138
      %v3140 = vpop.xlane.xlu0 %3139
      %v3141 = vsel %vm534, %v3124, 0.0
      %3142 = vadd.xlane.f32.xlu0 %v3141
      %v3143 = vpop.xlane.xlu0 %3142
      %v3144 = vsel %vm534, %v3126, 0.0
      %3145 = vadd.xlane.f32.xlu0 %v3144
      %v3146 = vpop.xlane.xlu0 %3145
      %v3147 = vlaneseq
      %v3148 = vshrl.u32 %v3147, 7
      %v3149 = vsub.s32 0, %v3148
      %v3150 = vrot.slane %v3096, %v3149
      %v3151 = vadd.f32 %v3134, %v3150
      %v3152 = vadd.f32 %v3137, %v3150
      %v3153 = vadd.f32 %v3140, %v3150
      %v3154 = vadd.f32 %v3143, %v3150
      %v3155 = vadd.f32 %v3146, %v3150
      %vm3156 = vcmp.gt.f32.partialorder %v3151, 0.0
      %vm3157 = vcmp.gt.f32.partialorder %v3152, 0.0
      %vm3158 = vcmp.gt.f32.partialorder %v3153, 0.0
      %vm3159 = vcmp.gt.f32.partialorder %v3154, 0.0
      %vm3160 = vcmp.gt.f32.partialorder %v3155, 0.0
      %v3161 = vmul.f32 %v3151, 0.2
      %v3162 = vmul.f32 %v3152, 0.2
      %v3163 = vmul.f32 %v3153, 0.2
      %v3164 = vmul.f32 %v3154, 0.2
      %v3165 = vmul.f32 %v3155, 0.2
      %v3166 = vsel %vm3156, %v3151, %v3161
      %v3167 = vsel %vm3157, %v3152, %v3162
      %v3168 = vsel %vm3158, %v3153, %v3163
      %v3169 = vsel %vm3159, %v3154, %v3164
      %v3170 = vsel %vm3160, %v3155, %v3165
      %v3171 = vadd.f32 %v3166, %v414
      %v3172 = vadd.f32 %v3167, %v415
      %v3173 = vadd.f32 %v3168, %v416
      %v3174 = vadd.f32 %v3169, %v417
      %v3175 = vadd.f32 %v3170, %v418
      %v3176 = vsel %vm676, %v3171, -inf
      %3177 = vmax.xlane.f32.xlu0 %v3176
      %v3178 = vpop.xlane.xlu0 %3177
      %v3179 = vsel %vm676, %v3172, -inf
      %3180 = vmax.xlane.f32.xlu0 %v3179
      %v3181 = vpop.xlane.xlu0 %3180
      %v3182 = vsel %vm676, %v3173, -inf
      %3183 = vmax.xlane.f32.xlu0 %v3182
      %v3184 = vpop.xlane.xlu0 %3183
      %v3185 = vsel %vm676, %v3174, -inf
      %3186 = vmax.xlane.f32.xlu0 %v3185
      %v3187 = vpop.xlane.xlu0 %3186
      %v3188 = vsel %vm676, %v3175, -inf
      %3189 = vmax.xlane.f32.xlu0 %v3188
      %v3190 = vpop.xlane.xlu0 %3189
      %v3191 = vsub.f32 %v3171, %v3178
      %v3192 = vsub.f32 %v3172, %v3181
      %v3193 = vsub.f32 %v3173, %v3184
      %v3194 = vsub.f32 %v3174, %v3187
      %v3195 = vsub.f32 %v3175, %v3190
      %v3196 = vmul.f32 %v3191, 1.442695
      %v3197 = vpow.pop %v3196
      %v3198 = vmul.f32 %v3192, 1.442695
      %v3199 = vpow.pop %v3198
      %v3200 = vmul.f32 %v3193, 1.442695
      %v3201 = vpow.pop %v3200
      %v3202 = vmul.f32 %v3194, 1.442695
      %v3203 = vpow.pop %v3202
      %v3204 = vmul.f32 %v3195, 1.442695
      %v3205 = vpow.pop %v3204
      %v3206 = vsel %vm676, %v3197, 0.0
      %3207 = vadd.xlane.f32.xlu0 %v3206
      %v3208 = vpop.xlane.xlu0 %3207
      %v3209 = vsel %vm676, %v3199, 0.0
      %3210 = vadd.xlane.f32.xlu0 %v3209
      %v3211 = vpop.xlane.xlu0 %3210
      %v3212 = vsel %vm676, %v3201, 0.0
      %3213 = vadd.xlane.f32.xlu0 %v3212
      %v3214 = vpop.xlane.xlu0 %3213
      %v3215 = vsel %vm676, %v3203, 0.0
      %3216 = vadd.xlane.f32.xlu0 %v3215
      %v3217 = vpop.xlane.xlu0 %3216
      %v3218 = vsel %vm676, %v3205, 0.0
      %3219 = vadd.xlane.f32.xlu0 %v3218
      %v3220 = vpop.xlane.xlu0 %3219
      %v3221 = vrcp.pop %v3208
      %v3222 = vrcp.pop %v3211
      %v3223 = vrcp.pop %v3214
      %v3224 = vrcp.pop %v3217
      %v3225 = vrcp.pop %v3220
      %v3226 = vmul.f32 %v3197, %v3221
      %v3227 = vmul.f32 %v3199, %v3222
      %v3228 = vmul.f32 %v3201, %v3223
      %v3229 = vmul.f32 %v3203, %v3224
      %v3230 = vmul.f32 %v3205, %v3225
      %v3237 = vsel %vm676, %v3226, 0
      %v3240 = vsel %vm676, %v3227, 0
      %v3243 = vsel %vm676, %v3228, 0
      %v3246 = vsel %vm676, %v3229, 0
      %v3249 = vsel %vm676, %v3230, 0
      %3251 = vmatprep.subr.mxu0 0.0
      %3252 = vmatpush1.msra.mxu0 %v3008
      %3253 = vmatprep.subr.mxu0 0.0
      %3254 = vmatpush1.msra.mxu0 %v3010
      %3255 = vmatprep.subr.mxu0 0.0
      %3256 = vmatpush1.msra.mxu0 %v3012
      %3257 = vmatprep.subr.mxu0 0.0
      %3258 = vmatpush1.msra.mxu0 %v3014
      %3259 = vmatprep.subr.mxu0 0.0
      %3260 = vmatpush1.msra.mxu0 %v3016
      %3261 = vmatprep.subr.mxu0 0.0
      %3262 = vmatpush1.msra.mxu0 0.0
      %3263 = vmatprep.subr.mxu0 0.0
      %3264 = vmatpush1.msra.mxu0 0.0
      %3265 = vmatprep.subr.mxu0 0.0
      %3266 = vmatpush1.msra.mxu0 0.0
      %3267 = vmatprep.subr.mxu0 0.0
      %3268 = vmatpush1.msra.mxu0 0.0
      %3269 = vmatprep.subr.mxu0 0.0
      %3270 = vmatpush1.msra.mxu0 0.0
      %3271 = vmatprep.subr.mxu0 0.0
      %3272 = vmatpush1.msra.mxu0 0.0
      %3273 = vmatprep.subr.mxu0 0.0
      %3274 = vmatpush1.msra.mxu0 0.0
      %3275 = vmatprep.subr.mxu0 0.0
      %3276 = vmatpush1.msra.mxu0 0.0
      %3277 = vmatprep.subr.mxu0 0.0
      %3278 = vmatpush1.msra.mxu0 0.0
      %3279 = vmatprep.subr.mxu0 0.0
      %3280 = vmatpush1.msra.mxu0 0.0
      %3281 = vmatprep.subr.mxu0 0.0
      %3282 = vmatpush1.msra.mxu0 0.0
      %3283 = vmatprep.subr.mxu0 0.0
      %3284 = vmatpush1.msra.mxu0 0.0
      %3285 = vmatprep.subr.mxu0 0.0
      %3286 = vmatpush1.msra.mxu0 0.0
      %3287 = vmatprep.subr.mxu0 0.0
      %3288 = vmatpush1.msra.mxu0 0.0
      %3289 = vmatprep.subr.mxu0 0.0
      %3290 = vmatpush1.msra.mxu0 0.0
      %3291 = vmatprep.subr.mxu0 0.0
      %3292 = vmatpush1.msra.mxu0 0.0
      %3293 = vmatprep.subr.mxu0 0.0
      %3294 = vmatpush1.msra.mxu0 0.0
      %3295 = vmatprep.subr.mxu0 0.0
      %3296 = vmatpush1.msra.mxu0 0.0
      %3297 = vmatprep.subr.mxu0 0.0
      %3298 = vmatpush1.msra.mxu0 0.0
      %3299 = vmatprep.subr.mxu0 0.0
      %3300 = vmatpush1.msra.mxu0 0.0
      %3301 = vmatprep.subr.mxu0 0.0
      %3302 = vmatpush1.msra.mxu0 0.0
      %3303 = vmatprep.subr.mxu0 0.0
      %3304 = vmatpush1.msra.mxu0 0.0
      %3305 = vmatprep.subr.mxu0 0.0
      %3306 = vmatpush1.msra.mxu0 0.0
      %3307 = vmatprep.subr.mxu0 0.0
      %3308 = vmatpush1.msra.mxu0 0.0
      %3309 = vmatprep.subr.mxu0 0.0
      %3310 = vmatpush1.msra.mxu0 0.0
      %3311 = vmatprep.subr.mxu0 0.0
      %3312 = vmatpush1.msra.mxu0 0.0
      %3313 = vmatprep.subr.mxu0 0.0
      %3314 = vmatpush1.msra.mxu0 0.0
      %3315 = vmatprep.mubr.f32.mxu0 0.0
      %3316 = vmatmul.mubr.f32.gmra.mrb[0].mxu0 %v3237
      %v3317 = vpop.f32.mrb[0].mxu0
      %v3318 = vadd.f32 0.0, %v3317
      %v3319 = vpop.f32.mrb[0].mxu0
      %3320 = vmatprep.mubr.f32.mxu0 0.0
      %3321 = vmatmul.mubr.f32.gmra.mrb[0].mxu0 %v3240
      %v3322 = vpop.f32.mrb[0].mxu0
      %v3323 = vadd.f32 0.0, %v3322
      %v3324 = vpop.f32.mrb[0].mxu0
      %3325 = vmatprep.mubr.f32.mxu0 0.0
      %3326 = vmatmul.mubr.f32.gmra.mrb[0].mxu0 %v3243
      %v3327 = vpop.f32.mrb[0].mxu0
      %v3328 = vadd.f32 0.0, %v3327
      %v3329 = vpop.f32.mrb[0].mxu0
      %3330 = vmatprep.mubr.f32.mxu0 0.0
      %3331 = vmatmul.mubr.f32.gmra.mrb[0].mxu0 %v3246
      %v3332 = vpop.f32.mrb[0].mxu0
      %v3333 = vadd.f32 0.0, %v3332
      %v3334 = vpop.f32.mrb[0].mxu0
      %3335 = vmatprep.mubr.f32.mxu0 0.0
      %3336 = vmatmul.mubr.f32.gmra.mrb[0].mxu0 %v3249
      %v3337 = vpop.f32.mrb[0].mxu0
      %v3338 = vadd.f32 0.0, %v3337
      %v3339 = vpop.f32.mrb[0].mxu0
      %3340 = vdwg.mxu0
      %3346 = vrot.lane.b32.xlu0 %v2648, 8
      %v3347 = vpop.permute.xlu0 %3346
      %3348 = vrot.lane.b32.xlu0 %v2653, 8
      %v3349 = vpop.permute.xlu0 %3348
      %3350 = vrot.lane.b32.xlu0 %v2658, 8
      %v3351 = vpop.permute.xlu0 %3350
      %3352 = vrot.lane.b32.xlu0 %v2663, 8
      %v3353 = vpop.permute.xlu0 %3352
      %3354 = vrot.lane.b32.xlu0 %v2668, 8
      %v3355 = vpop.permute.xlu0 %3354
      %3366 = vrot.lane.b32.xlu0 %v2983, 16
      %v3367 = vpop.permute.xlu0 %3366
      %3368 = vrot.lane.b32.xlu0 %v2988, 16
      %v3369 = vpop.permute.xlu0 %3368
      %3370 = vrot.lane.b32.xlu0 %v2993, 16
      %v3371 = vpop.permute.xlu0 %3370
      %3372 = vrot.lane.b32.xlu0 %v2998, 16
      %v3373 = vpop.permute.xlu0 %3372
      %3374 = vrot.lane.b32.xlu0 %v3003, 16
      %v3375 = vpop.permute.xlu0 %3374
      %3386 = vrot.lane.b32.xlu0 %v3318, 24
      %v3387 = vpop.permute.xlu0 %3386
      %3388 = vrot.lane.b32.xlu0 %v3323, 24
      %v3389 = vpop.permute.xlu0 %3388
      %3390 = vrot.lane.b32.xlu0 %v3328, 24
      %v3391 = vpop.permute.xlu0 %3390
      %3392 = vrot.lane.b32.xlu0 %v3333, 24
      %v3393 = vpop.permute.xlu0 %3392
      %3394 = vrot.lane.b32.xlu0 %v3338, 24
      %v3395 = vpop.permute.xlu0 %3394
      %v3401 = vsel %vm534, %v2313, %v3347
      %v3402 = vsel %vm534, %v2318, %v3349
      %v3403 = vsel %vm534, %v2323, %v3351
      %v3404 = vsel %vm534, %v2328, %v3353
      %v3405 = vsel %vm534, %v2333, %v3355
      %v3406 = vsel %vm428, %v3401, %v3367
      %v3407 = vsel %vm428, %v3402, %v3369
      %v3408 = vsel %vm428, %v3403, %v3371
      %v3409 = vsel %vm428, %v3404, %v3373
      %v3410 = vsel %vm428, %v3405, %v3375
      %v3411 = vsel %vm1912, %v3406, %v3387
      %v3412 = vsel %vm1912, %v3407, %v3389
      %v3413 = vsel %vm1912, %v3408, %v3391
      %v3414 = vsel %vm1912, %v3409, %v3393
      %v3415 = vsel %vm1912, %v3410, %v3395
      %v3416 = vmax.f32 %v3411, 0.0
      %v3417 = vmax.f32 %v3412, 0.0
      %v3418 = vmax.f32 %v3413, 0.0
      %v3419 = vmax.f32 %v3414, 0.0
      %v3420 = vmax.f32 %v3415, 0.0
      %3421 = vst.msk [vmem:[%s413] sm:$0xff] %vm1929, %v3416
      %3422 = vst.msk [vmem:[%s413 + $0x8] sm:$0xff] %vm1929, %v3417
      %3423 = vst.msk [vmem:[%s413 + $0x10] sm:$0xff] %vm1929, %v3418
      %3424 = vst.msk [vmem:[%s413 + $0x18] sm:$0xff] %vm1929, %v3419
      %3425 = vst.msk [vmem:[%s413 + $0x20] sm:$0xff] %vm1929, %v3420
      %p3426 = scmp.lt.s32.totalorder %s19, 1
      %s3427 = scalar_select %p3426, %s19, 1
      %s3428 = smul.addr %s3427, 5
      %s3429 = smul.addr %s3428, 8
      %s3430 = scalar_lea.vmem %s8, %s3429
      // Predicated region
      $region53: #{premodel_forward.4} parent=51 // pred_check
        %p3431 = pneg %p240
      $region54: #{premodel_forward.4} parent=51 // pred_check_branch
        %3433 = sbr.rel (%p3431) target = $region56
      $region55: #{premodel_forward.4} parent=51 // pred_region
        _
      $region56: #{premodel_forward.4} parent=51 // pred_fallthru
        _
    $region52: #{premodel_forward.4} parent=5 // pred_fallthru
      _
    %p3434 = scmp.le.s32.totalorder 2, %s14
    // Predicated region
    $region57: #{premodel_forward.4} parent=5 // pred_check
      %p3435 = pneg %p3434
    $region58: #{premodel_forward.4} parent=5 // pred_check_branch
      %3437 = sbr.rel (%p3435) target = $region60
    $region59: #{premodel_forward.4} parent=5 // pred_region
      %s3438 = ssub.s32 %s14, 2
      // Predicated region
      $region61: #{premodel_forward.4} parent=59 // pred_check
        %p3439 = pneg %p246
      $region62: #{premodel_forward.4} parent=59 // pred_check_branch
        %3441 = sbr.rel (%p3439) target = $region64
      $region63: #{premodel_forward.4} parent=59 // pred_region
        %p3442 = scmp.lt.s32.totalorder %s20, 1
        %s3443 = scalar_select %p3442, %s20, 1
        %s3444 = smul.addr %s3443, 5
        %s3445 = smul.addr %s3444, 8
        %s3446 = scalar_lea.vmem %s8, %s3445
      $region64: #{premodel_forward.4} parent=59 // pred_fallthru
        _
    $region60: #{premodel_forward.4} parent=5 // pred_fallthru
      _
  $region6: #{premodel_forward.4} parent=0 // loop_footer
    %s18 = sadd.s32 1, %s14
  $region7: #{premodel_forward.4} parent=0 // loop_footer_branch
    %13 = sbr.rel target = $region3
  $region8: #{premodel_forward.4} parent=0 // loop_exit
    _

</llo_original>
